<compile_context>
chip_gen: v5e
topology: v5e:2x2
jax: 0.10.0
libtpu: 0.0.40
codegen_flags: <defaults>
</compile_context>

<pallas_src>
import functools
import math

import jax
import jax.numpy as jnp
from jax.experimental import pallas as pl
from jax.experimental.pallas import tpu as pltpu


# Order of the consolidated weight slabs (kernel arg order).
SLAB_KEYS = ("w_qkv", "b_qkv", "w_ao", "b_ao",
             "w_ff1", "b_ff1", "w_ff2", "b_ff2",
             "ln_g", "ln_b", "fc_w", "fc_b")


# ----------------------------------------------------------------------------
# Parameter packing: one-time prep (outside jit).
#   w_qkv : (3L, D, 3D)   [enc self | dec self | dec cross]  (Q cols pre-scaled)
#   w_ao  : (3L, D, D)    attention output projections
#   w_ff1 : (2L, D, FF)   [enc | dec]
#   w_ff2 : (2L, FF, D)
#   ln_*  : (5L+2, 1, D)  [enc ln1 | enc ln2 | dec ln1 | dec ln2 | dec ln3 |
#                          enc final | dec final]
#   fc_w  : (D, ceil(out/128)*128)  zero-padded for lane-dense stores
# ----------------------------------------------------------------------------
def pack_params(params, *, nhead):
    D = params["fc_w"].shape[0]
    out_dim = params["fc_w"].shape[1]
    dh = D // nhead
    scale = 1.0 / math.sqrt(dh)
    enc, dec = params["enc"], params["dec"]

    def fold_scale(a):
        # Fold the attention scale into the Q portion of an in-projection.
        return jnp.concatenate([a[..., :D] * scale, a[..., D:]], axis=-1)

    out_pad = ((out_dim + 127) // 128) * 128

    return dict(
        w_qkv=jnp.concatenate([fold_scale(enc["w_qkv"]),
                               fold_scale(dec["sa_w_qkv"]),
                               fold_scale(dec["ca_w_in"])], axis=0),
        b_qkv=jnp.concatenate([fold_scale(enc["b_qkv"]),
                               fold_scale(dec["sa_b_qkv"]),
                               fold_scale(dec["ca_b_in"])], axis=0),
        w_ao=jnp.concatenate([enc["w_out"], dec["sa_w_out"], dec["ca_w_out"]],
                             axis=0),
        b_ao=jnp.concatenate([enc["b_out"], dec["sa_b_out"], dec["ca_b_out"]],
                             axis=0),
        w_ff1=jnp.concatenate([enc["w1"], dec["w1"]], axis=0),
        b_ff1=jnp.concatenate([enc["b1"], dec["b1"]], axis=0),
        w_ff2=jnp.concatenate([enc["w2"], dec["w2"]], axis=0),
        b_ff2=jnp.concatenate([enc["b2"], dec["b2"]], axis=0),
        ln_g=jnp.concatenate([enc["ln1_g"], enc["ln2_g"],
                              dec["ln1_g"], dec["ln2_g"], dec["ln3_g"],
                              params["enc_norm_g"][None],
                              params["dec_norm_g"][None]], axis=0),
        ln_b=jnp.concatenate([enc["ln1_b"], enc["ln2_b"],
                              dec["ln1_b"], dec["ln2_b"], dec["ln3_b"],
                              params["enc_norm_b"][None],
                              params["dec_norm_b"][None]], axis=0),
        fc_w=jnp.pad(params["fc_w"], ((0, 0), (0, out_pad - out_dim))),
        fc_b=jnp.pad(params["fc_b"], ((0, 0), (0, out_pad - out_dim))),
    )


# ----------------------------------------------------------------------------
# Fused kernel: whole forward (enc stack + dec stack + final fc) in one call,
# operating on the full (B*S, D) token slab.
# ----------------------------------------------------------------------------
def make_transformer_kernel(*, S, B, D, H, L, eps=1e-5):
    dh = D // H
    BS = B * S

    # Slab row offsets (static Python ints).
    ENC_LN1, ENC_LN2 = 0, L
    DEC_LN1, DEC_LN2, DEC_LN3 = 2 * L, 3 * L, 4 * L
    ENC_FINAL, DEC_FINAL = 5 * L, 5 * L + 1

    def layer_norm(h, g, b):
        mean = jnp.mean(h, axis=-1, keepdims=True)
        cen = h - mean
        var = jnp.mean(cen * cen, axis=-1, keepdims=True)
        return cen * jax.lax.rsqrt(var + eps) * g + b

    def attention(q, k, v):
        # q, k, v: (B*S, D).  Q already carries the 1/sqrt(dh) scale.
        q3 = q.reshape(B, S, D)
        k3 = k.reshape(B, S, D)
        v3 = v.reshape(B, S, D)
        heads = []
        for h in range(H):                     # H unrolled; B batched on the MXU
            c = h * dh
            s = jnp.einsum('bqd,bkd->bqk', q3[:, :, c:c + dh], k3[:, :, c:c + dh],
                           preferred_element_type=jnp.float32)
            m = jnp.max(s, axis=-1, keepdims=True)
            p = jnp.exp(s - m)
            denom = jnp.sum(p, axis=-1, keepdims=True)
            p = p * pl.reciprocal(denom, approx=True)     # EUP, not VALU divide
            heads.append(jnp.einsum('bqk,bkd->bqd', p, v3[:, :, c:c + dh],
                                    preferred_element_type=jnp.float32))
        o = heads[0] if H == 1 else jnp.concatenate(heads, axis=-1)
        return o.reshape(BS, D)

    def mha_self(x, w_in, b_in, w_out, b_out):
        qkv = jnp.dot(x, w_in, preferred_element_type=jnp.float32) + b_in
        o = attention(qkv[:, :D], qkv[:, D:2 * D], qkv[:, 2 * D:])
        return jnp.dot(o, w_out, preferred_element_type=jnp.float32) + b_out

    def mha_cross(xq, xkv, w_in, b_in, w_out, b_out):
        q = jnp.dot(xq, w_in[:, :D], preferred_element_type=jnp.float32) + b_in[:, :D]
        kv = jnp.dot(xkv, w_in[:, D:], preferred_element_type=jnp.float32) + b_in[:, D:]
        o = attention(q, kv[:, :D], kv[:, D:])
        return jnp.dot(o, w_out, preferred_element_type=jnp.float32) + b_out

    def ff_block(x, w1, b1, w2, b2):
        h = jnp.dot(x, w1, preferred_element_type=jnp.float32) + b1
        h = jnp.maximum(h, 0.0)                 # ReLU (nn.Transformer default)
        return jnp.dot(h, w2, preferred_element_type=jnp.float32) + b2

    def kernel(x_ref, w_qkv, b_qkv, w_ao, b_ao, w_ff1, b_ff1, w_ff2, b_ff2,
               ln_g, ln_b, fc_w, fc_b, o_ref):
        x_in = x_ref[...]                       # (B*S, D), batch-major rows

        # -------- encoder stack (post-norm) --------
        h = x_in
        for l in range(L):
            sa = mha_self(h, w_qkv[l], b_qkv[l], w_ao[l], b_ao[l])
            h = layer_norm(h + sa, ln_g[ENC_LN1 + l], ln_b[ENC_LN1 + l])
            f = ff_block(h, w_ff1[l], b_ff1[l], w_ff2[l], b_ff2[l])
            h = layer_norm(h + f, ln_g[ENC_LN2 + l], ln_b[ENC_LN2 + l])
        mem = layer_norm(h, ln_g[ENC_FINAL], ln_b[ENC_FINAL])

        # -------- decoder stack (tgt = src = x_in) --------
        y = x_in
        for l in range(L):
            sa = mha_self(y, w_qkv[L + l], b_qkv[L + l], w_ao[L + l], b_ao[L + l])
            y = layer_norm(y + sa, ln_g[DEC_LN1 + l], ln_b[DEC_LN1 + l])
            ca = mha_cross(y, mem, w_qkv[2 * L + l], b_qkv[2 * L + l],
                           w_ao[2 * L + l], b_ao[2 * L + l])
            y = layer_norm(y + ca, ln_g[DEC_LN2 + l], ln_b[DEC_LN2 + l])
            f = ff_block(y, w_ff1[L + l], b_ff1[L + l], w_ff2[L + l], b_ff2[L + l])
            y = layer_norm(y + f, ln_g[DEC_LN3 + l], ln_b[DEC_LN3 + l])
        y = layer_norm(y, ln_g[DEC_FINAL], ln_b[DEC_FINAL])

        # -------- final fc: lane-dense (B*S, 128) store --------
        o_ref[...] = (jnp.dot(y, fc_w[...], preferred_element_type=jnp.float32)
                      + fc_b[...])

    return kernel


def transformer_forward(x, slabs, *, nhead, out_dim):
    """x: (S, B, D) -> (S, B, out_dim).  src = tgt = x (as in the module)."""
    S, B, D = x.shape
    assert D % nhead == 0
    L = slabs["w_ff1"].shape[0] // 2
    out_pad = slabs["fc_w"].shape[1]

    # Batch-major tokens: rows of each batch element are contiguous.
    xb = jnp.transpose(x, (1, 0, 2)).reshape(B * S, D)

    kernel = make_transformer_kernel(S=S, B=B, D=D, H=nhead, L=L)
    flat = [slabs[k] for k in SLAB_KEYS]

    in_specs = [pl.BlockSpec(xb.shape, lambda i: (0, 0))]
    in_specs += [pl.BlockSpec(a.shape, lambda i, nd=a.ndim: (0,) * nd)
                 for a in flat]

    y = pl.pallas_call(
        kernel,
        grid=(1,),                               # single step: B folded into M
        in_specs=in_specs,
        out_specs=pl.BlockSpec((B * S, out_pad), lambda i: (0, 0)),
        out_shape=jax.ShapeDtypeStruct((B * S, out_pad), jnp.float32),
        compiler_params=pltpu.CompilerParams(
            dimension_semantics=("arbitrary",)),
    )(xb, *flat)

    y = y[:, :out_dim].reshape(B, S, out_dim)
    return jnp.transpose(y, (1, 0, 2))


# ----------------------------------------------------------------------------
# Deterministic parameter init — weights pre-transposed (Din, Dout), stacked
# over layers with a leading L axis.
# ----------------------------------------------------------------------------
def init_params(key, d, ff, num_layers, output_dim, dtype=jnp.float32):
    L = num_layers
    keys = iter(jax.random.split(key, 32))

    def dense(shape, fan_in):
        return jax.random.normal(next(keys), shape, dtype) / math.sqrt(fan_in)

    def bias(shape):
        return jax.random.normal(next(keys), shape, dtype) * 0.02

    def ln_pair(n):
        return jnp.ones((L, 1, n), dtype), jnp.zeros((L, 1, n), dtype)

    enc = dict(
        w_qkv=dense((L, d, 3 * d), d), b_qkv=bias((L, 1, 3 * d)),
        w_out=dense((L, d, d), d),     b_out=bias((L, 1, d)),
        w1=dense((L, d, ff), d),       b1=bias((L, 1, ff)),
        w2=dense((L, ff, d), ff),      b2=bias((L, 1, d)),
    )
    enc["ln1_g"], enc["ln1_b"] = ln_pair(d)
    enc["ln2_g"], enc["ln2_b"] = ln_pair(d)

    dec = dict(
        sa_w_qkv=dense((L, d, 3 * d), d), sa_b_qkv=bias((L, 1, 3 * d)),
        sa_w_out=dense((L, d, d), d),     sa_b_out=bias((L, 1, d)),
        ca_w_in=dense((L, d, 3 * d), d),  ca_b_in=bias((L, 1, 3 * d)),
        ca_w_out=dense((L, d, d), d),     ca_b_out=bias((L, 1, d)),
        w1=dense((L, d, ff), d),          b1=bias((L, 1, ff)),
        w2=dense((L, ff, d), ff),         b2=bias((L, 1, d)),
    )
    dec["ln1_g"], dec["ln1_b"] = ln_pair(d)
    dec["ln2_g"], dec["ln2_b"] = ln_pair(d)
    dec["ln3_g"], dec["ln3_b"] = ln_pair(d)

    return dict(
        enc=enc, dec=dec,
        enc_norm_g=jnp.ones((1, d), dtype), enc_norm_b=jnp.zeros((1, d), dtype),
        dec_norm_g=jnp.ones((1, d), dtype), dec_norm_b=jnp.zeros((1, d), dtype),
        fc_w=dense((d, output_dim), d), fc_b=bias((1, output_dim)),
    )


# ----------------------------------------------------------------------------
if __name__ == "__main__":
    # Small shapes consistent with the module: d_model=32, nhead=2, 2 encoder +
    # 2 decoder layers, dim_feedforward=64, seq=8, batch=2, output_dim=8.
    S, B, D = 8, 2, 32
    NHEAD, NUM_LAYERS, FF, OUT_DIM = 2, 2, 64, 8

    root = jax.random.PRNGKey(0)
    k_x, k_p = jax.random.split(root)
    x = jax.random.normal(k_x, (S, B, D), jnp.float32)   # (seq, batch, d_model)
    params = init_params(k_p, D, FF, NUM_LAYERS, OUT_DIM)
    slabs = pack_params(params, nhead=NHEAD)              # one-time prep (outside jit)

    fwd = jax.jit(functools.partial(transformer_forward,
                                    nhead=NHEAD, out_dim=OUT_DIM))
    y = fwd(x, slabs)
    jax.block_until_ready(y)
    assert y.shape == (S, B, OUT_DIM), y.shape
    assert bool(jnp.all(jnp.isfinite(y)))
    print("KERNEL_OK")
</pallas_src>

<mosaic_0001>
module attributes {stable_mosaic.version = 11 : i64} {
  func.func @kernel(%arg0: i32, %arg1: memref<16x32xf32, #tpu.memory_space<vmem>>, %arg2: memref<6x32x96xf32, #tpu.memory_space<vmem>>, %arg3: memref<6x1x96xf32, #tpu.memory_space<vmem>>, %arg4: memref<6x32x32xf32, #tpu.memory_space<vmem>>, %arg5: memref<6x1x32xf32, #tpu.memory_space<vmem>>, %arg6: memref<4x32x64xf32, #tpu.memory_space<vmem>>, %arg7: memref<4x1x64xf32, #tpu.memory_space<vmem>>, %arg8: memref<4x64x32xf32, #tpu.memory_space<vmem>>, %arg9: memref<4x1x32xf32, #tpu.memory_space<vmem>>, %arg10: memref<12x1x32xf32, #tpu.memory_space<vmem>>, %arg11: memref<12x1x32xf32, #tpu.memory_space<vmem>>, %arg12: memref<32x128xf32, #tpu.memory_space<vmem>>, %arg13: memref<1x128xf32, #tpu.memory_space<vmem>>, %arg14: memref<16x128xf32, #tpu.memory_space<vmem>>) attributes {dimension_semantics = [#tpu.dimension_semantics<arbitrary>], iteration_bounds = array<i64: 1>, scalar_prefetch = 0 : i64, scratch_operands = 0 : i64, tpu.core_type = #tpu.core_type<tc>, window_params = [{pipeline_mode = #tpu.pipeline_mode<synchronous>, transform_indices = @transform_0, window_bounds = array<i64: 16, 32>}, {pipeline_mode = #tpu.pipeline_mode<synchronous>, transform_indices = @transform_1, window_bounds = array<i64: 6, 32, 96>}, {pipeline_mode = #tpu.pipeline_mode<synchronous>, transform_indices = @transform_2, window_bounds = array<i64: 6, 1, 96>}, {pipeline_mode = #tpu.pipeline_mode<synchronous>, transform_indices = @transform_3, window_bounds = array<i64: 6, 32, 32>}, {pipeline_mode = #tpu.pipeline_mode<synchronous>, transform_indices = @transform_4, window_bounds = array<i64: 6, 1, 32>}, {pipeline_mode = #tpu.pipeline_mode<synchronous>, transform_indices = @transform_5, window_bounds = array<i64: 4, 32, 64>}, {pipeline_mode = #tpu.pipeline_mode<synchronous>, transform_indices = @transform_6, window_bounds = array<i64: 4, 1, 64>}, {pipeline_mode = #tpu.pipeline_mode<synchronous>, transform_indices = @transform_7, window_bounds = array<i64: 4, 64, 32>}, {pipeline_mode = #tpu.pipeline_mode<synchronous>, transform_indices = @transform_8, window_bounds = array<i64: 4, 1, 32>}, {pipeline_mode = #tpu.pipeline_mode<synchronous>, transform_indices = @transform_9, window_bounds = array<i64: 12, 1, 32>}, {pipeline_mode = #tpu.pipeline_mode<synchronous>, transform_indices = @transform_10, window_bounds = array<i64: 12, 1, 32>}, {pipeline_mode = #tpu.pipeline_mode<synchronous>, transform_indices = @transform_11, window_bounds = array<i64: 32, 128>}, {pipeline_mode = #tpu.pipeline_mode<synchronous>, transform_indices = @transform_12, window_bounds = array<i64: 1, 128>}, {pipeline_mode = #tpu.pipeline_mode<synchronous>, transform_indices = @transform_13, window_bounds = array<i64: 16, 128>}]} {
    %c0 = arith.constant 0 : index
    %c0_0 = arith.constant 0 : index
    %0 = vector.load %arg1[%c0, %c0_0] : memref<16x32xf32, #tpu.memory_space<vmem>>, vector<16x32xf32>
    %c0_1 = arith.constant 0 : index
    %c0_2 = arith.constant 0 : index
    %c0_3 = arith.constant 0 : index
    %1 = vector.load %arg2[%c0_1, %c0_2, %c0_3] : memref<6x32x96xf32, #tpu.memory_space<vmem>>, vector<1x32x96xf32>
    %2 = vector.shape_cast %1 : vector<1x32x96xf32> to vector<32x96xf32>
    %c0_4 = arith.constant 0 : index
    %c0_5 = arith.constant 0 : index
    %c0_6 = arith.constant 0 : index
    %3 = vector.load %arg3[%c0_4, %c0_5, %c0_6] : memref<6x1x96xf32, #tpu.memory_space<vmem>>, vector<1x1x96xf32>
    %4 = vector.shape_cast %3 : vector<1x1x96xf32> to vector<1x96xf32>
    %c0_7 = arith.constant 0 : index
    %c0_8 = arith.constant 0 : index
    %c0_9 = arith.constant 0 : index
    %5 = vector.load %arg4[%c0_7, %c0_8, %c0_9] : memref<6x32x32xf32, #tpu.memory_space<vmem>>, vector<1x32x32xf32>
    %6 = vector.shape_cast %5 : vector<1x32x32xf32> to vector<32x32xf32>
    %c0_10 = arith.constant 0 : index
    %c0_11 = arith.constant 0 : index
    %c0_12 = arith.constant 0 : index
    %7 = vector.load %arg5[%c0_10, %c0_11, %c0_12] : memref<6x1x32xf32, #tpu.memory_space<vmem>>, vector<1x1x32xf32>
    %8 = vector.shape_cast %7 : vector<1x1x32xf32> to vector<1x32xf32>
    %cst = arith.constant dense<0.000000e+00> : vector<16x96xf32>
    %9 = tpu.matmul %0, %2, %cst {dimension_numbers = #tpu.dot_dimension_numbers<[1], [0], [0], [1], [0, 0, 1, 1], [], []>} : vector<16x32xf32>, vector<32x96xf32>, vector<16x96xf32> -> vector<16x96xf32>
    %10 = vector.broadcast %4 : vector<1x96xf32> to vector<16x96xf32>
    %11 = arith.addf %9, %10 : vector<16x96xf32>
    %12 = vector.extract_strided_slice %11 {offsets = [0, 0], sizes = [16, 32], strides = [1, 1]} : vector<16x96xf32> to vector<16x32xf32>
    %13 = vector.extract_strided_slice %11 {offsets = [0, 32], sizes = [16, 32], strides = [1, 1]} : vector<16x96xf32> to vector<16x32xf32>
    %14 = vector.extract_strided_slice %11 {offsets = [0, 64], sizes = [16, 32], strides = [1, 1]} : vector<16x96xf32> to vector<16x32xf32>
    %15 = vector.shape_cast %12 : vector<16x32xf32> to vector<2x8x32xf32>
    %16 = vector.shape_cast %13 : vector<16x32xf32> to vector<2x8x32xf32>
    %17 = vector.shape_cast %14 : vector<16x32xf32> to vector<2x8x32xf32>
    %18 = vector.extract_strided_slice %15 {offsets = [0, 0, 0], sizes = [2, 8, 16], strides = [1, 1, 1]} : vector<2x8x32xf32> to vector<2x8x16xf32>
    %19 = vector.extract_strided_slice %16 {offsets = [0, 0, 0], sizes = [2, 8, 16], strides = [1, 1, 1]} : vector<2x8x32xf32> to vector<2x8x16xf32>
    "tpu.trace_start"() <{level = 10 : i32, message = "bqd,bkd->bqk"}> : () -> ()
    %cst_13 = arith.constant dense<0.000000e+00> : vector<2x8x8xf32>
    %20 = tpu.matmul %18, %19, %cst_13 {dimension_numbers = #tpu.dot_dimension_numbers<[2], [2], [1], [1], [0, 0, 0, 1, 1, 1], [0], [0]>} : vector<2x8x16xf32>, vector<2x8x16xf32>, vector<2x8x8xf32> -> vector<2x8x8xf32>
    "tpu.trace_stop"() : () -> ()
    %cst_14 = arith.constant dense<0xFF800000> : vector<2x8xf32>
    %21 = vector.multi_reduction <maximumf>, %20, %cst_14 [2] : vector<2x8x8xf32> to vector<2x8xf32>
    %22 = vector.shape_cast %21 : vector<2x8xf32> to vector<2x8x1xf32>
    %23 = vector.broadcast %22 : vector<2x8x1xf32> to vector<2x8x8xf32>
    %24 = arith.subf %20, %23 : vector<2x8x8xf32>
    %25 = math.exp %24 : vector<2x8x8xf32>
    %cst_15 = arith.constant dense<0.000000e+00> : vector<2x8xf32>
    %26 = vector.multi_reduction <add>, %25, %cst_15 [2] : vector<2x8x8xf32> to vector<2x8xf32>
    %27 = vector.shape_cast %26 : vector<2x8xf32> to vector<2x8x1xf32>
    %28 = tpu.reciprocal %27 {approx = true} : vector<2x8x1xf32> -> vector<2x8x1xf32>
    %29 = vector.broadcast %28 : vector<2x8x1xf32> to vector<2x8x8xf32>
    %30 = arith.mulf %25, %29 : vector<2x8x8xf32>
    %31 = vector.extract_strided_slice %17 {offsets = [0, 0, 0], sizes = [2, 8, 16], strides = [1, 1, 1]} : vector<2x8x32xf32> to vector<2x8x16xf32>
    "tpu.trace_start"() <{level = 10 : i32, message = "bqk,bkd->bqd"}> : () -> ()
    %cst_16 = arith.constant dense<0.000000e+00> : vector<2x8x16xf32>
    %32 = tpu.matmul %30, %31, %cst_16 {dimension_numbers = #tpu.dot_dimension_numbers<[2], [1], [1], [2], [0, 0, 0, 1, 1, 2], [0], [0]>} : vector<2x8x8xf32>, vector<2x8x16xf32>, vector<2x8x16xf32> -> vector<2x8x16xf32>
    "tpu.trace_stop"() : () -> ()
    %33 = vector.extract_strided_slice %15 {offsets = [0, 0, 16], sizes = [2, 8, 16], strides = [1, 1, 1]} : vector<2x8x32xf32> to vector<2x8x16xf32>
    %34 = vector.extract_strided_slice %16 {offsets = [0, 0, 16], sizes = [2, 8, 16], strides = [1, 1, 1]} : vector<2x8x32xf32> to vector<2x8x16xf32>
    "tpu.trace_start"() <{level = 10 : i32, message = "bqd,bkd->bqk"}> : () -> ()
    %cst_17 = arith.constant dense<0.000000e+00> : vector<2x8x8xf32>
    %35 = tpu.matmul %33, %34, %cst_17 {dimension_numbers = #tpu.dot_dimension_numbers<[2], [2], [1], [1], [0, 0, 0, 1, 1, 1], [0], [0]>} : vector<2x8x16xf32>, vector<2x8x16xf32>, vector<2x8x8xf32> -> vector<2x8x8xf32>
    "tpu.trace_stop"() : () -> ()
    %cst_18 = arith.constant dense<0xFF800000> : vector<2x8xf32>
    %36 = vector.multi_reduction <maximumf>, %35, %cst_18 [2] : vector<2x8x8xf32> to vector<2x8xf32>
    %37 = vector.shape_cast %36 : vector<2x8xf32> to vector<2x8x1xf32>
    %38 = vector.broadcast %37 : vector<2x8x1xf32> to vector<2x8x8xf32>
    %39 = arith.subf %35, %38 : vector<2x8x8xf32>
    %40 = math.exp %39 : vector<2x8x8xf32>
    %cst_19 = arith.constant dense<0.000000e+00> : vector<2x8xf32>
    %41 = vector.multi_reduction <add>, %40, %cst_19 [2] : vector<2x8x8xf32> to vector<2x8xf32>
    %42 = vector.shape_cast %41 : vector<2x8xf32> to vector<2x8x1xf32>
    %43 = tpu.reciprocal %42 {approx = true} : vector<2x8x1xf32> -> vector<2x8x1xf32>
    %44 = vector.broadcast %43 : vector<2x8x1xf32> to vector<2x8x8xf32>
    %45 = arith.mulf %40, %44 : vector<2x8x8xf32>
    %46 = vector.extract_strided_slice %17 {offsets = [0, 0, 16], sizes = [2, 8, 16], strides = [1, 1, 1]} : vector<2x8x32xf32> to vector<2x8x16xf32>
    "tpu.trace_start"() <{level = 10 : i32, message = "bqk,bkd->bqd"}> : () -> ()
    %cst_20 = arith.constant dense<0.000000e+00> : vector<2x8x16xf32>
    %47 = tpu.matmul %45, %46, %cst_20 {dimension_numbers = #tpu.dot_dimension_numbers<[2], [1], [1], [2], [0, 0, 0, 1, 1, 2], [0], [0]>} : vector<2x8x8xf32>, vector<2x8x16xf32>, vector<2x8x16xf32> -> vector<2x8x16xf32>
    "tpu.trace_stop"() : () -> ()
    %48 = tpu.concatenate %32, %47 in 2 : vector<2x8x16xf32>, vector<2x8x16xf32> -> vector<2x8x32xf32>
    %49 = vector.shape_cast %48 : vector<2x8x32xf32> to vector<16x32xf32>
    %cst_21 = arith.constant dense<0.000000e+00> : vector<16x32xf32>
    %50 = tpu.matmul %49, %6, %cst_21 {dimension_numbers = #tpu.dot_dimension_numbers<[1], [0], [0], [1], [0, 0, 1, 1], [], []>} : vector<16x32xf32>, vector<32x32xf32>, vector<16x32xf32> -> vector<16x32xf32>
    %51 = vector.broadcast %8 : vector<1x32xf32> to vector<16x32xf32>
    %52 = arith.addf %50, %51 : vector<16x32xf32>
    %53 = arith.addf %0, %52 : vector<16x32xf32>
    %c0_22 = arith.constant 0 : index
    %c0_23 = arith.constant 0 : index
    %c0_24 = arith.constant 0 : index
    %54 = vector.load %arg10[%c0_22, %c0_23, %c0_24] : memref<12x1x32xf32, #tpu.memory_space<vmem>>, vector<1x1x32xf32>
    %55 = vector.shape_cast %54 : vector<1x1x32xf32> to vector<1x32xf32>
    %c0_25 = arith.constant 0 : index
    %c0_26 = arith.constant 0 : index
    %c0_27 = arith.constant 0 : index
    %56 = vector.load %arg11[%c0_25, %c0_26, %c0_27] : memref<12x1x32xf32, #tpu.memory_space<vmem>>, vector<1x1x32xf32>
    %57 = vector.shape_cast %56 : vector<1x1x32xf32> to vector<1x32xf32>
    %cst_28 = arith.constant dense<0.000000e+00> : vector<16xf32>
    %58 = vector.multi_reduction <add>, %53, %cst_28 [1] : vector<16x32xf32> to vector<16xf32>
    %59 = vector.shape_cast %58 : vector<16xf32> to vector<16x1xf32>
    %cst_29 = arith.constant 3.200000e+01 : f32
    %60 = vector.broadcast %cst_29 : f32 to vector<16x1xf32>
    %61 = arith.divf %59, %60 : vector<16x1xf32>
    %62 = vector.broadcast %61 : vector<16x1xf32> to vector<16x32xf32>
    %63 = arith.subf %53, %62 : vector<16x32xf32>
    %64 = arith.mulf %63, %63 : vector<16x32xf32>
    %cst_30 = arith.constant dense<0.000000e+00> : vector<16xf32>
    %65 = vector.multi_reduction <add>, %64, %cst_30 [1] : vector<16x32xf32> to vector<16xf32>
    %66 = vector.shape_cast %65 : vector<16xf32> to vector<16x1xf32>
    %cst_31 = arith.constant 3.200000e+01 : f32
    %67 = vector.broadcast %cst_31 : f32 to vector<16x1xf32>
    %68 = arith.divf %66, %67 : vector<16x1xf32>
    %cst_32 = arith.constant 9.99999974E-6 : f32
    %69 = vector.broadcast %cst_32 : f32 to vector<16x1xf32>
    %70 = arith.addf %68, %69 : vector<16x1xf32>
    %71 = math.rsqrt %70 : vector<16x1xf32>
    %72 = vector.broadcast %71 : vector<16x1xf32> to vector<16x32xf32>
    %73 = arith.mulf %63, %72 : vector<16x32xf32>
    %74 = vector.broadcast %55 : vector<1x32xf32> to vector<16x32xf32>
    %75 = arith.mulf %73, %74 : vector<16x32xf32>
    %76 = vector.broadcast %57 : vector<1x32xf32> to vector<16x32xf32>
    %77 = arith.addf %75, %76 : vector<16x32xf32>
    %c0_33 = arith.constant 0 : index
    %c0_34 = arith.constant 0 : index
    %c0_35 = arith.constant 0 : index
    %78 = vector.load %arg6[%c0_33, %c0_34, %c0_35] : memref<4x32x64xf32, #tpu.memory_space<vmem>>, vector<1x32x64xf32>
    %79 = vector.shape_cast %78 : vector<1x32x64xf32> to vector<32x64xf32>
    %c0_36 = arith.constant 0 : index
    %c0_37 = arith.constant 0 : index
    %c0_38 = arith.constant 0 : index
    %80 = vector.load %arg7[%c0_36, %c0_37, %c0_38] : memref<4x1x64xf32, #tpu.memory_space<vmem>>, vector<1x1x64xf32>
    %81 = vector.shape_cast %80 : vector<1x1x64xf32> to vector<1x64xf32>
    %c0_39 = arith.constant 0 : index
    %c0_40 = arith.constant 0 : index
    %c0_41 = arith.constant 0 : index
    %82 = vector.load %arg8[%c0_39, %c0_40, %c0_41] : memref<4x64x32xf32, #tpu.memory_space<vmem>>, vector<1x64x32xf32>
    %83 = vector.shape_cast %82 : vector<1x64x32xf32> to vector<64x32xf32>
    %c0_42 = arith.constant 0 : index
    %c0_43 = arith.constant 0 : index
    %c0_44 = arith.constant 0 : index
    %84 = vector.load %arg9[%c0_42, %c0_43, %c0_44] : memref<4x1x32xf32, #tpu.memory_space<vmem>>, vector<1x1x32xf32>
    %85 = vector.shape_cast %84 : vector<1x1x32xf32> to vector<1x32xf32>
    %cst_45 = arith.constant dense<0.000000e+00> : vector<16x64xf32>
    %86 = tpu.matmul %77, %79, %cst_45 {dimension_numbers = #tpu.dot_dimension_numbers<[1], [0], [0], [1], [0, 0, 1, 1], [], []>} : vector<16x32xf32>, vector<32x64xf32>, vector<16x64xf32> -> vector<16x64xf32>
    %87 = vector.broadcast %81 : vector<1x64xf32> to vector<16x64xf32>
    %88 = arith.addf %86, %87 : vector<16x64xf32>
    %cst_46 = arith.constant 0.000000e+00 : f32
    %89 = vector.broadcast %cst_46 : f32 to vector<16x64xf32>
    %90 = arith.maximumf %88, %89 : vector<16x64xf32>
    %cst_47 = arith.constant dense<0.000000e+00> : vector<16x32xf32>
    %91 = tpu.matmul %90, %83, %cst_47 {dimension_numbers = #tpu.dot_dimension_numbers<[1], [0], [0], [1], [0, 0, 1, 1], [], []>} : vector<16x64xf32>, vector<64x32xf32>, vector<16x32xf32> -> vector<16x32xf32>
    %92 = vector.broadcast %85 : vector<1x32xf32> to vector<16x32xf32>
    %93 = arith.addf %91, %92 : vector<16x32xf32>
    %94 = arith.addf %77, %93 : vector<16x32xf32>
    %c2 = arith.constant 2 : index
    %c0_48 = arith.constant 0 : index
    %c0_49 = arith.constant 0 : index
    %95 = vector.load %arg10[%c2, %c0_48, %c0_49] : memref<12x1x32xf32, #tpu.memory_space<vmem>>, vector<1x1x32xf32>
    %96 = vector.shape_cast %95 : vector<1x1x32xf32> to vector<1x32xf32>
    %c2_50 = arith.constant 2 : index
    %c0_51 = arith.constant 0 : index
    %c0_52 = arith.constant 0 : index
    %97 = vector.load %arg11[%c2_50, %c0_51, %c0_52] : memref<12x1x32xf32, #tpu.memory_space<vmem>>, vector<1x1x32xf32>
    %98 = vector.shape_cast %97 : vector<1x1x32xf32> to vector<1x32xf32>
    %cst_53 = arith.constant dense<0.000000e+00> : vector<16xf32>
    %99 = vector.multi_reduction <add>, %94, %cst_53 [1] : vector<16x32xf32> to vector<16xf32>
    %100 = vector.shape_cast %99 : vector<16xf32> to vector<16x1xf32>
    %cst_54 = arith.constant 3.200000e+01 : f32
    %101 = vector.broadcast %cst_54 : f32 to vector<16x1xf32>
    %102 = arith.divf %100, %101 : vector<16x1xf32>
    %103 = vector.broadcast %102 : vector<16x1xf32> to vector<16x32xf32>
    %104 = arith.subf %94, %103 : vector<16x32xf32>
    %105 = arith.mulf %104, %104 : vector<16x32xf32>
    %cst_55 = arith.constant dense<0.000000e+00> : vector<16xf32>
    %106 = vector.multi_reduction <add>, %105, %cst_55 [1] : vector<16x32xf32> to vector<16xf32>
    %107 = vector.shape_cast %106 : vector<16xf32> to vector<16x1xf32>
    %cst_56 = arith.constant 3.200000e+01 : f32
    %108 = vector.broadcast %cst_56 : f32 to vector<16x1xf32>
    %109 = arith.divf %107, %108 : vector<16x1xf32>
    %cst_57 = arith.constant 9.99999974E-6 : f32
    %110 = vector.broadcast %cst_57 : f32 to vector<16x1xf32>
    %111 = arith.addf %109, %110 : vector<16x1xf32>
    %112 = math.rsqrt %111 : vector<16x1xf32>
    %113 = vector.broadcast %112 : vector<16x1xf32> to vector<16x32xf32>
    %114 = arith.mulf %104, %113 : vector<16x32xf32>
    %115 = vector.broadcast %96 : vector<1x32xf32> to vector<16x32xf32>
    %116 = arith.mulf %114, %115 : vector<16x32xf32>
    %117 = vector.broadcast %98 : vector<1x32xf32> to vector<16x32xf32>
    %118 = arith.addf %116, %117 : vector<16x32xf32>
    %c1 = arith.constant 1 : index
    %c0_58 = arith.constant 0 : index
    %c0_59 = arith.constant 0 : index
    %119 = vector.load %arg2[%c1, %c0_58, %c0_59] : memref<6x32x96xf32, #tpu.memory_space<vmem>>, vector<1x32x96xf32>
    %120 = vector.shape_cast %119 : vector<1x32x96xf32> to vector<32x96xf32>
    %c1_60 = arith.constant 1 : index
    %c0_61 = arith.constant 0 : index
    %c0_62 = arith.constant 0 : index
    %121 = vector.load %arg3[%c1_60, %c0_61, %c0_62] : memref<6x1x96xf32, #tpu.memory_space<vmem>>, vector<1x1x96xf32>
    %122 = vector.shape_cast %121 : vector<1x1x96xf32> to vector<1x96xf32>
    %c1_63 = arith.constant 1 : index
    %c0_64 = arith.constant 0 : index
    %c0_65 = arith.constant 0 : index
    %123 = vector.load %arg4[%c1_63, %c0_64, %c0_65] : memref<6x32x32xf32, #tpu.memory_space<vmem>>, vector<1x32x32xf32>
    %124 = vector.shape_cast %123 : vector<1x32x32xf32> to vector<32x32xf32>
    %c1_66 = arith.constant 1 : index
    %c0_67 = arith.constant 0 : index
    %c0_68 = arith.constant 0 : index
    %125 = vector.load %arg5[%c1_66, %c0_67, %c0_68] : memref<6x1x32xf32, #tpu.memory_space<vmem>>, vector<1x1x32xf32>
    %126 = vector.shape_cast %125 : vector<1x1x32xf32> to vector<1x32xf32>
    %cst_69 = arith.constant dense<0.000000e+00> : vector<16x96xf32>
    %127 = tpu.matmul %118, %120, %cst_69 {dimension_numbers = #tpu.dot_dimension_numbers<[1], [0], [0], [1], [0, 0, 1, 1], [], []>} : vector<16x32xf32>, vector<32x96xf32>, vector<16x96xf32> -> vector<16x96xf32>
    %128 = vector.broadcast %122 : vector<1x96xf32> to vector<16x96xf32>
    %129 = arith.addf %127, %128 : vector<16x96xf32>
    %130 = vector.extract_strided_slice %129 {offsets = [0, 0], sizes = [16, 32], strides = [1, 1]} : vector<16x96xf32> to vector<16x32xf32>
    %131 = vector.extract_strided_slice %129 {offsets = [0, 32], sizes = [16, 32], strides = [1, 1]} : vector<16x96xf32> to vector<16x32xf32>
    %132 = vector.extract_strided_slice %129 {offsets = [0, 64], sizes = [16, 32], strides = [1, 1]} : vector<16x96xf32> to vector<16x32xf32>
    %133 = vector.shape_cast %130 : vector<16x32xf32> to vector<2x8x32xf32>
    %134 = vector.shape_cast %131 : vector<16x32xf32> to vector<2x8x32xf32>
    %135 = vector.shape_cast %132 : vector<16x32xf32> to vector<2x8x32xf32>
    %136 = vector.extract_strided_slice %133 {offsets = [0, 0, 0], sizes = [2, 8, 16], strides = [1, 1, 1]} : vector<2x8x32xf32> to vector<2x8x16xf32>
    %137 = vector.extract_strided_slice %134 {offsets = [0, 0, 0], sizes = [2, 8, 16], strides = [1, 1, 1]} : vector<2x8x32xf32> to vector<2x8x16xf32>
    "tpu.trace_start"() <{level = 10 : i32, message = "bqd,bkd->bqk"}> : () -> ()
    %cst_70 = arith.constant dense<0.000000e+00> : vector<2x8x8xf32>
    %138 = tpu.matmul %136, %137, %cst_70 {dimension_numbers = #tpu.dot_dimension_numbers<[2], [2], [1], [1], [0, 0, 0, 1, 1, 1], [0], [0]>} : vector<2x8x16xf32>, vector<2x8x16xf32>, vector<2x8x8xf32> -> vector<2x8x8xf32>
    "tpu.trace_stop"() : () -> ()
    %cst_71 = arith.constant dense<0xFF800000> : vector<2x8xf32>
    %139 = vector.multi_reduction <maximumf>, %138, %cst_71 [2] : vector<2x8x8xf32> to vector<2x8xf32>
    %140 = vector.shape_cast %139 : vector<2x8xf32> to vector<2x8x1xf32>
    %141 = vector.broadcast %140 : vector<2x8x1xf32> to vector<2x8x8xf32>
    %142 = arith.subf %138, %141 : vector<2x8x8xf32>
    %143 = math.exp %142 : vector<2x8x8xf32>
    %cst_72 = arith.constant dense<0.000000e+00> : vector<2x8xf32>
    %144 = vector.multi_reduction <add>, %143, %cst_72 [2] : vector<2x8x8xf32> to vector<2x8xf32>
    %145 = vector.shape_cast %144 : vector<2x8xf32> to vector<2x8x1xf32>
    %146 = tpu.reciprocal %145 {approx = true} : vector<2x8x1xf32> -> vector<2x8x1xf32>
    %147 = vector.broadcast %146 : vector<2x8x1xf32> to vector<2x8x8xf32>
    %148 = arith.mulf %143, %147 : vector<2x8x8xf32>
    %149 = vector.extract_strided_slice %135 {offsets = [0, 0, 0], sizes = [2, 8, 16], strides = [1, 1, 1]} : vector<2x8x32xf32> to vector<2x8x16xf32>
    "tpu.trace_start"() <{level = 10 : i32, message = "bqk,bkd->bqd"}> : () -> ()
    %cst_73 = arith.constant dense<0.000000e+00> : vector<2x8x16xf32>
    %150 = tpu.matmul %148, %149, %cst_73 {dimension_numbers = #tpu.dot_dimension_numbers<[2], [1], [1], [2], [0, 0, 0, 1, 1, 2], [0], [0]>} : vector<2x8x8xf32>, vector<2x8x16xf32>, vector<2x8x16xf32> -> vector<2x8x16xf32>
    "tpu.trace_stop"() : () -> ()
    %151 = vector.extract_strided_slice %133 {offsets = [0, 0, 16], sizes = [2, 8, 16], strides = [1, 1, 1]} : vector<2x8x32xf32> to vector<2x8x16xf32>
    %152 = vector.extract_strided_slice %134 {offsets = [0, 0, 16], sizes = [2, 8, 16], strides = [1, 1, 1]} : vector<2x8x32xf32> to vector<2x8x16xf32>
    "tpu.trace_start"() <{level = 10 : i32, message = "bqd,bkd->bqk"}> : () -> ()
    %cst_74 = arith.constant dense<0.000000e+00> : vector<2x8x8xf32>
    %153 = tpu.matmul %151, %152, %cst_74 {dimension_numbers = #tpu.dot_dimension_numbers<[2], [2], [1], [1], [0, 0, 0, 1, 1, 1], [0], [0]>} : vector<2x8x16xf32>, vector<2x8x16xf32>, vector<2x8x8xf32> -> vector<2x8x8xf32>
    "tpu.trace_stop"() : () -> ()
    %cst_75 = arith.constant dense<0xFF800000> : vector<2x8xf32>
    %154 = vector.multi_reduction <maximumf>, %153, %cst_75 [2] : vector<2x8x8xf32> to vector<2x8xf32>
    %155 = vector.shape_cast %154 : vector<2x8xf32> to vector<2x8x1xf32>
    %156 = vector.broadcast %155 : vector<2x8x1xf32> to vector<2x8x8xf32>
    %157 = arith.subf %153, %156 : vector<2x8x8xf32>
    %158 = math.exp %157 : vector<2x8x8xf32>
    %cst_76 = arith.constant dense<0.000000e+00> : vector<2x8xf32>
    %159 = vector.multi_reduction <add>, %158, %cst_76 [2] : vector<2x8x8xf32> to vector<2x8xf32>
    %160 = vector.shape_cast %159 : vector<2x8xf32> to vector<2x8x1xf32>
    %161 = tpu.reciprocal %160 {approx = true} : vector<2x8x1xf32> -> vector<2x8x1xf32>
    %162 = vector.broadcast %161 : vector<2x8x1xf32> to vector<2x8x8xf32>
    %163 = arith.mulf %158, %162 : vector<2x8x8xf32>
    %164 = vector.extract_strided_slice %135 {offsets = [0, 0, 16], sizes = [2, 8, 16], strides = [1, 1, 1]} : vector<2x8x32xf32> to vector<2x8x16xf32>
    "tpu.trace_start"() <{level = 10 : i32, message = "bqk,bkd->bqd"}> : () -> ()
    %cst_77 = arith.constant dense<0.000000e+00> : vector<2x8x16xf32>
    %165 = tpu.matmul %163, %164, %cst_77 {dimension_numbers = #tpu.dot_dimension_numbers<[2], [1], [1], [2], [0, 0, 0, 1, 1, 2], [0], [0]>} : vector<2x8x8xf32>, vector<2x8x16xf32>, vector<2x8x16xf32> -> vector<2x8x16xf32>
    "tpu.trace_stop"() : () -> ()
    %166 = tpu.concatenate %150, %165 in 2 : vector<2x8x16xf32>, vector<2x8x16xf32> -> vector<2x8x32xf32>
    %167 = vector.shape_cast %166 : vector<2x8x32xf32> to vector<16x32xf32>
    %cst_78 = arith.constant dense<0.000000e+00> : vector<16x32xf32>
    %168 = tpu.matmul %167, %124, %cst_78 {dimension_numbers = #tpu.dot_dimension_numbers<[1], [0], [0], [1], [0, 0, 1, 1], [], []>} : vector<16x32xf32>, vector<32x32xf32>, vector<16x32xf32> -> vector<16x32xf32>
    %169 = vector.broadcast %126 : vector<1x32xf32> to vector<16x32xf32>
    %170 = arith.addf %168, %169 : vector<16x32xf32>
    %171 = arith.addf %118, %170 : vector<16x32xf32>
    %c1_79 = arith.constant 1 : index
    %c0_80 = arith.constant 0 : index
    %c0_81 = arith.constant 0 : index
    %172 = vector.load %arg10[%c1_79, %c0_80, %c0_81] : memref<12x1x32xf32, #tpu.memory_space<vmem>>, vector<1x1x32xf32>
    %173 = vector.shape_cast %172 : vector<1x1x32xf32> to vector<1x32xf32>
    %c1_82 = arith.constant 1 : index
    %c0_83 = arith.constant 0 : index
    %c0_84 = arith.constant 0 : index
    %174 = vector.load %arg11[%c1_82, %c0_83, %c0_84] : memref<12x1x32xf32, #tpu.memory_space<vmem>>, vector<1x1x32xf32>
    %175 = vector.shape_cast %174 : vector<1x1x32xf32> to vector<1x32xf32>
    %cst_85 = arith.constant dense<0.000000e+00> : vector<16xf32>
    %176 = vector.multi_reduction <add>, %171, %cst_85 [1] : vector<16x32xf32> to vector<16xf32>
    %177 = vector.shape_cast %176 : vector<16xf32> to vector<16x1xf32>
    %cst_86 = arith.constant 3.200000e+01 : f32
    %178 = vector.broadcast %cst_86 : f32 to vector<16x1xf32>
    %179 = arith.divf %177, %178 : vector<16x1xf32>
    %180 = vector.broadcast %179 : vector<16x1xf32> to vector<16x32xf32>
    %181 = arith.subf %171, %180 : vector<16x32xf32>
    %182 = arith.mulf %181, %181 : vector<16x32xf32>
    %cst_87 = arith.constant dense<0.000000e+00> : vector<16xf32>
    %183 = vector.multi_reduction <add>, %182, %cst_87 [1] : vector<16x32xf32> to vector<16xf32>
    %184 = vector.shape_cast %183 : vector<16xf32> to vector<16x1xf32>
    %cst_88 = arith.constant 3.200000e+01 : f32
    %185 = vector.broadcast %cst_88 : f32 to vector<16x1xf32>
    %186 = arith.divf %184, %185 : vector<16x1xf32>
    %cst_89 = arith.constant 9.99999974E-6 : f32
    %187 = vector.broadcast %cst_89 : f32 to vector<16x1xf32>
    %188 = arith.addf %186, %187 : vector<16x1xf32>
    %189 = math.rsqrt %188 : vector<16x1xf32>
    %190 = vector.broadcast %189 : vector<16x1xf32> to vector<16x32xf32>
    %191 = arith.mulf %181, %190 : vector<16x32xf32>
    %192 = vector.broadcast %173 : vector<1x32xf32> to vector<16x32xf32>
    %193 = arith.mulf %191, %192 : vector<16x32xf32>
    %194 = vector.broadcast %175 : vector<1x32xf32> to vector<16x32xf32>
    %195 = arith.addf %193, %194 : vector<16x32xf32>
    %c1_90 = arith.constant 1 : index
    %c0_91 = arith.constant 0 : index
    %c0_92 = arith.constant 0 : index
    %196 = vector.load %arg6[%c1_90, %c0_91, %c0_92] : memref<4x32x64xf32, #tpu.memory_space<vmem>>, vector<1x32x64xf32>
    %197 = vector.shape_cast %196 : vector<1x32x64xf32> to vector<32x64xf32>
    %c1_93 = arith.constant 1 : index
    %c0_94 = arith.constant 0 : index
    %c0_95 = arith.constant 0 : index
    %198 = vector.load %arg7[%c1_93, %c0_94, %c0_95] : memref<4x1x64xf32, #tpu.memory_space<vmem>>, vector<1x1x64xf32>
    %199 = vector.shape_cast %198 : vector<1x1x64xf32> to vector<1x64xf32>
    %c1_96 = arith.constant 1 : index
    %c0_97 = arith.constant 0 : index
    %c0_98 = arith.constant 0 : index
    %200 = vector.load %arg8[%c1_96, %c0_97, %c0_98] : memref<4x64x32xf32, #tpu.memory_space<vmem>>, vector<1x64x32xf32>
    %201 = vector.shape_cast %200 : vector<1x64x32xf32> to vector<64x32xf32>
    %c1_99 = arith.constant 1 : index
    %c0_100 = arith.constant 0 : index
    %c0_101 = arith.constant 0 : index
    %202 = vector.load %arg9[%c1_99, %c0_100, %c0_101] : memref<4x1x32xf32, #tpu.memory_space<vmem>>, vector<1x1x32xf32>
    %203 = vector.shape_cast %202 : vector<1x1x32xf32> to vector<1x32xf32>
    %cst_102 = arith.constant dense<0.000000e+00> : vector<16x64xf32>
    %204 = tpu.matmul %195, %197, %cst_102 {dimension_numbers = #tpu.dot_dimension_numbers<[1], [0], [0], [1], [0, 0, 1, 1], [], []>} : vector<16x32xf32>, vector<32x64xf32>, vector<16x64xf32> -> vector<16x64xf32>
    %205 = vector.broadcast %199 : vector<1x64xf32> to vector<16x64xf32>
    %206 = arith.addf %204, %205 : vector<16x64xf32>
    %cst_103 = arith.constant 0.000000e+00 : f32
    %207 = vector.broadcast %cst_103 : f32 to vector<16x64xf32>
    %208 = arith.maximumf %206, %207 : vector<16x64xf32>
    %cst_104 = arith.constant dense<0.000000e+00> : vector<16x32xf32>
    %209 = tpu.matmul %208, %201, %cst_104 {dimension_numbers = #tpu.dot_dimension_numbers<[1], [0], [0], [1], [0, 0, 1, 1], [], []>} : vector<16x64xf32>, vector<64x32xf32>, vector<16x32xf32> -> vector<16x32xf32>
    %210 = vector.broadcast %203 : vector<1x32xf32> to vector<16x32xf32>
    %211 = arith.addf %209, %210 : vector<16x32xf32>
    %212 = arith.addf %195, %211 : vector<16x32xf32>
    %c3 = arith.constant 3 : index
    %c0_105 = arith.constant 0 : index
    %c0_106 = arith.constant 0 : index
    %213 = vector.load %arg10[%c3, %c0_105, %c0_106] : memref<12x1x32xf32, #tpu.memory_space<vmem>>, vector<1x1x32xf32>
    %214 = vector.shape_cast %213 : vector<1x1x32xf32> to vector<1x32xf32>
    %c3_107 = arith.constant 3 : index
    %c0_108 = arith.constant 0 : index
    %c0_109 = arith.constant 0 : index
    %215 = vector.load %arg11[%c3_107, %c0_108, %c0_109] : memref<12x1x32xf32, #tpu.memory_space<vmem>>, vector<1x1x32xf32>
    %216 = vector.shape_cast %215 : vector<1x1x32xf32> to vector<1x32xf32>
    %cst_110 = arith.constant dense<0.000000e+00> : vector<16xf32>
    %217 = vector.multi_reduction <add>, %212, %cst_110 [1] : vector<16x32xf32> to vector<16xf32>
    %218 = vector.shape_cast %217 : vector<16xf32> to vector<16x1xf32>
    %cst_111 = arith.constant 3.200000e+01 : f32
    %219 = vector.broadcast %cst_111 : f32 to vector<16x1xf32>
    %220 = arith.divf %218, %219 : vector<16x1xf32>
    %221 = vector.broadcast %220 : vector<16x1xf32> to vector<16x32xf32>
    %222 = arith.subf %212, %221 : vector<16x32xf32>
    %223 = arith.mulf %222, %222 : vector<16x32xf32>
    %cst_112 = arith.constant dense<0.000000e+00> : vector<16xf32>
    %224 = vector.multi_reduction <add>, %223, %cst_112 [1] : vector<16x32xf32> to vector<16xf32>
    %225 = vector.shape_cast %224 : vector<16xf32> to vector<16x1xf32>
    %cst_113 = arith.constant 3.200000e+01 : f32
    %226 = vector.broadcast %cst_113 : f32 to vector<16x1xf32>
    %227 = arith.divf %225, %226 : vector<16x1xf32>
    %cst_114 = arith.constant 9.99999974E-6 : f32
    %228 = vector.broadcast %cst_114 : f32 to vector<16x1xf32>
    %229 = arith.addf %227, %228 : vector<16x1xf32>
    %230 = math.rsqrt %229 : vector<16x1xf32>
    %231 = vector.broadcast %230 : vector<16x1xf32> to vector<16x32xf32>
    %232 = arith.mulf %222, %231 : vector<16x32xf32>
    %233 = vector.broadcast %214 : vector<1x32xf32> to vector<16x32xf32>
    %234 = arith.mulf %232, %233 : vector<16x32xf32>
    %235 = vector.broadcast %216 : vector<1x32xf32> to vector<16x32xf32>
    %236 = arith.addf %234, %235 : vector<16x32xf32>
    %c10 = arith.constant 10 : index
    %c0_115 = arith.constant 0 : index
    %c0_116 = arith.constant 0 : index
    %237 = vector.load %arg10[%c10, %c0_115, %c0_116] : memref<12x1x32xf32, #tpu.memory_space<vmem>>, vector<1x1x32xf32>
    %238 = vector.shape_cast %237 : vector<1x1x32xf32> to vector<1x32xf32>
    %c10_117 = arith.constant 10 : index
    %c0_118 = arith.constant 0 : index
    %c0_119 = arith.constant 0 : index
    %239 = vector.load %arg11[%c10_117, %c0_118, %c0_119] : memref<12x1x32xf32, #tpu.memory_space<vmem>>, vector<1x1x32xf32>
    %240 = vector.shape_cast %239 : vector<1x1x32xf32> to vector<1x32xf32>
    %cst_120 = arith.constant dense<0.000000e+00> : vector<16xf32>
    %241 = vector.multi_reduction <add>, %236, %cst_120 [1] : vector<16x32xf32> to vector<16xf32>
    %242 = vector.shape_cast %241 : vector<16xf32> to vector<16x1xf32>
    %cst_121 = arith.constant 3.200000e+01 : f32
    %243 = vector.broadcast %cst_121 : f32 to vector<16x1xf32>
    %244 = arith.divf %242, %243 : vector<16x1xf32>
    %245 = vector.broadcast %244 : vector<16x1xf32> to vector<16x32xf32>
    %246 = arith.subf %236, %245 : vector<16x32xf32>
    %247 = arith.mulf %246, %246 : vector<16x32xf32>
    %cst_122 = arith.constant dense<0.000000e+00> : vector<16xf32>
    %248 = vector.multi_reduction <add>, %247, %cst_122 [1] : vector<16x32xf32> to vector<16xf32>
    %249 = vector.shape_cast %248 : vector<16xf32> to vector<16x1xf32>
    %cst_123 = arith.constant 3.200000e+01 : f32
    %250 = vector.broadcast %cst_123 : f32 to vector<16x1xf32>
    %251 = arith.divf %249, %250 : vector<16x1xf32>
    %cst_124 = arith.constant 9.99999974E-6 : f32
    %252 = vector.broadcast %cst_124 : f32 to vector<16x1xf32>
    %253 = arith.addf %251, %252 : vector<16x1xf32>
    %254 = math.rsqrt %253 : vector<16x1xf32>
    %255 = vector.broadcast %254 : vector<16x1xf32> to vector<16x32xf32>
    %256 = arith.mulf %246, %255 : vector<16x32xf32>
    %257 = vector.broadcast %238 : vector<1x32xf32> to vector<16x32xf32>
    %258 = arith.mulf %256, %257 : vector<16x32xf32>
    %259 = vector.broadcast %240 : vector<1x32xf32> to vector<16x32xf32>
    %260 = arith.addf %258, %259 : vector<16x32xf32>
    %c2_125 = arith.constant 2 : index
    %c0_126 = arith.constant 0 : index
    %c0_127 = arith.constant 0 : index
    %261 = vector.load %arg2[%c2_125, %c0_126, %c0_127] : memref<6x32x96xf32, #tpu.memory_space<vmem>>, vector<1x32x96xf32>
    %262 = vector.shape_cast %261 : vector<1x32x96xf32> to vector<32x96xf32>
    %c2_128 = arith.constant 2 : index
    %c0_129 = arith.constant 0 : index
    %c0_130 = arith.constant 0 : index
    %263 = vector.load %arg3[%c2_128, %c0_129, %c0_130] : memref<6x1x96xf32, #tpu.memory_space<vmem>>, vector<1x1x96xf32>
    %264 = vector.shape_cast %263 : vector<1x1x96xf32> to vector<1x96xf32>
    %c2_131 = arith.constant 2 : index
    %c0_132 = arith.constant 0 : index
    %c0_133 = arith.constant 0 : index
    %265 = vector.load %arg4[%c2_131, %c0_132, %c0_133] : memref<6x32x32xf32, #tpu.memory_space<vmem>>, vector<1x32x32xf32>
    %266 = vector.shape_cast %265 : vector<1x32x32xf32> to vector<32x32xf32>
    %c2_134 = arith.constant 2 : index
    %c0_135 = arith.constant 0 : index
    %c0_136 = arith.constant 0 : index
    %267 = vector.load %arg5[%c2_134, %c0_135, %c0_136] : memref<6x1x32xf32, #tpu.memory_space<vmem>>, vector<1x1x32xf32>
    %268 = vector.shape_cast %267 : vector<1x1x32xf32> to vector<1x32xf32>
    %cst_137 = arith.constant dense<0.000000e+00> : vector<16x96xf32>
    %269 = tpu.matmul %0, %262, %cst_137 {dimension_numbers = #tpu.dot_dimension_numbers<[1], [0], [0], [1], [0, 0, 1, 1], [], []>} : vector<16x32xf32>, vector<32x96xf32>, vector<16x96xf32> -> vector<16x96xf32>
    %270 = vector.broadcast %264 : vector<1x96xf32> to vector<16x96xf32>
    %271 = arith.addf %269, %270 : vector<16x96xf32>
    %272 = vector.extract_strided_slice %271 {offsets = [0, 0], sizes = [16, 32], strides = [1, 1]} : vector<16x96xf32> to vector<16x32xf32>
    %273 = vector.extract_strided_slice %271 {offsets = [0, 32], sizes = [16, 32], strides = [1, 1]} : vector<16x96xf32> to vector<16x32xf32>
    %274 = vector.extract_strided_slice %271 {offsets = [0, 64], sizes = [16, 32], strides = [1, 1]} : vector<16x96xf32> to vector<16x32xf32>
    %275 = vector.shape_cast %272 : vector<16x32xf32> to vector<2x8x32xf32>
    %276 = vector.shape_cast %273 : vector<16x32xf32> to vector<2x8x32xf32>
    %277 = vector.shape_cast %274 : vector<16x32xf32> to vector<2x8x32xf32>
    %278 = vector.extract_strided_slice %275 {offsets = [0, 0, 0], sizes = [2, 8, 16], strides = [1, 1, 1]} : vector<2x8x32xf32> to vector<2x8x16xf32>
    %279 = vector.extract_strided_slice %276 {offsets = [0, 0, 0], sizes = [2, 8, 16], strides = [1, 1, 1]} : vector<2x8x32xf32> to vector<2x8x16xf32>
    "tpu.trace_start"() <{level = 10 : i32, message = "bqd,bkd->bqk"}> : () -> ()
    %cst_138 = arith.constant dense<0.000000e+00> : vector<2x8x8xf32>
    %280 = tpu.matmul %278, %279, %cst_138 {dimension_numbers = #tpu.dot_dimension_numbers<[2], [2], [1], [1], [0, 0, 0, 1, 1, 1], [0], [0]>} : vector<2x8x16xf32>, vector<2x8x16xf32>, vector<2x8x8xf32> -> vector<2x8x8xf32>
    "tpu.trace_stop"() : () -> ()
    %cst_139 = arith.constant dense<0xFF800000> : vector<2x8xf32>
    %281 = vector.multi_reduction <maximumf>, %280, %cst_139 [2] : vector<2x8x8xf32> to vector<2x8xf32>
    %282 = vector.shape_cast %281 : vector<2x8xf32> to vector<2x8x1xf32>
    %283 = vector.broadcast %282 : vector<2x8x1xf32> to vector<2x8x8xf32>
    %284 = arith.subf %280, %283 : vector<2x8x8xf32>
    %285 = math.exp %284 : vector<2x8x8xf32>
    %cst_140 = arith.constant dense<0.000000e+00> : vector<2x8xf32>
    %286 = vector.multi_reduction <add>, %285, %cst_140 [2] : vector<2x8x8xf32> to vector<2x8xf32>
    %287 = vector.shape_cast %286 : vector<2x8xf32> to vector<2x8x1xf32>
    %288 = tpu.reciprocal %287 {approx = true} : vector<2x8x1xf32> -> vector<2x8x1xf32>
    %289 = vector.broadcast %288 : vector<2x8x1xf32> to vector<2x8x8xf32>
    %290 = arith.mulf %285, %289 : vector<2x8x8xf32>
    %291 = vector.extract_strided_slice %277 {offsets = [0, 0, 0], sizes = [2, 8, 16], strides = [1, 1, 1]} : vector<2x8x32xf32> to vector<2x8x16xf32>
    "tpu.trace_start"() <{level = 10 : i32, message = "bqk,bkd->bqd"}> : () -> ()
    %cst_141 = arith.constant dense<0.000000e+00> : vector<2x8x16xf32>
    %292 = tpu.matmul %290, %291, %cst_141 {dimension_numbers = #tpu.dot_dimension_numbers<[2], [1], [1], [2], [0, 0, 0, 1, 1, 2], [0], [0]>} : vector<2x8x8xf32>, vector<2x8x16xf32>, vector<2x8x16xf32> -> vector<2x8x16xf32>
    "tpu.trace_stop"() : () -> ()
    %293 = vector.extract_strided_slice %275 {offsets = [0, 0, 16], sizes = [2, 8, 16], strides = [1, 1, 1]} : vector<2x8x32xf32> to vector<2x8x16xf32>
    %294 = vector.extract_strided_slice %276 {offsets = [0, 0, 16], sizes = [2, 8, 16], strides = [1, 1, 1]} : vector<2x8x32xf32> to vector<2x8x16xf32>
    "tpu.trace_start"() <{level = 10 : i32, message = "bqd,bkd->bqk"}> : () -> ()
    %cst_142 = arith.constant dense<0.000000e+00> : vector<2x8x8xf32>
    %295 = tpu.matmul %293, %294, %cst_142 {dimension_numbers = #tpu.dot_dimension_numbers<[2], [2], [1], [1], [0, 0, 0, 1, 1, 1], [0], [0]>} : vector<2x8x16xf32>, vector<2x8x16xf32>, vector<2x8x8xf32> -> vector<2x8x8xf32>
    "tpu.trace_stop"() : () -> ()
    %cst_143 = arith.constant dense<0xFF800000> : vector<2x8xf32>
    %296 = vector.multi_reduction <maximumf>, %295, %cst_143 [2] : vector<2x8x8xf32> to vector<2x8xf32>
    %297 = vector.shape_cast %296 : vector<2x8xf32> to vector<2x8x1xf32>
    %298 = vector.broadcast %297 : vector<2x8x1xf32> to vector<2x8x8xf32>
    %299 = arith.subf %295, %298 : vector<2x8x8xf32>
    %300 = math.exp %299 : vector<2x8x8xf32>
    %cst_144 = arith.constant dense<0.000000e+00> : vector<2x8xf32>
    %301 = vector.multi_reduction <add>, %300, %cst_144 [2] : vector<2x8x8xf32> to vector<2x8xf32>
    %302 = vector.shape_cast %301 : vector<2x8xf32> to vector<2x8x1xf32>
    %303 = tpu.reciprocal %302 {approx = true} : vector<2x8x1xf32> -> vector<2x8x1xf32>
    %304 = vector.broadcast %303 : vector<2x8x1xf32> to vector<2x8x8xf32>
    %305 = arith.mulf %300, %304 : vector<2x8x8xf32>
    %306 = vector.extract_strided_slice %277 {offsets = [0, 0, 16], sizes = [2, 8, 16], strides = [1, 1, 1]} : vector<2x8x32xf32> to vector<2x8x16xf32>
    "tpu.trace_start"() <{level = 10 : i32, message = "bqk,bkd->bqd"}> : () -> ()
    %cst_145 = arith.constant dense<0.000000e+00> : vector<2x8x16xf32>
    %307 = tpu.matmul %305, %306, %cst_145 {dimension_numbers = #tpu.dot_dimension_numbers<[2], [1], [1], [2], [0, 0, 0, 1, 1, 2], [0], [0]>} : vector<2x8x8xf32>, vector<2x8x16xf32>, vector<2x8x16xf32> -> vector<2x8x16xf32>
    "tpu.trace_stop"() : () -> ()
    %308 = tpu.concatenate %292, %307 in 2 : vector<2x8x16xf32>, vector<2x8x16xf32> -> vector<2x8x32xf32>
    %309 = vector.shape_cast %308 : vector<2x8x32xf32> to vector<16x32xf32>
    %cst_146 = arith.constant dense<0.000000e+00> : vector<16x32xf32>
    %310 = tpu.matmul %309, %266, %cst_146 {dimension_numbers = #tpu.dot_dimension_numbers<[1], [0], [0], [1], [0, 0, 1, 1], [], []>} : vector<16x32xf32>, vector<32x32xf32>, vector<16x32xf32> -> vector<16x32xf32>
    %311 = vector.broadcast %268 : vector<1x32xf32> to vector<16x32xf32>
    %312 = arith.addf %310, %311 : vector<16x32xf32>
    %313 = arith.addf %0, %312 : vector<16x32xf32>
    %c4 = arith.constant 4 : index
    %c0_147 = arith.constant 0 : index
    %c0_148 = arith.constant 0 : index
    %314 = vector.load %arg10[%c4, %c0_147, %c0_148] : memref<12x1x32xf32, #tpu.memory_space<vmem>>, vector<1x1x32xf32>
    %315 = vector.shape_cast %314 : vector<1x1x32xf32> to vector<1x32xf32>
    %c4_149 = arith.constant 4 : index
    %c0_150 = arith.constant 0 : index
    %c0_151 = arith.constant 0 : index
    %316 = vector.load %arg11[%c4_149, %c0_150, %c0_151] : memref<12x1x32xf32, #tpu.memory_space<vmem>>, vector<1x1x32xf32>
    %317 = vector.shape_cast %316 : vector<1x1x32xf32> to vector<1x32xf32>
    %cst_152 = arith.constant dense<0.000000e+00> : vector<16xf32>
    %318 = vector.multi_reduction <add>, %313, %cst_152 [1] : vector<16x32xf32> to vector<16xf32>
    %319 = vector.shape_cast %318 : vector<16xf32> to vector<16x1xf32>
    %cst_153 = arith.constant 3.200000e+01 : f32
    %320 = vector.broadcast %cst_153 : f32 to vector<16x1xf32>
    %321 = arith.divf %319, %320 : vector<16x1xf32>
    %322 = vector.broadcast %321 : vector<16x1xf32> to vector<16x32xf32>
    %323 = arith.subf %313, %322 : vector<16x32xf32>
    %324 = arith.mulf %323, %323 : vector<16x32xf32>
    %cst_154 = arith.constant dense<0.000000e+00> : vector<16xf32>
    %325 = vector.multi_reduction <add>, %324, %cst_154 [1] : vector<16x32xf32> to vector<16xf32>
    %326 = vector.shape_cast %325 : vector<16xf32> to vector<16x1xf32>
    %cst_155 = arith.constant 3.200000e+01 : f32
    %327 = vector.broadcast %cst_155 : f32 to vector<16x1xf32>
    %328 = arith.divf %326, %327 : vector<16x1xf32>
    %cst_156 = arith.constant 9.99999974E-6 : f32
    %329 = vector.broadcast %cst_156 : f32 to vector<16x1xf32>
    %330 = arith.addf %328, %329 : vector<16x1xf32>
    %331 = math.rsqrt %330 : vector<16x1xf32>
    %332 = vector.broadcast %331 : vector<16x1xf32> to vector<16x32xf32>
    %333 = arith.mulf %323, %332 : vector<16x32xf32>
    %334 = vector.broadcast %315 : vector<1x32xf32> to vector<16x32xf32>
    %335 = arith.mulf %333, %334 : vector<16x32xf32>
    %336 = vector.broadcast %317 : vector<1x32xf32> to vector<16x32xf32>
    %337 = arith.addf %335, %336 : vector<16x32xf32>
    %c4_157 = arith.constant 4 : index
    %c0_158 = arith.constant 0 : index
    %c0_159 = arith.constant 0 : index
    %338 = vector.load %arg2[%c4_157, %c0_158, %c0_159] : memref<6x32x96xf32, #tpu.memory_space<vmem>>, vector<1x32x96xf32>
    %339 = vector.shape_cast %338 : vector<1x32x96xf32> to vector<32x96xf32>
    %c4_160 = arith.constant 4 : index
    %c0_161 = arith.constant 0 : index
    %c0_162 = arith.constant 0 : index
    %340 = vector.load %arg3[%c4_160, %c0_161, %c0_162] : memref<6x1x96xf32, #tpu.memory_space<vmem>>, vector<1x1x96xf32>
    %341 = vector.shape_cast %340 : vector<1x1x96xf32> to vector<1x96xf32>
    %c4_163 = arith.constant 4 : index
    %c0_164 = arith.constant 0 : index
    %c0_165 = arith.constant 0 : index
    %342 = vector.load %arg4[%c4_163, %c0_164, %c0_165] : memref<6x32x32xf32, #tpu.memory_space<vmem>>, vector<1x32x32xf32>
    %343 = vector.shape_cast %342 : vector<1x32x32xf32> to vector<32x32xf32>
    %c4_166 = arith.constant 4 : index
    %c0_167 = arith.constant 0 : index
    %c0_168 = arith.constant 0 : index
    %344 = vector.load %arg5[%c4_166, %c0_167, %c0_168] : memref<6x1x32xf32, #tpu.memory_space<vmem>>, vector<1x1x32xf32>
    %345 = vector.shape_cast %344 : vector<1x1x32xf32> to vector<1x32xf32>
    %346 = vector.extract_strided_slice %339 {offsets = [0, 0], sizes = [32, 32], strides = [1, 1]} : vector<32x96xf32> to vector<32x32xf32>
    %cst_169 = arith.constant dense<0.000000e+00> : vector<16x32xf32>
    %347 = tpu.matmul %337, %346, %cst_169 {dimension_numbers = #tpu.dot_dimension_numbers<[1], [0], [0], [1], [0, 0, 1, 1], [], []>} : vector<16x32xf32>, vector<32x32xf32>, vector<16x32xf32> -> vector<16x32xf32>
    %348 = vector.extract_strided_slice %341 {offsets = [0, 0], sizes = [1, 32], strides = [1, 1]} : vector<1x96xf32> to vector<1x32xf32>
    %349 = vector.broadcast %348 : vector<1x32xf32> to vector<16x32xf32>
    %350 = arith.addf %347, %349 : vector<16x32xf32>
    %351 = vector.extract_strided_slice %339 {offsets = [0, 32], sizes = [32, 64], strides = [1, 1]} : vector<32x96xf32> to vector<32x64xf32>
    %cst_170 = arith.constant dense<0.000000e+00> : vector<16x64xf32>
    %352 = tpu.matmul %260, %351, %cst_170 {dimension_numbers = #tpu.dot_dimension_numbers<[1], [0], [0], [1], [0, 0, 1, 1], [], []>} : vector<16x32xf32>, vector<32x64xf32>, vector<16x64xf32> -> vector<16x64xf32>
    %353 = vector.extract_strided_slice %341 {offsets = [0, 32], sizes = [1, 64], strides = [1, 1]} : vector<1x96xf32> to vector<1x64xf32>
    %354 = vector.broadcast %353 : vector<1x64xf32> to vector<16x64xf32>
    %355 = arith.addf %352, %354 : vector<16x64xf32>
    %356 = vector.extract_strided_slice %355 {offsets = [0, 0], sizes = [16, 32], strides = [1, 1]} : vector<16x64xf32> to vector<16x32xf32>
    %357 = vector.extract_strided_slice %355 {offsets = [0, 32], sizes = [16, 32], strides = [1, 1]} : vector<16x64xf32> to vector<16x32xf32>
    %358 = vector.shape_cast %350 : vector<16x32xf32> to vector<2x8x32xf32>
    %359 = vector.shape_cast %356 : vector<16x32xf32> to vector<2x8x32xf32>
    %360 = vector.shape_cast %357 : vector<16x32xf32> to vector<2x8x32xf32>
    %361 = vector.extract_strided_slice %358 {offsets = [0, 0, 0], sizes = [2, 8, 16], strides = [1, 1, 1]} : vector<2x8x32xf32> to vector<2x8x16xf32>
    %362 = vector.extract_strided_slice %359 {offsets = [0, 0, 0], sizes = [2, 8, 16], strides = [1, 1, 1]} : vector<2x8x32xf32> to vector<2x8x16xf32>
    "tpu.trace_start"() <{level = 10 : i32, message = "bqd,bkd->bqk"}> : () -> ()
    %cst_171 = arith.constant dense<0.000000e+00> : vector<2x8x8xf32>
    %363 = tpu.matmul %361, %362, %cst_171 {dimension_numbers = #tpu.dot_dimension_numbers<[2], [2], [1], [1], [0, 0, 0, 1, 1, 1], [0], [0]>} : vector<2x8x16xf32>, vector<2x8x16xf32>, vector<2x8x8xf32> -> vector<2x8x8xf32>
    "tpu.trace_stop"() : () -> ()
    %cst_172 = arith.constant dense<0xFF800000> : vector<2x8xf32>
    %364 = vector.multi_reduction <maximumf>, %363, %cst_172 [2] : vector<2x8x8xf32> to vector<2x8xf32>
    %365 = vector.shape_cast %364 : vector<2x8xf32> to vector<2x8x1xf32>
    %366 = vector.broadcast %365 : vector<2x8x1xf32> to vector<2x8x8xf32>
    %367 = arith.subf %363, %366 : vector<2x8x8xf32>
    %368 = math.exp %367 : vector<2x8x8xf32>
    %cst_173 = arith.constant dense<0.000000e+00> : vector<2x8xf32>
    %369 = vector.multi_reduction <add>, %368, %cst_173 [2] : vector<2x8x8xf32> to vector<2x8xf32>
    %370 = vector.shape_cast %369 : vector<2x8xf32> to vector<2x8x1xf32>
    %371 = tpu.reciprocal %370 {approx = true} : vector<2x8x1xf32> -> vector<2x8x1xf32>
    %372 = vector.broadcast %371 : vector<2x8x1xf32> to vector<2x8x8xf32>
    %373 = arith.mulf %368, %372 : vector<2x8x8xf32>
    %374 = vector.extract_strided_slice %360 {offsets = [0, 0, 0], sizes = [2, 8, 16], strides = [1, 1, 1]} : vector<2x8x32xf32> to vector<2x8x16xf32>
    "tpu.trace_start"() <{level = 10 : i32, message = "bqk,bkd->bqd"}> : () -> ()
    %cst_174 = arith.constant dense<0.000000e+00> : vector<2x8x16xf32>
    %375 = tpu.matmul %373, %374, %cst_174 {dimension_numbers = #tpu.dot_dimension_numbers<[2], [1], [1], [2], [0, 0, 0, 1, 1, 2], [0], [0]>} : vector<2x8x8xf32>, vector<2x8x16xf32>, vector<2x8x16xf32> -> vector<2x8x16xf32>
    "tpu.trace_stop"() : () -> ()
    %376 = vector.extract_strided_slice %358 {offsets = [0, 0, 16], sizes = [2, 8, 16], strides = [1, 1, 1]} : vector<2x8x32xf32> to vector<2x8x16xf32>
    %377 = vector.extract_strided_slice %359 {offsets = [0, 0, 16], sizes = [2, 8, 16], strides = [1, 1, 1]} : vector<2x8x32xf32> to vector<2x8x16xf32>
    "tpu.trace_start"() <{level = 10 : i32, message = "bqd,bkd->bqk"}> : () -> ()
    %cst_175 = arith.constant dense<0.000000e+00> : vector<2x8x8xf32>
    %378 = tpu.matmul %376, %377, %cst_175 {dimension_numbers = #tpu.dot_dimension_numbers<[2], [2], [1], [1], [0, 0, 0, 1, 1, 1], [0], [0]>} : vector<2x8x16xf32>, vector<2x8x16xf32>, vector<2x8x8xf32> -> vector<2x8x8xf32>
    "tpu.trace_stop"() : () -> ()
    %cst_176 = arith.constant dense<0xFF800000> : vector<2x8xf32>
    %379 = vector.multi_reduction <maximumf>, %378, %cst_176 [2] : vector<2x8x8xf32> to vector<2x8xf32>
    %380 = vector.shape_cast %379 : vector<2x8xf32> to vector<2x8x1xf32>
    %381 = vector.broadcast %380 : vector<2x8x1xf32> to vector<2x8x8xf32>
    %382 = arith.subf %378, %381 : vector<2x8x8xf32>
    %383 = math.exp %382 : vector<2x8x8xf32>
    %cst_177 = arith.constant dense<0.000000e+00> : vector<2x8xf32>
    %384 = vector.multi_reduction <add>, %383, %cst_177 [2] : vector<2x8x8xf32> to vector<2x8xf32>
    %385 = vector.shape_cast %384 : vector<2x8xf32> to vector<2x8x1xf32>
    %386 = tpu.reciprocal %385 {approx = true} : vector<2x8x1xf32> -> vector<2x8x1xf32>
    %387 = vector.broadcast %386 : vector<2x8x1xf32> to vector<2x8x8xf32>
    %388 = arith.mulf %383, %387 : vector<2x8x8xf32>
    %389 = vector.extract_strided_slice %360 {offsets = [0, 0, 16], sizes = [2, 8, 16], strides = [1, 1, 1]} : vector<2x8x32xf32> to vector<2x8x16xf32>
    "tpu.trace_start"() <{level = 10 : i32, message = "bqk,bkd->bqd"}> : () -> ()
    %cst_178 = arith.constant dense<0.000000e+00> : vector<2x8x16xf32>
    %390 = tpu.matmul %388, %389, %cst_178 {dimension_numbers = #tpu.dot_dimension_numbers<[2], [1], [1], [2], [0, 0, 0, 1, 1, 2], [0], [0]>} : vector<2x8x8xf32>, vector<2x8x16xf32>, vector<2x8x16xf32> -> vector<2x8x16xf32>
    "tpu.trace_stop"() : () -> ()
    %391 = tpu.concatenate %375, %390 in 2 : vector<2x8x16xf32>, vector<2x8x16xf32> -> vector<2x8x32xf32>
    %392 = vector.shape_cast %391 : vector<2x8x32xf32> to vector<16x32xf32>
    %cst_179 = arith.constant dense<0.000000e+00> : vector<16x32xf32>
    %393 = tpu.matmul %392, %343, %cst_179 {dimension_numbers = #tpu.dot_dimension_numbers<[1], [0], [0], [1], [0, 0, 1, 1], [], []>} : vector<16x32xf32>, vector<32x32xf32>, vector<16x32xf32> -> vector<16x32xf32>
    %394 = vector.broadcast %345 : vector<1x32xf32> to vector<16x32xf32>
    %395 = arith.addf %393, %394 : vector<16x32xf32>
    %396 = arith.addf %337, %395 : vector<16x32xf32>
    %c6 = arith.constant 6 : index
    %c0_180 = arith.constant 0 : index
    %c0_181 = arith.constant 0 : index
    %397 = vector.load %arg10[%c6, %c0_180, %c0_181] : memref<12x1x32xf32, #tpu.memory_space<vmem>>, vector<1x1x32xf32>
    %398 = vector.shape_cast %397 : vector<1x1x32xf32> to vector<1x32xf32>
    %c6_182 = arith.constant 6 : index
    %c0_183 = arith.constant 0 : index
    %c0_184 = arith.constant 0 : index
    %399 = vector.load %arg11[%c6_182, %c0_183, %c0_184] : memref<12x1x32xf32, #tpu.memory_space<vmem>>, vector<1x1x32xf32>
    %400 = vector.shape_cast %399 : vector<1x1x32xf32> to vector<1x32xf32>
    %cst_185 = arith.constant dense<0.000000e+00> : vector<16xf32>
    %401 = vector.multi_reduction <add>, %396, %cst_185 [1] : vector<16x32xf32> to vector<16xf32>
    %402 = vector.shape_cast %401 : vector<16xf32> to vector<16x1xf32>
    %cst_186 = arith.constant 3.200000e+01 : f32
    %403 = vector.broadcast %cst_186 : f32 to vector<16x1xf32>
    %404 = arith.divf %402, %403 : vector<16x1xf32>
    %405 = vector.broadcast %404 : vector<16x1xf32> to vector<16x32xf32>
    %406 = arith.subf %396, %405 : vector<16x32xf32>
    %407 = arith.mulf %406, %406 : vector<16x32xf32>
    %cst_187 = arith.constant dense<0.000000e+00> : vector<16xf32>
    %408 = vector.multi_reduction <add>, %407, %cst_187 [1] : vector<16x32xf32> to vector<16xf32>
    %409 = vector.shape_cast %408 : vector<16xf32> to vector<16x1xf32>
    %cst_188 = arith.constant 3.200000e+01 : f32
    %410 = vector.broadcast %cst_188 : f32 to vector<16x1xf32>
    %411 = arith.divf %409, %410 : vector<16x1xf32>
    %cst_189 = arith.constant 9.99999974E-6 : f32
    %412 = vector.broadcast %cst_189 : f32 to vector<16x1xf32>
    %413 = arith.addf %411, %412 : vector<16x1xf32>
    %414 = math.rsqrt %413 : vector<16x1xf32>
    %415 = vector.broadcast %414 : vector<16x1xf32> to vector<16x32xf32>
    %416 = arith.mulf %406, %415 : vector<16x32xf32>
    %417 = vector.broadcast %398 : vector<1x32xf32> to vector<16x32xf32>
    %418 = arith.mulf %416, %417 : vector<16x32xf32>
    %419 = vector.broadcast %400 : vector<1x32xf32> to vector<16x32xf32>
    %420 = arith.addf %418, %419 : vector<16x32xf32>
    %c2_190 = arith.constant 2 : index
    %c0_191 = arith.constant 0 : index
    %c0_192 = arith.constant 0 : index
    %421 = vector.load %arg6[%c2_190, %c0_191, %c0_192] : memref<4x32x64xf32, #tpu.memory_space<vmem>>, vector<1x32x64xf32>
    %422 = vector.shape_cast %421 : vector<1x32x64xf32> to vector<32x64xf32>
    %c2_193 = arith.constant 2 : index
    %c0_194 = arith.constant 0 : index
    %c0_195 = arith.constant 0 : index
    %423 = vector.load %arg7[%c2_193, %c0_194, %c0_195] : memref<4x1x64xf32, #tpu.memory_space<vmem>>, vector<1x1x64xf32>
    %424 = vector.shape_cast %423 : vector<1x1x64xf32> to vector<1x64xf32>
    %c2_196 = arith.constant 2 : index
    %c0_197 = arith.constant 0 : index
    %c0_198 = arith.constant 0 : index
    %425 = vector.load %arg8[%c2_196, %c0_197, %c0_198] : memref<4x64x32xf32, #tpu.memory_space<vmem>>, vector<1x64x32xf32>
    %426 = vector.shape_cast %425 : vector<1x64x32xf32> to vector<64x32xf32>
    %c2_199 = arith.constant 2 : index
    %c0_200 = arith.constant 0 : index
    %c0_201 = arith.constant 0 : index
    %427 = vector.load %arg9[%c2_199, %c0_200, %c0_201] : memref<4x1x32xf32, #tpu.memory_space<vmem>>, vector<1x1x32xf32>
    %428 = vector.shape_cast %427 : vector<1x1x32xf32> to vector<1x32xf32>
    %cst_202 = arith.constant dense<0.000000e+00> : vector<16x64xf32>
    %429 = tpu.matmul %420, %422, %cst_202 {dimension_numbers = #tpu.dot_dimension_numbers<[1], [0], [0], [1], [0, 0, 1, 1], [], []>} : vector<16x32xf32>, vector<32x64xf32>, vector<16x64xf32> -> vector<16x64xf32>
    %430 = vector.broadcast %424 : vector<1x64xf32> to vector<16x64xf32>
    %431 = arith.addf %429, %430 : vector<16x64xf32>
    %cst_203 = arith.constant 0.000000e+00 : f32
    %432 = vector.broadcast %cst_203 : f32 to vector<16x64xf32>
    %433 = arith.maximumf %431, %432 : vector<16x64xf32>
    %cst_204 = arith.constant dense<0.000000e+00> : vector<16x32xf32>
    %434 = tpu.matmul %433, %426, %cst_204 {dimension_numbers = #tpu.dot_dimension_numbers<[1], [0], [0], [1], [0, 0, 1, 1], [], []>} : vector<16x64xf32>, vector<64x32xf32>, vector<16x32xf32> -> vector<16x32xf32>
    %435 = vector.broadcast %428 : vector<1x32xf32> to vector<16x32xf32>
    %436 = arith.addf %434, %435 : vector<16x32xf32>
    %437 = arith.addf %420, %436 : vector<16x32xf32>
    %c8 = arith.constant 8 : index
    %c0_205 = arith.constant 0 : index
    %c0_206 = arith.constant 0 : index
    %438 = vector.load %arg10[%c8, %c0_205, %c0_206] : memref<12x1x32xf32, #tpu.memory_space<vmem>>, vector<1x1x32xf32>
    %439 = vector.shape_cast %438 : vector<1x1x32xf32> to vector<1x32xf32>
    %c8_207 = arith.constant 8 : index
    %c0_208 = arith.constant 0 : index
    %c0_209 = arith.constant 0 : index
    %440 = vector.load %arg11[%c8_207, %c0_208, %c0_209] : memref<12x1x32xf32, #tpu.memory_space<vmem>>, vector<1x1x32xf32>
    %441 = vector.shape_cast %440 : vector<1x1x32xf32> to vector<1x32xf32>
    %cst_210 = arith.constant dense<0.000000e+00> : vector<16xf32>
    %442 = vector.multi_reduction <add>, %437, %cst_210 [1] : vector<16x32xf32> to vector<16xf32>
    %443 = vector.shape_cast %442 : vector<16xf32> to vector<16x1xf32>
    %cst_211 = arith.constant 3.200000e+01 : f32
    %444 = vector.broadcast %cst_211 : f32 to vector<16x1xf32>
    %445 = arith.divf %443, %444 : vector<16x1xf32>
    %446 = vector.broadcast %445 : vector<16x1xf32> to vector<16x32xf32>
    %447 = arith.subf %437, %446 : vector<16x32xf32>
    %448 = arith.mulf %447, %447 : vector<16x32xf32>
    %cst_212 = arith.constant dense<0.000000e+00> : vector<16xf32>
    %449 = vector.multi_reduction <add>, %448, %cst_212 [1] : vector<16x32xf32> to vector<16xf32>
    %450 = vector.shape_cast %449 : vector<16xf32> to vector<16x1xf32>
    %cst_213 = arith.constant 3.200000e+01 : f32
    %451 = vector.broadcast %cst_213 : f32 to vector<16x1xf32>
    %452 = arith.divf %450, %451 : vector<16x1xf32>
    %cst_214 = arith.constant 9.99999974E-6 : f32
    %453 = vector.broadcast %cst_214 : f32 to vector<16x1xf32>
    %454 = arith.addf %452, %453 : vector<16x1xf32>
    %455 = math.rsqrt %454 : vector<16x1xf32>
    %456 = vector.broadcast %455 : vector<16x1xf32> to vector<16x32xf32>
    %457 = arith.mulf %447, %456 : vector<16x32xf32>
    %458 = vector.broadcast %439 : vector<1x32xf32> to vector<16x32xf32>
    %459 = arith.mulf %457, %458 : vector<16x32xf32>
    %460 = vector.broadcast %441 : vector<1x32xf32> to vector<16x32xf32>
    %461 = arith.addf %459, %460 : vector<16x32xf32>
    %c3_215 = arith.constant 3 : index
    %c0_216 = arith.constant 0 : index
    %c0_217 = arith.constant 0 : index
    %462 = vector.load %arg2[%c3_215, %c0_216, %c0_217] : memref<6x32x96xf32, #tpu.memory_space<vmem>>, vector<1x32x96xf32>
    %463 = vector.shape_cast %462 : vector<1x32x96xf32> to vector<32x96xf32>
    %c3_218 = arith.constant 3 : index
    %c0_219 = arith.constant 0 : index
    %c0_220 = arith.constant 0 : index
    %464 = vector.load %arg3[%c3_218, %c0_219, %c0_220] : memref<6x1x96xf32, #tpu.memory_space<vmem>>, vector<1x1x96xf32>
    %465 = vector.shape_cast %464 : vector<1x1x96xf32> to vector<1x96xf32>
    %c3_221 = arith.constant 3 : index
    %c0_222 = arith.constant 0 : index
    %c0_223 = arith.constant 0 : index
    %466 = vector.load %arg4[%c3_221, %c0_222, %c0_223] : memref<6x32x32xf32, #tpu.memory_space<vmem>>, vector<1x32x32xf32>
    %467 = vector.shape_cast %466 : vector<1x32x32xf32> to vector<32x32xf32>
    %c3_224 = arith.constant 3 : index
    %c0_225 = arith.constant 0 : index
    %c0_226 = arith.constant 0 : index
    %468 = vector.load %arg5[%c3_224, %c0_225, %c0_226] : memref<6x1x32xf32, #tpu.memory_space<vmem>>, vector<1x1x32xf32>
    %469 = vector.shape_cast %468 : vector<1x1x32xf32> to vector<1x32xf32>
    %cst_227 = arith.constant dense<0.000000e+00> : vector<16x96xf32>
    %470 = tpu.matmul %461, %463, %cst_227 {dimension_numbers = #tpu.dot_dimension_numbers<[1], [0], [0], [1], [0, 0, 1, 1], [], []>} : vector<16x32xf32>, vector<32x96xf32>, vector<16x96xf32> -> vector<16x96xf32>
    %471 = vector.broadcast %465 : vector<1x96xf32> to vector<16x96xf32>
    %472 = arith.addf %470, %471 : vector<16x96xf32>
    %473 = vector.extract_strided_slice %472 {offsets = [0, 0], sizes = [16, 32], strides = [1, 1]} : vector<16x96xf32> to vector<16x32xf32>
    %474 = vector.extract_strided_slice %472 {offsets = [0, 32], sizes = [16, 32], strides = [1, 1]} : vector<16x96xf32> to vector<16x32xf32>
    %475 = vector.extract_strided_slice %472 {offsets = [0, 64], sizes = [16, 32], strides = [1, 1]} : vector<16x96xf32> to vector<16x32xf32>
    %476 = vector.shape_cast %473 : vector<16x32xf32> to vector<2x8x32xf32>
    %477 = vector.shape_cast %474 : vector<16x32xf32> to vector<2x8x32xf32>
    %478 = vector.shape_cast %475 : vector<16x32xf32> to vector<2x8x32xf32>
    %479 = vector.extract_strided_slice %476 {offsets = [0, 0, 0], sizes = [2, 8, 16], strides = [1, 1, 1]} : vector<2x8x32xf32> to vector<2x8x16xf32>
    %480 = vector.extract_strided_slice %477 {offsets = [0, 0, 0], sizes = [2, 8, 16], strides = [1, 1, 1]} : vector<2x8x32xf32> to vector<2x8x16xf32>
    "tpu.trace_start"() <{level = 10 : i32, message = "bqd,bkd->bqk"}> : () -> ()
    %cst_228 = arith.constant dense<0.000000e+00> : vector<2x8x8xf32>
    %481 = tpu.matmul %479, %480, %cst_228 {dimension_numbers = #tpu.dot_dimension_numbers<[2], [2], [1], [1], [0, 0, 0, 1, 1, 1], [0], [0]>} : vector<2x8x16xf32>, vector<2x8x16xf32>, vector<2x8x8xf32> -> vector<2x8x8xf32>
    "tpu.trace_stop"() : () -> ()
    %cst_229 = arith.constant dense<0xFF800000> : vector<2x8xf32>
    %482 = vector.multi_reduction <maximumf>, %481, %cst_229 [2] : vector<2x8x8xf32> to vector<2x8xf32>
    %483 = vector.shape_cast %482 : vector<2x8xf32> to vector<2x8x1xf32>
    %484 = vector.broadcast %483 : vector<2x8x1xf32> to vector<2x8x8xf32>
    %485 = arith.subf %481, %484 : vector<2x8x8xf32>
    %486 = math.exp %485 : vector<2x8x8xf32>
    %cst_230 = arith.constant dense<0.000000e+00> : vector<2x8xf32>
    %487 = vector.multi_reduction <add>, %486, %cst_230 [2] : vector<2x8x8xf32> to vector<2x8xf32>
    %488 = vector.shape_cast %487 : vector<2x8xf32> to vector<2x8x1xf32>
    %489 = tpu.reciprocal %488 {approx = true} : vector<2x8x1xf32> -> vector<2x8x1xf32>
    %490 = vector.broadcast %489 : vector<2x8x1xf32> to vector<2x8x8xf32>
    %491 = arith.mulf %486, %490 : vector<2x8x8xf32>
    %492 = vector.extract_strided_slice %478 {offsets = [0, 0, 0], sizes = [2, 8, 16], strides = [1, 1, 1]} : vector<2x8x32xf32> to vector<2x8x16xf32>
    "tpu.trace_start"() <{level = 10 : i32, message = "bqk,bkd->bqd"}> : () -> ()
    %cst_231 = arith.constant dense<0.000000e+00> : vector<2x8x16xf32>
    %493 = tpu.matmul %491, %492, %cst_231 {dimension_numbers = #tpu.dot_dimension_numbers<[2], [1], [1], [2], [0, 0, 0, 1, 1, 2], [0], [0]>} : vector<2x8x8xf32>, vector<2x8x16xf32>, vector<2x8x16xf32> -> vector<2x8x16xf32>
    "tpu.trace_stop"() : () -> ()
    %494 = vector.extract_strided_slice %476 {offsets = [0, 0, 16], sizes = [2, 8, 16], strides = [1, 1, 1]} : vector<2x8x32xf32> to vector<2x8x16xf32>
    %495 = vector.extract_strided_slice %477 {offsets = [0, 0, 16], sizes = [2, 8, 16], strides = [1, 1, 1]} : vector<2x8x32xf32> to vector<2x8x16xf32>
    "tpu.trace_start"() <{level = 10 : i32, message = "bqd,bkd->bqk"}> : () -> ()
    %cst_232 = arith.constant dense<0.000000e+00> : vector<2x8x8xf32>
    %496 = tpu.matmul %494, %495, %cst_232 {dimension_numbers = #tpu.dot_dimension_numbers<[2], [2], [1], [1], [0, 0, 0, 1, 1, 1], [0], [0]>} : vector<2x8x16xf32>, vector<2x8x16xf32>, vector<2x8x8xf32> -> vector<2x8x8xf32>
    "tpu.trace_stop"() : () -> ()
    %cst_233 = arith.constant dense<0xFF800000> : vector<2x8xf32>
    %497 = vector.multi_reduction <maximumf>, %496, %cst_233 [2] : vector<2x8x8xf32> to vector<2x8xf32>
    %498 = vector.shape_cast %497 : vector<2x8xf32> to vector<2x8x1xf32>
    %499 = vector.broadcast %498 : vector<2x8x1xf32> to vector<2x8x8xf32>
    %500 = arith.subf %496, %499 : vector<2x8x8xf32>
    %501 = math.exp %500 : vector<2x8x8xf32>
    %cst_234 = arith.constant dense<0.000000e+00> : vector<2x8xf32>
    %502 = vector.multi_reduction <add>, %501, %cst_234 [2] : vector<2x8x8xf32> to vector<2x8xf32>
    %503 = vector.shape_cast %502 : vector<2x8xf32> to vector<2x8x1xf32>
    %504 = tpu.reciprocal %503 {approx = true} : vector<2x8x1xf32> -> vector<2x8x1xf32>
    %505 = vector.broadcast %504 : vector<2x8x1xf32> to vector<2x8x8xf32>
    %506 = arith.mulf %501, %505 : vector<2x8x8xf32>
    %507 = vector.extract_strided_slice %478 {offsets = [0, 0, 16], sizes = [2, 8, 16], strides = [1, 1, 1]} : vector<2x8x32xf32> to vector<2x8x16xf32>
    "tpu.trace_start"() <{level = 10 : i32, message = "bqk,bkd->bqd"}> : () -> ()
    %cst_235 = arith.constant dense<0.000000e+00> : vector<2x8x16xf32>
    %508 = tpu.matmul %506, %507, %cst_235 {dimension_numbers = #tpu.dot_dimension_numbers<[2], [1], [1], [2], [0, 0, 0, 1, 1, 2], [0], [0]>} : vector<2x8x8xf32>, vector<2x8x16xf32>, vector<2x8x16xf32> -> vector<2x8x16xf32>
    "tpu.trace_stop"() : () -> ()
    %509 = tpu.concatenate %493, %508 in 2 : vector<2x8x16xf32>, vector<2x8x16xf32> -> vector<2x8x32xf32>
    %510 = vector.shape_cast %509 : vector<2x8x32xf32> to vector<16x32xf32>
    %cst_236 = arith.constant dense<0.000000e+00> : vector<16x32xf32>
    %511 = tpu.matmul %510, %467, %cst_236 {dimension_numbers = #tpu.dot_dimension_numbers<[1], [0], [0], [1], [0, 0, 1, 1], [], []>} : vector<16x32xf32>, vector<32x32xf32>, vector<16x32xf32> -> vector<16x32xf32>
    %512 = vector.broadcast %469 : vector<1x32xf32> to vector<16x32xf32>
    %513 = arith.addf %511, %512 : vector<16x32xf32>
    %514 = arith.addf %461, %513 : vector<16x32xf32>
    %c5 = arith.constant 5 : index
    %c0_237 = arith.constant 0 : index
    %c0_238 = arith.constant 0 : index
    %515 = vector.load %arg10[%c5, %c0_237, %c0_238] : memref<12x1x32xf32, #tpu.memory_space<vmem>>, vector<1x1x32xf32>
    %516 = vector.shape_cast %515 : vector<1x1x32xf32> to vector<1x32xf32>
    %c5_239 = arith.constant 5 : index
    %c0_240 = arith.constant 0 : index
    %c0_241 = arith.constant 0 : index
    %517 = vector.load %arg11[%c5_239, %c0_240, %c0_241] : memref<12x1x32xf32, #tpu.memory_space<vmem>>, vector<1x1x32xf32>
    %518 = vector.shape_cast %517 : vector<1x1x32xf32> to vector<1x32xf32>
    %cst_242 = arith.constant dense<0.000000e+00> : vector<16xf32>
    %519 = vector.multi_reduction <add>, %514, %cst_242 [1] : vector<16x32xf32> to vector<16xf32>
    %520 = vector.shape_cast %519 : vector<16xf32> to vector<16x1xf32>
    %cst_243 = arith.constant 3.200000e+01 : f32
    %521 = vector.broadcast %cst_243 : f32 to vector<16x1xf32>
    %522 = arith.divf %520, %521 : vector<16x1xf32>
    %523 = vector.broadcast %522 : vector<16x1xf32> to vector<16x32xf32>
    %524 = arith.subf %514, %523 : vector<16x32xf32>
    %525 = arith.mulf %524, %524 : vector<16x32xf32>
    %cst_244 = arith.constant dense<0.000000e+00> : vector<16xf32>
    %526 = vector.multi_reduction <add>, %525, %cst_244 [1] : vector<16x32xf32> to vector<16xf32>
    %527 = vector.shape_cast %526 : vector<16xf32> to vector<16x1xf32>
    %cst_245 = arith.constant 3.200000e+01 : f32
    %528 = vector.broadcast %cst_245 : f32 to vector<16x1xf32>
    %529 = arith.divf %527, %528 : vector<16x1xf32>
    %cst_246 = arith.constant 9.99999974E-6 : f32
    %530 = vector.broadcast %cst_246 : f32 to vector<16x1xf32>
    %531 = arith.addf %529, %530 : vector<16x1xf32>
    %532 = math.rsqrt %531 : vector<16x1xf32>
    %533 = vector.broadcast %532 : vector<16x1xf32> to vector<16x32xf32>
    %534 = arith.mulf %524, %533 : vector<16x32xf32>
    %535 = vector.broadcast %516 : vector<1x32xf32> to vector<16x32xf32>
    %536 = arith.mulf %534, %535 : vector<16x32xf32>
    %537 = vector.broadcast %518 : vector<1x32xf32> to vector<16x32xf32>
    %538 = arith.addf %536, %537 : vector<16x32xf32>
    %c5_247 = arith.constant 5 : index
    %c0_248 = arith.constant 0 : index
    %c0_249 = arith.constant 0 : index
    %539 = vector.load %arg2[%c5_247, %c0_248, %c0_249] : memref<6x32x96xf32, #tpu.memory_space<vmem>>, vector<1x32x96xf32>
    %540 = vector.shape_cast %539 : vector<1x32x96xf32> to vector<32x96xf32>
    %c5_250 = arith.constant 5 : index
    %c0_251 = arith.constant 0 : index
    %c0_252 = arith.constant 0 : index
    %541 = vector.load %arg3[%c5_250, %c0_251, %c0_252] : memref<6x1x96xf32, #tpu.memory_space<vmem>>, vector<1x1x96xf32>
    %542 = vector.shape_cast %541 : vector<1x1x96xf32> to vector<1x96xf32>
    %c5_253 = arith.constant 5 : index
    %c0_254 = arith.constant 0 : index
    %c0_255 = arith.constant 0 : index
    %543 = vector.load %arg4[%c5_253, %c0_254, %c0_255] : memref<6x32x32xf32, #tpu.memory_space<vmem>>, vector<1x32x32xf32>
    %544 = vector.shape_cast %543 : vector<1x32x32xf32> to vector<32x32xf32>
    %c5_256 = arith.constant 5 : index
    %c0_257 = arith.constant 0 : index
    %c0_258 = arith.constant 0 : index
    %545 = vector.load %arg5[%c5_256, %c0_257, %c0_258] : memref<6x1x32xf32, #tpu.memory_space<vmem>>, vector<1x1x32xf32>
    %546 = vector.shape_cast %545 : vector<1x1x32xf32> to vector<1x32xf32>
    %547 = vector.extract_strided_slice %540 {offsets = [0, 0], sizes = [32, 32], strides = [1, 1]} : vector<32x96xf32> to vector<32x32xf32>
    %cst_259 = arith.constant dense<0.000000e+00> : vector<16x32xf32>
    %548 = tpu.matmul %538, %547, %cst_259 {dimension_numbers = #tpu.dot_dimension_numbers<[1], [0], [0], [1], [0, 0, 1, 1], [], []>} : vector<16x32xf32>, vector<32x32xf32>, vector<16x32xf32> -> vector<16x32xf32>
    %549 = vector.extract_strided_slice %542 {offsets = [0, 0], sizes = [1, 32], strides = [1, 1]} : vector<1x96xf32> to vector<1x32xf32>
    %550 = vector.broadcast %549 : vector<1x32xf32> to vector<16x32xf32>
    %551 = arith.addf %548, %550 : vector<16x32xf32>
    %552 = vector.extract_strided_slice %540 {offsets = [0, 32], sizes = [32, 64], strides = [1, 1]} : vector<32x96xf32> to vector<32x64xf32>
    %cst_260 = arith.constant dense<0.000000e+00> : vector<16x64xf32>
    %553 = tpu.matmul %260, %552, %cst_260 {dimension_numbers = #tpu.dot_dimension_numbers<[1], [0], [0], [1], [0, 0, 1, 1], [], []>} : vector<16x32xf32>, vector<32x64xf32>, vector<16x64xf32> -> vector<16x64xf32>
    %554 = vector.extract_strided_slice %542 {offsets = [0, 32], sizes = [1, 64], strides = [1, 1]} : vector<1x96xf32> to vector<1x64xf32>
    %555 = vector.broadcast %554 : vector<1x64xf32> to vector<16x64xf32>
    %556 = arith.addf %553, %555 : vector<16x64xf32>
    %557 = vector.extract_strided_slice %556 {offsets = [0, 0], sizes = [16, 32], strides = [1, 1]} : vector<16x64xf32> to vector<16x32xf32>
    %558 = vector.extract_strided_slice %556 {offsets = [0, 32], sizes = [16, 32], strides = [1, 1]} : vector<16x64xf32> to vector<16x32xf32>
    %559 = vector.shape_cast %551 : vector<16x32xf32> to vector<2x8x32xf32>
    %560 = vector.shape_cast %557 : vector<16x32xf32> to vector<2x8x32xf32>
    %561 = vector.shape_cast %558 : vector<16x32xf32> to vector<2x8x32xf32>
    %562 = vector.extract_strided_slice %559 {offsets = [0, 0, 0], sizes = [2, 8, 16], strides = [1, 1, 1]} : vector<2x8x32xf32> to vector<2x8x16xf32>
    %563 = vector.extract_strided_slice %560 {offsets = [0, 0, 0], sizes = [2, 8, 16], strides = [1, 1, 1]} : vector<2x8x32xf32> to vector<2x8x16xf32>
    "tpu.trace_start"() <{level = 10 : i32, message = "bqd,bkd->bqk"}> : () -> ()
    %cst_261 = arith.constant dense<0.000000e+00> : vector<2x8x8xf32>
    %564 = tpu.matmul %562, %563, %cst_261 {dimension_numbers = #tpu.dot_dimension_numbers<[2], [2], [1], [1], [0, 0, 0, 1, 1, 1], [0], [0]>} : vector<2x8x16xf32>, vector<2x8x16xf32>, vector<2x8x8xf32> -> vector<2x8x8xf32>
    "tpu.trace_stop"() : () -> ()
    %cst_262 = arith.constant dense<0xFF800000> : vector<2x8xf32>
    %565 = vector.multi_reduction <maximumf>, %564, %cst_262 [2] : vector<2x8x8xf32> to vector<2x8xf32>
    %566 = vector.shape_cast %565 : vector<2x8xf32> to vector<2x8x1xf32>
    %567 = vector.broadcast %566 : vector<2x8x1xf32> to vector<2x8x8xf32>
    %568 = arith.subf %564, %567 : vector<2x8x8xf32>
    %569 = math.exp %568 : vector<2x8x8xf32>
    %cst_263 = arith.constant dense<0.000000e+00> : vector<2x8xf32>
    %570 = vector.multi_reduction <add>, %569, %cst_263 [2] : vector<2x8x8xf32> to vector<2x8xf32>
    %571 = vector.shape_cast %570 : vector<2x8xf32> to vector<2x8x1xf32>
    %572 = tpu.reciprocal %571 {approx = true} : vector<2x8x1xf32> -> vector<2x8x1xf32>
    %573 = vector.broadcast %572 : vector<2x8x1xf32> to vector<2x8x8xf32>
    %574 = arith.mulf %569, %573 : vector<2x8x8xf32>
    %575 = vector.extract_strided_slice %561 {offsets = [0, 0, 0], sizes = [2, 8, 16], strides = [1, 1, 1]} : vector<2x8x32xf32> to vector<2x8x16xf32>
    "tpu.trace_start"() <{level = 10 : i32, message = "bqk,bkd->bqd"}> : () -> ()
    %cst_264 = arith.constant dense<0.000000e+00> : vector<2x8x16xf32>
    %576 = tpu.matmul %574, %575, %cst_264 {dimension_numbers = #tpu.dot_dimension_numbers<[2], [1], [1], [2], [0, 0, 0, 1, 1, 2], [0], [0]>} : vector<2x8x8xf32>, vector<2x8x16xf32>, vector<2x8x16xf32> -> vector<2x8x16xf32>
    "tpu.trace_stop"() : () -> ()
    %577 = vector.extract_strided_slice %559 {offsets = [0, 0, 16], sizes = [2, 8, 16], strides = [1, 1, 1]} : vector<2x8x32xf32> to vector<2x8x16xf32>
    %578 = vector.extract_strided_slice %560 {offsets = [0, 0, 16], sizes = [2, 8, 16], strides = [1, 1, 1]} : vector<2x8x32xf32> to vector<2x8x16xf32>
    "tpu.trace_start"() <{level = 10 : i32, message = "bqd,bkd->bqk"}> : () -> ()
    %cst_265 = arith.constant dense<0.000000e+00> : vector<2x8x8xf32>
    %579 = tpu.matmul %577, %578, %cst_265 {dimension_numbers = #tpu.dot_dimension_numbers<[2], [2], [1], [1], [0, 0, 0, 1, 1, 1], [0], [0]>} : vector<2x8x16xf32>, vector<2x8x16xf32>, vector<2x8x8xf32> -> vector<2x8x8xf32>
    "tpu.trace_stop"() : () -> ()
    %cst_266 = arith.constant dense<0xFF800000> : vector<2x8xf32>
    %580 = vector.multi_reduction <maximumf>, %579, %cst_266 [2] : vector<2x8x8xf32> to vector<2x8xf32>
    %581 = vector.shape_cast %580 : vector<2x8xf32> to vector<2x8x1xf32>
    %582 = vector.broadcast %581 : vector<2x8x1xf32> to vector<2x8x8xf32>
    %583 = arith.subf %579, %582 : vector<2x8x8xf32>
    %584 = math.exp %583 : vector<2x8x8xf32>
    %cst_267 = arith.constant dense<0.000000e+00> : vector<2x8xf32>
    %585 = vector.multi_reduction <add>, %584, %cst_267 [2] : vector<2x8x8xf32> to vector<2x8xf32>
    %586 = vector.shape_cast %585 : vector<2x8xf32> to vector<2x8x1xf32>
    %587 = tpu.reciprocal %586 {approx = true} : vector<2x8x1xf32> -> vector<2x8x1xf32>
    %588 = vector.broadcast %587 : vector<2x8x1xf32> to vector<2x8x8xf32>
    %589 = arith.mulf %584, %588 : vector<2x8x8xf32>
    %590 = vector.extract_strided_slice %561 {offsets = [0, 0, 16], sizes = [2, 8, 16], strides = [1, 1, 1]} : vector<2x8x32xf32> to vector<2x8x16xf32>
    "tpu.trace_start"() <{level = 10 : i32, message = "bqk,bkd->bqd"}> : () -> ()
    %cst_268 = arith.constant dense<0.000000e+00> : vector<2x8x16xf32>
    %591 = tpu.matmul %589, %590, %cst_268 {dimension_numbers = #tpu.dot_dimension_numbers<[2], [1], [1], [2], [0, 0, 0, 1, 1, 2], [0], [0]>} : vector<2x8x8xf32>, vector<2x8x16xf32>, vector<2x8x16xf32> -> vector<2x8x16xf32>
    "tpu.trace_stop"() : () -> ()
    %592 = tpu.concatenate %576, %591 in 2 : vector<2x8x16xf32>, vector<2x8x16xf32> -> vector<2x8x32xf32>
    %593 = vector.shape_cast %592 : vector<2x8x32xf32> to vector<16x32xf32>
    %cst_269 = arith.constant dense<0.000000e+00> : vector<16x32xf32>
    %594 = tpu.matmul %593, %544, %cst_269 {dimension_numbers = #tpu.dot_dimension_numbers<[1], [0], [0], [1], [0, 0, 1, 1], [], []>} : vector<16x32xf32>, vector<32x32xf32>, vector<16x32xf32> -> vector<16x32xf32>
    %595 = vector.broadcast %546 : vector<1x32xf32> to vector<16x32xf32>
    %596 = arith.addf %594, %595 : vector<16x32xf32>
    %597 = arith.addf %538, %596 : vector<16x32xf32>
    %c7 = arith.constant 7 : index
    %c0_270 = arith.constant 0 : index
    %c0_271 = arith.constant 0 : index
    %598 = vector.load %arg10[%c7, %c0_270, %c0_271] : memref<12x1x32xf32, #tpu.memory_space<vmem>>, vector<1x1x32xf32>
    %599 = vector.shape_cast %598 : vector<1x1x32xf32> to vector<1x32xf32>
    %c7_272 = arith.constant 7 : index
    %c0_273 = arith.constant 0 : index
    %c0_274 = arith.constant 0 : index
    %600 = vector.load %arg11[%c7_272, %c0_273, %c0_274] : memref<12x1x32xf32, #tpu.memory_space<vmem>>, vector<1x1x32xf32>
    %601 = vector.shape_cast %600 : vector<1x1x32xf32> to vector<1x32xf32>
    %cst_275 = arith.constant dense<0.000000e+00> : vector<16xf32>
    %602 = vector.multi_reduction <add>, %597, %cst_275 [1] : vector<16x32xf32> to vector<16xf32>
    %603 = vector.shape_cast %602 : vector<16xf32> to vector<16x1xf32>
    %cst_276 = arith.constant 3.200000e+01 : f32
    %604 = vector.broadcast %cst_276 : f32 to vector<16x1xf32>
    %605 = arith.divf %603, %604 : vector<16x1xf32>
    %606 = vector.broadcast %605 : vector<16x1xf32> to vector<16x32xf32>
    %607 = arith.subf %597, %606 : vector<16x32xf32>
    %608 = arith.mulf %607, %607 : vector<16x32xf32>
    %cst_277 = arith.constant dense<0.000000e+00> : vector<16xf32>
    %609 = vector.multi_reduction <add>, %608, %cst_277 [1] : vector<16x32xf32> to vector<16xf32>
    %610 = vector.shape_cast %609 : vector<16xf32> to vector<16x1xf32>
    %cst_278 = arith.constant 3.200000e+01 : f32
    %611 = vector.broadcast %cst_278 : f32 to vector<16x1xf32>
    %612 = arith.divf %610, %611 : vector<16x1xf32>
    %cst_279 = arith.constant 9.99999974E-6 : f32
    %613 = vector.broadcast %cst_279 : f32 to vector<16x1xf32>
    %614 = arith.addf %612, %613 : vector<16x1xf32>
    %615 = math.rsqrt %614 : vector<16x1xf32>
    %616 = vector.broadcast %615 : vector<16x1xf32> to vector<16x32xf32>
    %617 = arith.mulf %607, %616 : vector<16x32xf32>
    %618 = vector.broadcast %599 : vector<1x32xf32> to vector<16x32xf32>
    %619 = arith.mulf %617, %618 : vector<16x32xf32>
    %620 = vector.broadcast %601 : vector<1x32xf32> to vector<16x32xf32>
    %621 = arith.addf %619, %620 : vector<16x32xf32>
    %c3_280 = arith.constant 3 : index
    %c0_281 = arith.constant 0 : index
    %c0_282 = arith.constant 0 : index
    %622 = vector.load %arg6[%c3_280, %c0_281, %c0_282] : memref<4x32x64xf32, #tpu.memory_space<vmem>>, vector<1x32x64xf32>
    %623 = vector.shape_cast %622 : vector<1x32x64xf32> to vector<32x64xf32>
    %c3_283 = arith.constant 3 : index
    %c0_284 = arith.constant 0 : index
    %c0_285 = arith.constant 0 : index
    %624 = vector.load %arg7[%c3_283, %c0_284, %c0_285] : memref<4x1x64xf32, #tpu.memory_space<vmem>>, vector<1x1x64xf32>
    %625 = vector.shape_cast %624 : vector<1x1x64xf32> to vector<1x64xf32>
    %c3_286 = arith.constant 3 : index
    %c0_287 = arith.constant 0 : index
    %c0_288 = arith.constant 0 : index
    %626 = vector.load %arg8[%c3_286, %c0_287, %c0_288] : memref<4x64x32xf32, #tpu.memory_space<vmem>>, vector<1x64x32xf32>
    %627 = vector.shape_cast %626 : vector<1x64x32xf32> to vector<64x32xf32>
    %c3_289 = arith.constant 3 : index
    %c0_290 = arith.constant 0 : index
    %c0_291 = arith.constant 0 : index
    %628 = vector.load %arg9[%c3_289, %c0_290, %c0_291] : memref<4x1x32xf32, #tpu.memory_space<vmem>>, vector<1x1x32xf32>
    %629 = vector.shape_cast %628 : vector<1x1x32xf32> to vector<1x32xf32>
    %cst_292 = arith.constant dense<0.000000e+00> : vector<16x64xf32>
    %630 = tpu.matmul %621, %623, %cst_292 {dimension_numbers = #tpu.dot_dimension_numbers<[1], [0], [0], [1], [0, 0, 1, 1], [], []>} : vector<16x32xf32>, vector<32x64xf32>, vector<16x64xf32> -> vector<16x64xf32>
    %631 = vector.broadcast %625 : vector<1x64xf32> to vector<16x64xf32>
    %632 = arith.addf %630, %631 : vector<16x64xf32>
    %cst_293 = arith.constant 0.000000e+00 : f32
    %633 = vector.broadcast %cst_293 : f32 to vector<16x64xf32>
    %634 = arith.maximumf %632, %633 : vector<16x64xf32>
    %cst_294 = arith.constant dense<0.000000e+00> : vector<16x32xf32>
    %635 = tpu.matmul %634, %627, %cst_294 {dimension_numbers = #tpu.dot_dimension_numbers<[1], [0], [0], [1], [0, 0, 1, 1], [], []>} : vector<16x64xf32>, vector<64x32xf32>, vector<16x32xf32> -> vector<16x32xf32>
    %636 = vector.broadcast %629 : vector<1x32xf32> to vector<16x32xf32>
    %637 = arith.addf %635, %636 : vector<16x32xf32>
    %638 = arith.addf %621, %637 : vector<16x32xf32>
    %c9 = arith.constant 9 : index
    %c0_295 = arith.constant 0 : index
    %c0_296 = arith.constant 0 : index
    %639 = vector.load %arg10[%c9, %c0_295, %c0_296] : memref<12x1x32xf32, #tpu.memory_space<vmem>>, vector<1x1x32xf32>
    %640 = vector.shape_cast %639 : vector<1x1x32xf32> to vector<1x32xf32>
    %c9_297 = arith.constant 9 : index
    %c0_298 = arith.constant 0 : index
    %c0_299 = arith.constant 0 : index
    %641 = vector.load %arg11[%c9_297, %c0_298, %c0_299] : memref<12x1x32xf32, #tpu.memory_space<vmem>>, vector<1x1x32xf32>
    %642 = vector.shape_cast %641 : vector<1x1x32xf32> to vector<1x32xf32>
    %cst_300 = arith.constant dense<0.000000e+00> : vector<16xf32>
    %643 = vector.multi_reduction <add>, %638, %cst_300 [1] : vector<16x32xf32> to vector<16xf32>
    %644 = vector.shape_cast %643 : vector<16xf32> to vector<16x1xf32>
    %cst_301 = arith.constant 3.200000e+01 : f32
    %645 = vector.broadcast %cst_301 : f32 to vector<16x1xf32>
    %646 = arith.divf %644, %645 : vector<16x1xf32>
    %647 = vector.broadcast %646 : vector<16x1xf32> to vector<16x32xf32>
    %648 = arith.subf %638, %647 : vector<16x32xf32>
    %649 = arith.mulf %648, %648 : vector<16x32xf32>
    %cst_302 = arith.constant dense<0.000000e+00> : vector<16xf32>
    %650 = vector.multi_reduction <add>, %649, %cst_302 [1] : vector<16x32xf32> to vector<16xf32>
    %651 = vector.shape_cast %650 : vector<16xf32> to vector<16x1xf32>
    %cst_303 = arith.constant 3.200000e+01 : f32
    %652 = vector.broadcast %cst_303 : f32 to vector<16x1xf32>
    %653 = arith.divf %651, %652 : vector<16x1xf32>
    %cst_304 = arith.constant 9.99999974E-6 : f32
    %654 = vector.broadcast %cst_304 : f32 to vector<16x1xf32>
    %655 = arith.addf %653, %654 : vector<16x1xf32>
    %656 = math.rsqrt %655 : vector<16x1xf32>
    %657 = vector.broadcast %656 : vector<16x1xf32> to vector<16x32xf32>
    %658 = arith.mulf %648, %657 : vector<16x32xf32>
    %659 = vector.broadcast %640 : vector<1x32xf32> to vector<16x32xf32>
    %660 = arith.mulf %658, %659 : vector<16x32xf32>
    %661 = vector.broadcast %642 : vector<1x32xf32> to vector<16x32xf32>
    %662 = arith.addf %660, %661 : vector<16x32xf32>
    %c11 = arith.constant 11 : index
    %c0_305 = arith.constant 0 : index
    %c0_306 = arith.constant 0 : index
    %663 = vector.load %arg10[%c11, %c0_305, %c0_306] : memref<12x1x32xf32, #tpu.memory_space<vmem>>, vector<1x1x32xf32>
    %664 = vector.shape_cast %663 : vector<1x1x32xf32> to vector<1x32xf32>
    %c11_307 = arith.constant 11 : index
    %c0_308 = arith.constant 0 : index
    %c0_309 = arith.constant 0 : index
    %665 = vector.load %arg11[%c11_307, %c0_308, %c0_309] : memref<12x1x32xf32, #tpu.memory_space<vmem>>, vector<1x1x32xf32>
    %666 = vector.shape_cast %665 : vector<1x1x32xf32> to vector<1x32xf32>
    %cst_310 = arith.constant dense<0.000000e+00> : vector<16xf32>
    %667 = vector.multi_reduction <add>, %662, %cst_310 [1] : vector<16x32xf32> to vector<16xf32>
    %668 = vector.shape_cast %667 : vector<16xf32> to vector<16x1xf32>
    %cst_311 = arith.constant 3.200000e+01 : f32
    %669 = vector.broadcast %cst_311 : f32 to vector<16x1xf32>
    %670 = arith.divf %668, %669 : vector<16x1xf32>
    %671 = vector.broadcast %670 : vector<16x1xf32> to vector<16x32xf32>
    %672 = arith.subf %662, %671 : vector<16x32xf32>
    %673 = arith.mulf %672, %672 : vector<16x32xf32>
    %cst_312 = arith.constant dense<0.000000e+00> : vector<16xf32>
    %674 = vector.multi_reduction <add>, %673, %cst_312 [1] : vector<16x32xf32> to vector<16xf32>
    %675 = vector.shape_cast %674 : vector<16xf32> to vector<16x1xf32>
    %cst_313 = arith.constant 3.200000e+01 : f32
    %676 = vector.broadcast %cst_313 : f32 to vector<16x1xf32>
    %677 = arith.divf %675, %676 : vector<16x1xf32>
    %cst_314 = arith.constant 9.99999974E-6 : f32
    %678 = vector.broadcast %cst_314 : f32 to vector<16x1xf32>
    %679 = arith.addf %677, %678 : vector<16x1xf32>
    %680 = math.rsqrt %679 : vector<16x1xf32>
    %681 = vector.broadcast %680 : vector<16x1xf32> to vector<16x32xf32>
    %682 = arith.mulf %672, %681 : vector<16x32xf32>
    %683 = vector.broadcast %664 : vector<1x32xf32> to vector<16x32xf32>
    %684 = arith.mulf %682, %683 : vector<16x32xf32>
    %685 = vector.broadcast %666 : vector<1x32xf32> to vector<16x32xf32>
    %686 = arith.addf %684, %685 : vector<16x32xf32>
    %c0_315 = arith.constant 0 : index
    %c0_316 = arith.constant 0 : index
    %687 = vector.load %arg12[%c0_315, %c0_316] : memref<32x128xf32, #tpu.memory_space<vmem>>, vector<32x128xf32>
    %cst_317 = arith.constant dense<0.000000e+00> : vector<16x128xf32>
    %688 = tpu.matmul %686, %687, %cst_317 {dimension_numbers = #tpu.dot_dimension_numbers<[1], [0], [0], [1], [0, 0, 1, 1], [], []>} : vector<16x32xf32>, vector<32x128xf32>, vector<16x128xf32> -> vector<16x128xf32>
    %c0_318 = arith.constant 0 : index
    %c0_319 = arith.constant 0 : index
    %689 = vector.load %arg13[%c0_318, %c0_319] : memref<1x128xf32, #tpu.memory_space<vmem>>, vector<1x128xf32>
    %690 = vector.broadcast %689 : vector<1x128xf32> to vector<16x128xf32>
    %691 = arith.addf %688, %690 : vector<16x128xf32>
    %c0_320 = arith.constant 0 : index
    %c0_321 = arith.constant 0 : index
    %692 = vector.load %arg14[%c0_320, %c0_321] : memref<16x128xf32, #tpu.memory_space<vmem>>, vector<16x128xf32>
    tpu.vector_store %arg14[%c0_320, %c0_321], %691 {strides = array<i32>} : memref<16x128xf32, #tpu.memory_space<vmem>>, vector<16x128xf32>,
    return
  }
  func.func @transform_0(%arg0: i32) -> (i32, i32) {
    %c0_i32 = arith.constant 0 : i32
    %c0_i32_0 = arith.constant 0 : i32
    %c0_i32_1 = arith.constant 0 : i32
    return %c0_i32, %c0_i32_0 : i32, i32
  }
  func.func @transform_1(%arg0: i32) -> (i32, i32, i32) {
    %c0_i32 = arith.constant 0 : i32
    %c0_i32_0 = arith.constant 0 : i32
    %c0_i32_1 = arith.constant 0 : i32
    %c0_i32_2 = arith.constant 0 : i32
    return %c0_i32, %c0_i32_0, %c0_i32_1 : i32, i32, i32
  }
  func.func @transform_2(%arg0: i32) -> (i32, i32, i32) {
    %c0_i32 = arith.constant 0 : i32
    %c0_i32_0 = arith.constant 0 : i32
    %c0_i32_1 = arith.constant 0 : i32
    %c0_i32_2 = arith.constant 0 : i32
    return %c0_i32, %c0_i32_0, %c0_i32_1 : i32, i32, i32
  }
  func.func @transform_3(%arg0: i32) -> (i32, i32, i32) {
    %c0_i32 = arith.constant 0 : i32
    %c0_i32_0 = arith.constant 0 : i32
    %c0_i32_1 = arith.constant 0 : i32
    %c0_i32_2 = arith.constant 0 : i32
    return %c0_i32, %c0_i32_0, %c0_i32_1 : i32, i32, i32
  }
  func.func @transform_4(%arg0: i32) -> (i32, i32, i32) {
    %c0_i32 = arith.constant 0 : i32
    %c0_i32_0 = arith.constant 0 : i32
    %c0_i32_1 = arith.constant 0 : i32
    %c0_i32_2 = arith.constant 0 : i32
    return %c0_i32, %c0_i32_0, %c0_i32_1 : i32, i32, i32
  }
  func.func @transform_5(%arg0: i32) -> (i32, i32, i32) {
    %c0_i32 = arith.constant 0 : i32
    %c0_i32_0 = arith.constant 0 : i32
    %c0_i32_1 = arith.constant 0 : i32
    %c0_i32_2 = arith.constant 0 : i32
    return %c0_i32, %c0_i32_0, %c0_i32_1 : i32, i32, i32
  }
  func.func @transform_6(%arg0: i32) -> (i32, i32, i32) {
    %c0_i32 = arith.constant 0 : i32
    %c0_i32_0 = arith.constant 0 : i32
    %c0_i32_1 = arith.constant 0 : i32
    %c0_i32_2 = arith.constant 0 : i32
    return %c0_i32, %c0_i32_0, %c0_i32_1 : i32, i32, i32
  }
  func.func @transform_7(%arg0: i32) -> (i32, i32, i32) {
    %c0_i32 = arith.constant 0 : i32
    %c0_i32_0 = arith.constant 0 : i32
    %c0_i32_1 = arith.constant 0 : i32
    %c0_i32_2 = arith.constant 0 : i32
    return %c0_i32, %c0_i32_0, %c0_i32_1 : i32, i32, i32
  }
  func.func @transform_8(%arg0: i32) -> (i32, i32, i32) {
    %c0_i32 = arith.constant 0 : i32
    %c0_i32_0 = arith.constant 0 : i32
    %c0_i32_1 = arith.constant 0 : i32
    %c0_i32_2 = arith.constant 0 : i32
    return %c0_i32, %c0_i32_0, %c0_i32_1 : i32, i32, i32
  }
  func.func @transform_9(%arg0: i32) -> (i32, i32, i32) {
    %c0_i32 = arith.constant 0 : i32
    %c0_i32_0 = arith.constant 0 : i32
    %c0_i32_1 = arith.constant 0 : i32
    %c0_i32_2 = arith.constant 0 : i32
    return %c0_i32, %c0_i32_0, %c0_i32_1 : i32, i32, i32
  }
  func.func @transform_10(%arg0: i32) -> (i32, i32, i32) {
    %c0_i32 = arith.constant 0 : i32
    %c0_i32_0 = arith.constant 0 : i32
    %c0_i32_1 = arith.constant 0 : i32
    %c0_i32_2 = arith.constant 0 : i32
    return %c0_i32, %c0_i32_0, %c0_i32_1 : i32, i32, i32
  }
  func.func @transform_11(%arg0: i32) -> (i32, i32) {
    %c0_i32 = arith.constant 0 : i32
    %c0_i32_0 = arith.constant 0 : i32
    %c0_i32_1 = arith.constant 0 : i32
    return %c0_i32, %c0_i32_0 : i32, i32
  }
  func.func @transform_12(%arg0: i32) -> (i32, i32) {
    %c0_i32 = arith.constant 0 : i32
    %c0_i32_0 = arith.constant 0 : i32
    %c0_i32_1 = arith.constant 0 : i32
    return %c0_i32, %c0_i32_0 : i32, i32
  }
  func.func @transform_13(%arg0: i32) -> (i32, i32) {
    %c0_i32 = arith.constant 0 : i32
    %c0_i32_0 = arith.constant 0 : i32
    %c0_i32_1 = arith.constant 0 : i32
    return %c0_i32, %c0_i32_0 : i32, i32
  }
}

</mosaic_0001>

<llo_original>
// kernel: transformer_forward.1
$region0: #{transformer_forward.1}
  #allocation0 [shape = 'u32[]', space=smem, size = 0x4, offset = 0x4, fixed_abs, tag = 'smem constant byte address 0x4 - core index']
  #allocation1 [shape = 'u32[72,128]{1,0:T(1,128)}', space=vmem, size = 0x9000, scoped, tag = 'internal scratch']
  %s0 = inlined_call_operand.vmem [shape: f32[16,32], index: 0, kind: input, shape index: {}]
  %s1 = inlined_call_operand.vmem [shape: f32[6,32,96], index: 1, kind: input, shape index: {}]
  %s2 = inlined_call_operand.hbm [shape: f32[6,1,96], index: 2, kind: input, shape index: {}]
  %s3 = inlined_call_operand.vmem [shape: f32[6,32,32], index: 3, kind: input, shape index: {}]
  %s4 = inlined_call_operand.hbm [shape: f32[6,1,32], index: 4, kind: input, shape index: {}]
  %s5 = inlined_call_operand.hbm [shape: f32[4,32,64], index: 5, kind: input, shape index: {}]
  %s6 = inlined_call_operand.hbm [shape: f32[4,1,64], index: 6, kind: input, shape index: {}]
  %s7 = inlined_call_operand.vmem [shape: f32[4,64,32], index: 7, kind: input, shape index: {}]
  %s8 = inlined_call_operand.hbm [shape: f32[4,1,32], index: 8, kind: input, shape index: {}]
  %s9 = inlined_call_operand.hbm [shape: f32[12,1,32], index: 9, kind: input, shape index: {}]
  %s10 = inlined_call_operand.hbm [shape: f32[12,1,32], index: 10, kind: input, shape index: {}]
  %s11 = inlined_call_operand.vmem [shape: f32[32,128], index: 11, kind: input, shape index: {}]
  %s12 = inlined_call_operand.vmem [shape: f32[1,128], index: 12, kind: input, shape index: {}]
  %s13 = inlined_call_operand.vmem [shape: f32[16,128], index: 13, kind: output, shape index: {}]
  %s14 = sld [smem:[#allocation0]]
  $region90: #{transformer_forward.1} parent=0
    _
  %s16 = ssub.s32 1, %s14
  %s17 = scalar_select 0, %s16, %s14
  $region1: #{transformer_forward.1} parent=0
    #allocation2 [shape = 'u8[3072]{0}', space=vmem, size = 0xc00, scoped, tag = 'input window, operand 2, single buffered']
    #allocation3 [shape = 's32[1]{0}', space=sflag, size = 0x4, scoped, tag = 'scoped memory for transformer_forward.1']
    #allocation4 [shape = 'u8[3072]{0}', space=vmem, size = 0xc00, scoped, tag = 'input window, operand 4, single buffered']
    #allocation5 [shape = 's32[1]{0}', space=sflag, size = 0x4, scoped, tag = 'scoped memory for transformer_forward.1']
    #allocation6 [shape = 'u8[65536]{0}', space=vmem, size = 0x10000, scoped, tag = 'input window, operand 5, single buffered']
    #allocation7 [shape = 'u8[2048]{0}', space=vmem, size = 0x800, scoped, tag = 'input window, operand 6, single buffered']
    #allocation8 [shape = 's32[1]{0}', space=sflag, size = 0x4, scoped, tag = 'scoped memory for transformer_forward.1']
    #allocation9 [shape = 'u8[2048]{0}', space=vmem, size = 0x800, scoped, tag = 'input window, operand 8, single buffered']
    #allocation10 [shape = 'u8[6144]{0}', space=vmem, size = 0x1800, scoped, tag = 'input window, operand 9, single buffered']
    #allocation11 [shape = 's32[1]{0}', space=sflag, size = 0x4, scoped, tag = 'scoped memory for transformer_forward.1']
    #allocation12 [shape = 'u8[6144]{0}', space=vmem, size = 0x1800, scoped, tag = 'input window, operand 10, single buffered']
    %18 = vsyncpa [#allocation3], 0
    %19 = vsyncpa [#allocation5], 0
    %20 = vsyncpa [#allocation8], 0
    %21 = vsyncpa [#allocation11], 0
    // Predicated region
    $region2: #{transformer_forward.1} parent=1 // pred_check
      _
    $region3: #{transformer_forward.1} parent=1 // pred_check_branch
      %23 = sbr.rel (0) target = $region5
    $region4: #{transformer_forward.1} parent=1 // pred_region
      _
    $region5: #{transformer_forward.1} parent=1 // pred_fallthru
      _
    // Predicated region
    $region6: #{transformer_forward.1} parent=1 // pred_check
      _
    $region7: #{transformer_forward.1} parent=1 // pred_check_branch
      %25 = sbr.rel (0) target = $region9
    $region8: #{transformer_forward.1} parent=1 // pred_region
      _
    $region9: #{transformer_forward.1} parent=1 // pred_fallthru
      _
    // Predicated region
    $region10: #{transformer_forward.1} parent=1 // pred_check
      _
    $region11: #{transformer_forward.1} parent=1 // pred_check_branch
      %27 = sbr.rel (0) target = $region13
    $region12: #{transformer_forward.1} parent=1 // pred_region
      %29 = vsyncadd [#allocation3], 0
      %s30 = sshll.u32 %s2, 4
      %s31 = int_to_ptr.hbm [resolvable:$true] %s30
      %s32 = sshll.u32 [#allocation2], 4
      %s33 = int_to_ptr.vmem [resolvable:$true] %s32
      %38 = dma.hbm_to_vmem [thread:$0]  %s31, 96, %s33, [#allocation3], 16, 16, 1
    $region13: #{transformer_forward.1} parent=1 // pred_fallthru
      _
    // Predicated region
    $region14: #{transformer_forward.1} parent=1 // pred_check
      _
    $region15: #{transformer_forward.1} parent=1 // pred_check_branch
      %40 = sbr.rel (0) target = $region17
    $region16: #{transformer_forward.1} parent=1 // pred_region
      _
    $region17: #{transformer_forward.1} parent=1 // pred_fallthru
      _
    // Predicated region
    $region18: #{transformer_forward.1} parent=1 // pred_check
      _
    $region19: #{transformer_forward.1} parent=1 // pred_check_branch
      %42 = sbr.rel (0) target = $region21
    $region20: #{transformer_forward.1} parent=1 // pred_region
      %44 = vsyncadd [#allocation5], 0
      %s45 = sshll.u32 %s4, 4
      %s46 = int_to_ptr.hbm [resolvable:$true] %s45
      %s47 = sshll.u32 [#allocation4], 4
      %s48 = int_to_ptr.vmem [resolvable:$true] %s47
      %53 = dma.hbm_to_vmem [thread:$0]  %s46, 96, %s48, [#allocation5], 16, 16, 1
    $region21: #{transformer_forward.1} parent=1 // pred_fallthru
      _
    // Predicated region
    $region22: #{transformer_forward.1} parent=1 // pred_check
      _
    $region23: #{transformer_forward.1} parent=1 // pred_check_branch
      %55 = sbr.rel (0) target = $region25
    $region24: #{transformer_forward.1} parent=1 // pred_region
      %57 = vsyncadd [#allocation5], 0
      %s58 = sshll.u32 %s5, 4
      %s59 = int_to_ptr.hbm [resolvable:$true] %s58
      %s60 = sshll.u32 [#allocation6], 4
      %s61 = int_to_ptr.vmem [resolvable:$true] %s60
      %66 = dma.hbm_to_vmem [thread:$0]  %s59, 2048, %s61, [#allocation5], 128, 128, 8
    $region25: #{transformer_forward.1} parent=1 // pred_fallthru
      _
    // Predicated region
    $region26: #{transformer_forward.1} parent=1 // pred_check
      _
    $region27: #{transformer_forward.1} parent=1 // pred_check_branch
      %68 = sbr.rel (0) target = $region29
    $region28: #{transformer_forward.1} parent=1 // pred_region
      %70 = vsyncadd [#allocation8], 0
      %s71 = sshll.u32 %s6, 4
      %s72 = int_to_ptr.hbm [resolvable:$true] %s71
      %s73 = sshll.u32 [#allocation7], 4
      %s74 = int_to_ptr.vmem [resolvable:$true] %s73
      %79 = dma.hbm_to_vmem [thread:$0]  %s72, 64, %s74, [#allocation8], 16, 16, 1
    $region29: #{transformer_forward.1} parent=1 // pred_fallthru
      _
    // Predicated region
    $region30: #{transformer_forward.1} parent=1 // pred_check
      _
    $region31: #{transformer_forward.1} parent=1 // pred_check_branch
      %81 = sbr.rel (0) target = $region33
    $region32: #{transformer_forward.1} parent=1 // pred_region
      _
    $region33: #{transformer_forward.1} parent=1 // pred_fallthru
      _
    // Predicated region
    $region34: #{transformer_forward.1} parent=1 // pred_check
      _
    $region35: #{transformer_forward.1} parent=1 // pred_check_branch
      %83 = sbr.rel (0) target = $region37
    $region36: #{transformer_forward.1} parent=1 // pred_region
      %85 = vsyncadd [#allocation8], 0
      %s86 = sshll.u32 %s8, 4
      %s87 = int_to_ptr.hbm [resolvable:$true] %s86
      %s88 = sshll.u32 [#allocation9], 4
      %s89 = int_to_ptr.vmem [resolvable:$true] %s88
      %94 = dma.hbm_to_vmem [thread:$0]  %s87, 64, %s89, [#allocation8], 16, 16, 1
    $region37: #{transformer_forward.1} parent=1 // pred_fallthru
      _
    // Predicated region
    $region38: #{transformer_forward.1} parent=1 // pred_check
      _
    $region39: #{transformer_forward.1} parent=1 // pred_check_branch
      %96 = sbr.rel (0) target = $region41
    $region40: #{transformer_forward.1} parent=1 // pred_region
      %98 = vsyncadd [#allocation11], 0
      %s99 = sshll.u32 %s9, 4
      %s100 = int_to_ptr.hbm [resolvable:$true] %s99
      %s101 = sshll.u32 [#allocation10], 4
      %s102 = int_to_ptr.vmem [resolvable:$true] %s101
      %107 = dma.hbm_to_vmem [thread:$0]  %s100, 192, %s102, [#allocation11], 16, 16, 1
    $region41: #{transformer_forward.1} parent=1 // pred_fallthru
      _
    // Predicated region
    $region42: #{transformer_forward.1} parent=1 // pred_check
      _
    $region43: #{transformer_forward.1} parent=1 // pred_check_branch
      %109 = sbr.rel (0) target = $region45
    $region44: #{transformer_forward.1} parent=1 // pred_region
      %111 = vsyncadd [#allocation11], 0
      %s112 = sshll.u32 %s10, 4
      %s113 = int_to_ptr.hbm [resolvable:$true] %s112
      %s114 = sshll.u32 [#allocation12], 4
      %s115 = int_to_ptr.vmem [resolvable:$true] %s114
      %120 = dma.hbm_to_vmem [thread:$0]  %s113, 192, %s115, [#allocation11], 16, 16, 1
    $region45: #{transformer_forward.1} parent=1 // pred_fallthru
      _
    // Predicated region
    $region46: #{transformer_forward.1} parent=1 // pred_check
      _
    $region47: #{transformer_forward.1} parent=1 // pred_check_branch
      %122 = sbr.rel (0) target = $region49
    $region48: #{transformer_forward.1} parent=1 // pred_region
      _
    $region49: #{transformer_forward.1} parent=1 // pred_fallthru
      _
    // Predicated region
    $region50: #{transformer_forward.1} parent=1 // pred_check
      _
    $region51: #{transformer_forward.1} parent=1 // pred_check_branch
      %124 = sbr.rel (0) target = $region53
    $region52: #{transformer_forward.1} parent=1 // pred_region
      _
    $region53: #{transformer_forward.1} parent=1 // pred_fallthru
      _
    // Predicated region
    $region54: #{transformer_forward.1} parent=1 // pred_check
      _
    $region55: #{transformer_forward.1} parent=1 // pred_check_branch
      %126 = sbr.rel (0) target = $region57
    $region56: #{transformer_forward.1} parent=1 // pred_region
      %128 = dma.done [#allocation3], 96
    $region57: #{transformer_forward.1} parent=1 // pred_fallthru
      _
    // Predicated region
    $region58: #{transformer_forward.1} parent=1 // pred_check
      _
    $region59: #{transformer_forward.1} parent=1 // pred_check_branch
      %130 = sbr.rel (0) target = $region61
    $region60: #{transformer_forward.1} parent=1 // pred_region
      %132 = dma.done [#allocation5], 96
    $region61: #{transformer_forward.1} parent=1 // pred_fallthru
      _
    // Predicated region
    $region62: #{transformer_forward.1} parent=1 // pred_check
      _
    $region63: #{transformer_forward.1} parent=1 // pred_check_branch
      %134 = sbr.rel (0) target = $region65
    $region64: #{transformer_forward.1} parent=1 // pred_region
      %136 = dma.done [#allocation5], 2048
    $region65: #{transformer_forward.1} parent=1 // pred_fallthru
      _
    // Predicated region
    $region66: #{transformer_forward.1} parent=1 // pred_check
      _
    $region67: #{transformer_forward.1} parent=1 // pred_check_branch
      %138 = sbr.rel (0) target = $region69
    $region68: #{transformer_forward.1} parent=1 // pred_region
      %140 = dma.done [#allocation8], 64
    $region69: #{transformer_forward.1} parent=1 // pred_fallthru
      _
    // Predicated region
    $region70: #{transformer_forward.1} parent=1 // pred_check
      _
    $region71: #{transformer_forward.1} parent=1 // pred_check_branch
      %142 = sbr.rel (0) target = $region73
    $region72: #{transformer_forward.1} parent=1 // pred_region
      %144 = dma.done [#allocation8], 64
    $region73: #{transformer_forward.1} parent=1 // pred_fallthru
      _
    // Predicated region
    $region74: #{transformer_forward.1} parent=1 // pred_check
      _
    $region75: #{transformer_forward.1} parent=1 // pred_check_branch
      %146 = sbr.rel (0) target = $region77
    $region76: #{transformer_forward.1} parent=1 // pred_region
      %148 = dma.done [#allocation11], 192
    $region77: #{transformer_forward.1} parent=1 // pred_fallthru
      _
    // Predicated region
    $region78: #{transformer_forward.1} parent=1 // pred_check
      _
    $region79: #{transformer_forward.1} parent=1 // pred_check_branch
      %150 = sbr.rel (0) target = $region81
    $region80: #{transformer_forward.1} parent=1 // pred_region
      %152 = dma.done [#allocation11], 192
    $region81: #{transformer_forward.1} parent=1 // pred_fallthru
      _
    %v153 = vld [vmem:[%s0] sm:$0xff]
    %v154 = vld [vmem:[%s0 + $0x8] sm:$0xff]
    %v155 = vld [vmem:[%s1] sm:$0xff]
    %v156 = vld [vmem:[%s1 + $0x8] sm:$0xff]
    %v157 = vld [vmem:[%s1 + $0x10] sm:$0xff]
    %v158 = vld [vmem:[%s1 + $0x18] sm:$0xff]
    %v159 = vld [vmem:[#allocation2] sm:$0x1]
    %v160 = vld [vmem:[%s3] sm:$0xff]
    %v161 = vld [vmem:[%s3 + $0x8] sm:$0xff]
    %v162 = vld [vmem:[%s3 + $0x10] sm:$0xff]
    %v163 = vld [vmem:[%s3 + $0x18] sm:$0xff]
    %v164 = vld [vmem:[#allocation4] sm:$0x1]
    %v166 = vperm.slane %v159, 0
    %vm168 = vcmask 261120
    %v170 = vsel %vm168, %v153, 0
    %v173 = vsel %vm168, %v154, 0
    %175 = vmatpush.msra.mxu0 0.0
    %176 = vmatpush.msra.mxu0 0.0
    %177 = vmatpush.msra.mxu0 0.0
    %178 = vmatpush.msra.mxu0 0.0
    %179 = vmatpush.msra.mxu0 0.0
    %180 = vmatpush.msra.mxu0 0.0
    %181 = vmatpush.msra.mxu0 0.0
    %182 = vmatpush.msra.mxu0 0.0
    %183 = vmatpush.msra.mxu0 0.0
    %184 = vmatpush.msra.mxu0 0.0
    %185 = vmatpush.msra.mxu0 0.0
    %186 = vmatpush.msra.mxu0 0.0
    %187 = vmatpush.msra.mxu0 %v158
    %188 = vmatpush.msra.mxu0 %v157
    %189 = vmatpush.msra.mxu0 %v156
    %190 = vmatpush.msra.mxu0 %v155
    %191 = vmatmul.f32.gmra.mxu0 %v170
    %v192 = vpop.f32.mrf.mxu0
    %v193 = vadd.f32 %v166, %v192
    %194 = vmatmul.f32.gmra.mxu0 %v173
    %v195 = vpop.f32.mrf.mxu0
    %v196 = vadd.f32 %v166, %v195
    %197 = vdwg.mxu0
    %199 = vrot.lane.b32.xlu0 %v193, 96
    %v200 = vpop.permute.xlu0 %199
    %vm201 = vcmask 130048
    %v202 = vsel %vm201, %v193, 0
    %v204 = vsel %vm201, %v200, 0
    %206 = vmatpush.xpose.msra.mxu0 0.0
    %207 = vmatpush.xpose.msra.mxu0 0.0
    %208 = vmatpush.xpose.msra.mxu0 0.0
    %209 = vmatpush.xpose.msra.mxu0 0.0
    %210 = vmatpush.xpose.msra.mxu0 0.0
    %211 = vmatpush.xpose.msra.mxu0 0.0
    %212 = vmatpush.xpose.msra.mxu0 0.0
    %213 = vmatpush.xpose.msra.mxu0 0.0
    %214 = vmatpush.xpose.msra.mxu0 0.0
    %215 = vmatpush.xpose.msra.mxu0 0.0
    %216 = vmatpush.xpose.msra.mxu0 0.0
    %217 = vmatpush.xpose.msra.mxu0 0.0
    %218 = vmatpush.xpose.msra.mxu0 0.0
    %219 = vmatpush.xpose.msra.mxu0 0.0
    %220 = vmatpush.xpose.msra.mxu0 0.0
    %221 = vmatpush.xpose.msra.mxu0 %v204
    %222 = vmatmul.f32.gmra.mxu0 %v202
    %v223 = vpop.f32.mrf.mxu0
    %v224 = vadd.f32 0.0, %v223
    %225 = vdwg.mxu0
    %227 = vrot.lane.b32.xlu0 %v196, 96
    %v228 = vpop.permute.xlu0 %227
    %v229 = vsel %vm201, %v196, 0
    %v231 = vsel %vm201, %v228, 0
    %233 = vmatpush.xpose.msra.mxu0 0.0
    %234 = vmatpush.xpose.msra.mxu0 0.0
    %235 = vmatpush.xpose.msra.mxu0 0.0
    %236 = vmatpush.xpose.msra.mxu0 0.0
    %237 = vmatpush.xpose.msra.mxu0 0.0
    %238 = vmatpush.xpose.msra.mxu0 0.0
    %239 = vmatpush.xpose.msra.mxu0 0.0
    %240 = vmatpush.xpose.msra.mxu0 0.0
    %241 = vmatpush.xpose.msra.mxu0 0.0
    %242 = vmatpush.xpose.msra.mxu0 0.0
    %243 = vmatpush.xpose.msra.mxu0 0.0
    %244 = vmatpush.xpose.msra.mxu0 0.0
    %245 = vmatpush.xpose.msra.mxu0 0.0
    %246 = vmatpush.xpose.msra.mxu0 0.0
    %247 = vmatpush.xpose.msra.mxu0 0.0
    %248 = vmatpush.xpose.msra.mxu0 %v231
    %249 = vmatmul.f32.gmra.mxu0 %v229
    %v250 = vpop.f32.mrf.mxu0
    %v251 = vadd.f32 0.0, %v250
    %252 = vdwg.mxu0
    %vm253 = vcmask 64512
    %v254 = vsel %vm253, %v224, -inf
    %255 = vmax.xlane.f32.xlu0 %v254
    %v256 = vpop.xlane.xlu0 %255
    %v257 = vsel %vm253, %v251, -inf
    %258 = vmax.xlane.f32.xlu0 %v257
    %v259 = vpop.xlane.xlu0 %258
    %v260 = vsub.f32 %v224, %v256
    %v261 = vsub.f32 %v251, %v259
    %v262 = vmul.f32 %v260, 1.442695
    %v263 = vpow.pop %v262
    %v264 = vmul.f32 %v261, 1.442695
    %v265 = vpow.pop %v264
    %v266 = vsel %vm253, %v263, 0.0
    %267 = vadd.xlane.f32.xlu0 %v266
    %v268 = vpop.xlane.xlu0 %267
    %v269 = vsel %vm253, %v265, 0.0
    %270 = vadd.xlane.f32.xlu0 %v269
    %v271 = vpop.xlane.xlu0 %270
    %v272 = vrcp.pop %v268
    %v273 = vrcp.pop %v271
    %v274 = vmul.f32 %v263, %v272
    %v275 = vmul.f32 %v265, %v273
    %276 = vrot.lane.b32.xlu0 %v193, 64
    %v277 = vpop.permute.xlu0 %276
    %v280 = vsel %vm253, %v274, 0
    %282 = vmatpush.msra.mxu0 0.0
    %283 = vmatpush.msra.mxu0 0.0
    %284 = vmatpush.msra.mxu0 0.0
    %285 = vmatpush.msra.mxu0 0.0
    %286 = vmatpush.msra.mxu0 0.0
    %287 = vmatpush.msra.mxu0 0.0
    %288 = vmatpush.msra.mxu0 0.0
    %289 = vmatpush.msra.mxu0 0.0
    %290 = vmatpush.msra.mxu0 0.0
    %291 = vmatpush.msra.mxu0 0.0
    %292 = vmatpush.msra.mxu0 0.0
    %293 = vmatpush.msra.mxu0 0.0
    %294 = vmatpush.msra.mxu0 0.0
    %295 = vmatpush.msra.mxu0 0.0
    %296 = vmatpush.msra.mxu0 0.0
    %297 = vmatpush.msra.mxu0 %v277
    %298 = vmatmul.f32.gmra.mxu0 %v280
    %v299 = vpop.f32.mrf.mxu0
    %v300 = vadd.f32 0.0, %v299
    %301 = vdwg.mxu0
    %302 = vrot.lane.b32.xlu0 %v196, 64
    %v303 = vpop.permute.xlu0 %302
    %v306 = vsel %vm253, %v275, 0
    %308 = vmatpush.msra.mxu0 0.0
    %309 = vmatpush.msra.mxu0 0.0
    %310 = vmatpush.msra.mxu0 0.0
    %311 = vmatpush.msra.mxu0 0.0
    %312 = vmatpush.msra.mxu0 0.0
    %313 = vmatpush.msra.mxu0 0.0
    %314 = vmatpush.msra.mxu0 0.0
    %315 = vmatpush.msra.mxu0 0.0
    %316 = vmatpush.msra.mxu0 0.0
    %317 = vmatpush.msra.mxu0 0.0
    %318 = vmatpush.msra.mxu0 0.0
    %319 = vmatpush.msra.mxu0 0.0
    %320 = vmatpush.msra.mxu0 0.0
    %321 = vmatpush.msra.mxu0 0.0
    %322 = vmatpush.msra.mxu0 0.0
    %323 = vmatpush.msra.mxu0 %v303
    %324 = vmatmul.f32.gmra.mxu0 %v306
    %v325 = vpop.f32.mrf.mxu0
    %v326 = vadd.f32 0.0, %v325
    %327 = vdwg.mxu0
    %328 = vrot.lane.b32.xlu0 %v193, 112
    %v329 = vpop.permute.xlu0 %328
    %330 = vrot.lane.b32.xlu0 %v193, 80
    %v331 = vpop.permute.xlu0 %330
    %v332 = vsel %vm201, %v329, 0
    %v334 = vsel %vm201, %v331, 0
    %336 = vmatpush.xpose.msra.mxu0 0.0
    %337 = vmatpush.xpose.msra.mxu0 0.0
    %338 = vmatpush.xpose.msra.mxu0 0.0
    %339 = vmatpush.xpose.msra.mxu0 0.0
    %340 = vmatpush.xpose.msra.mxu0 0.0
    %341 = vmatpush.xpose.msra.mxu0 0.0
    %342 = vmatpush.xpose.msra.mxu0 0.0
    %343 = vmatpush.xpose.msra.mxu0 0.0
    %344 = vmatpush.xpose.msra.mxu0 0.0
    %345 = vmatpush.xpose.msra.mxu0 0.0
    %346 = vmatpush.xpose.msra.mxu0 0.0
    %347 = vmatpush.xpose.msra.mxu0 0.0
    %348 = vmatpush.xpose.msra.mxu0 0.0
    %349 = vmatpush.xpose.msra.mxu0 0.0
    %350 = vmatpush.xpose.msra.mxu0 0.0
    %351 = vmatpush.xpose.msra.mxu0 %v334
    %352 = vmatmul.f32.gmra.mxu0 %v332
    %v353 = vpop.f32.mrf.mxu0
    %v354 = vadd.f32 0.0, %v353
    %355 = vdwg.mxu0
    %356 = vrot.lane.b32.xlu0 %v196, 112
    %v357 = vpop.permute.xlu0 %356
    %358 = vrot.lane.b32.xlu0 %v196, 80
    %v359 = vpop.permute.xlu0 %358
    %v360 = vsel %vm201, %v357, 0
    %v362 = vsel %vm201, %v359, 0
    %364 = vmatpush.xpose.msra.mxu0 0.0
    %365 = vmatpush.xpose.msra.mxu0 0.0
    %366 = vmatpush.xpose.msra.mxu0 0.0
    %367 = vmatpush.xpose.msra.mxu0 0.0
    %368 = vmatpush.xpose.msra.mxu0 0.0
    %369 = vmatpush.xpose.msra.mxu0 0.0
    %370 = vmatpush.xpose.msra.mxu0 0.0
    %371 = vmatpush.xpose.msra.mxu0 0.0
    %372 = vmatpush.xpose.msra.mxu0 0.0
    %373 = vmatpush.xpose.msra.mxu0 0.0
    %374 = vmatpush.xpose.msra.mxu0 0.0
    %375 = vmatpush.xpose.msra.mxu0 0.0
    %376 = vmatpush.xpose.msra.mxu0 0.0
    %377 = vmatpush.xpose.msra.mxu0 0.0
    %378 = vmatpush.xpose.msra.mxu0 0.0
    %379 = vmatpush.xpose.msra.mxu0 %v362
    %380 = vmatmul.f32.gmra.mxu0 %v360
    %v381 = vpop.f32.mrf.mxu0
    %v382 = vadd.f32 0.0, %v381
    %383 = vdwg.mxu0
    %v384 = vsel %vm253, %v354, -inf
    %385 = vmax.xlane.f32.xlu0 %v384
    %v386 = vpop.xlane.xlu0 %385
    %v387 = vsel %vm253, %v382, -inf
    %388 = vmax.xlane.f32.xlu0 %v387
    %v389 = vpop.xlane.xlu0 %388
    %v390 = vsub.f32 %v354, %v386
    %v391 = vsub.f32 %v382, %v389
    %v392 = vmul.f32 %v390, 1.442695
    %v393 = vpow.pop %v392
    %v394 = vmul.f32 %v391, 1.442695
    %v395 = vpow.pop %v394
    %v396 = vsel %vm253, %v393, 0.0
    %397 = vadd.xlane.f32.xlu0 %v396
    %v398 = vpop.xlane.xlu0 %397
    %v399 = vsel %vm253, %v395, 0.0
    %400 = vadd.xlane.f32.xlu0 %v399
    %v401 = vpop.xlane.xlu0 %400
    %v402 = vrcp.pop %v398
    %v403 = vrcp.pop %v401
    %v404 = vmul.f32 %v393, %v402
    %v405 = vmul.f32 %v395, %v403
    %406 = vrot.lane.b32.xlu0 %v193, 48
    %v407 = vpop.permute.xlu0 %406
    %v410 = vsel %vm253, %v404, 0
    %412 = vmatpush.msra.mxu0 0.0
    %413 = vmatpush.msra.mxu0 0.0
    %414 = vmatpush.msra.mxu0 0.0
    %415 = vmatpush.msra.mxu0 0.0
    %416 = vmatpush.msra.mxu0 0.0
    %417 = vmatpush.msra.mxu0 0.0
    %418 = vmatpush.msra.mxu0 0.0
    %419 = vmatpush.msra.mxu0 0.0
    %420 = vmatpush.msra.mxu0 0.0
    %421 = vmatpush.msra.mxu0 0.0
    %422 = vmatpush.msra.mxu0 0.0
    %423 = vmatpush.msra.mxu0 0.0
    %424 = vmatpush.msra.mxu0 0.0
    %425 = vmatpush.msra.mxu0 0.0
    %426 = vmatpush.msra.mxu0 0.0
    %427 = vmatpush.msra.mxu0 %v407
    %428 = vmatmul.f32.gmra.mxu0 %v410
    %v429 = vpop.f32.mrf.mxu0
    %v430 = vadd.f32 0.0, %v429
    %431 = vdwg.mxu0
    %432 = vrot.lane.b32.xlu0 %v196, 48
    %v433 = vpop.permute.xlu0 %432
    %v436 = vsel %vm253, %v405, 0
    %438 = vmatpush.msra.mxu0 0.0
    %439 = vmatpush.msra.mxu0 0.0
    %440 = vmatpush.msra.mxu0 0.0
    %441 = vmatpush.msra.mxu0 0.0
    %442 = vmatpush.msra.mxu0 0.0
    %443 = vmatpush.msra.mxu0 0.0
    %444 = vmatpush.msra.mxu0 0.0
    %445 = vmatpush.msra.mxu0 0.0
    %446 = vmatpush.msra.mxu0 0.0
    %447 = vmatpush.msra.mxu0 0.0
    %448 = vmatpush.msra.mxu0 0.0
    %449 = vmatpush.msra.mxu0 0.0
    %450 = vmatpush.msra.mxu0 0.0
    %451 = vmatpush.msra.mxu0 0.0
    %452 = vmatpush.msra.mxu0 0.0
    %453 = vmatpush.msra.mxu0 %v433
    %454 = vmatmul.f32.gmra.mxu0 %v436
    %v455 = vpop.f32.mrf.mxu0
    %v456 = vadd.f32 0.0, %v455
    %457 = vdwg.mxu0
    %460 = vrot.lane.b32.xlu0 %v430, 16
    %v461 = vpop.permute.xlu0 %460
    %462 = vrot.lane.b32.xlu0 %v456, 16
    %v463 = vpop.permute.xlu0 %462
    %v466 = vsel %vm201, %v300, %v461
    %v467 = vsel %vm201, %v326, %v463
    %v469 = vperm.slane %v164, 0
    %v472 = vsel %vm168, %v466, 0
    %v475 = vsel %vm168, %v467, 0
    %477 = vmatpush.msra.mxu0 0.0
    %478 = vmatpush.msra.mxu0 0.0
    %479 = vmatpush.msra.mxu0 0.0
    %480 = vmatpush.msra.mxu0 0.0
    %481 = vmatpush.msra.mxu0 0.0
    %482 = vmatpush.msra.mxu0 0.0
    %483 = vmatpush.msra.mxu0 0.0
    %484 = vmatpush.msra.mxu0 0.0
    %485 = vmatpush.msra.mxu0 0.0
    %486 = vmatpush.msra.mxu0 0.0
    %487 = vmatpush.msra.mxu0 0.0
    %488 = vmatpush.msra.mxu0 0.0
    %489 = vmatpush.msra.mxu0 %v163
    %490 = vmatpush.msra.mxu0 %v162
    %491 = vmatpush.msra.mxu0 %v161
    %492 = vmatpush.msra.mxu0 %v160
    %493 = vmatmul.f32.gmra.mxu0 %v472
    %v494 = vpop.f32.mrf.mxu0
    %v495 = vadd.f32 %v469, %v494
    %496 = vmatmul.f32.gmra.mxu0 %v475
    %v497 = vpop.f32.mrf.mxu0
    %v498 = vadd.f32 %v469, %v497
    %499 = vdwg.mxu0
    %v500 = vadd.f32 %v153, %v495
    %v501 = vadd.f32 %v154, %v498
    %v502 = vld [vmem:[#allocation10] sm:$0x1]
    %v503 = vld [vmem:[#allocation12] sm:$0x1]
    %v504 = vsel %vm168, %v500, 0.0
    %505 = vadd.xlane.f32.xlu0 %v504
    %v506 = vpop.xlane.xlu0 %505
    %v507 = vsel %vm168, %v501, 0.0
    %508 = vadd.xlane.f32.xlu0 %v507
    %v509 = vpop.xlane.xlu0 %508
    %v510 = vrcp.pop 32.0
    %v511 = vmul.f32 32.0, %v510
    %v512 = vsub.f32 1.0, %v511
    %v513 = vmul.f32 %v510, %v512
    %v514 = vadd.f32 %v510, %v513
    %vm515 = vweird.f32 %v510
    %v516 = vsel %vm515, %v510, %v514
    %v517 = vmul.f32 %v506, %v516
    %v518 = vmul.f32 %v509, %v516
    %v519 = vsub.f32 %v500, %v517
    %v520 = vsub.f32 %v501, %v518
    %v521 = vmul.f32 %v519, %v519
    %v522 = vmul.f32 %v520, %v520
    %v523 = vsel %vm168, %v521, 0.0
    %524 = vadd.xlane.f32.xlu0 %v523
    %v525 = vpop.xlane.xlu0 %524
    %v526 = vsel %vm168, %v522, 0.0
    %527 = vadd.xlane.f32.xlu0 %v526
    %v528 = vpop.xlane.xlu0 %527
    %v529 = vmul.f32 %v525, %v516
    %v530 = vmul.f32 %v528, %v516
    %v531 = vadd.f32 %v529, 1e-05
    %v532 = vadd.f32 %v530, 1e-05
    %v533 = vrsqrt.pop %v531
    %v534 = vmul.f32 %v533, %v531
    %v535 = vmul.f32 %v534, %v533
    %v536 = vmul.f32 0.5, %v535
    %v537 = vsub.f32 1.5, %v536
    %v538 = vmul.f32 %v533, %v537
    %vm539 = vweird.f32 %v531
    %vm540 = vweird.f32 %v533
    %vm541 = vmor %vm539, %vm540
    %v542 = vsel %vm541, %v533, %v538
    %v543 = vrsqrt.pop %v532
    %v544 = vmul.f32 %v543, %v532
    %v545 = vmul.f32 %v544, %v543
    %v546 = vmul.f32 0.5, %v545
    %v547 = vsub.f32 1.5, %v546
    %v548 = vmul.f32 %v543, %v547
    %vm549 = vweird.f32 %v532
    %vm550 = vweird.f32 %v543
    %vm551 = vmor %vm549, %vm550
    %v552 = vsel %vm551, %v543, %v548
    %v553 = vmul.f32 %v519, %v542
    %v554 = vmul.f32 %v520, %v552
    %v556 = vperm.slane %v502, 0
    %v558 = vmul.f32 %v553, %v556
    %v559 = vmul.f32 %v554, %v556
    %v561 = vperm.slane %v503, 0
    %v563 = vadd.f32 %v558, %v561
    %v564 = vadd.f32 %v559, %v561
    %v565 = vld [vmem:[#allocation6] sm:$0xff]
    %v566 = vld [vmem:[#allocation6 + $0x8] sm:$0xff]
    %v567 = vld [vmem:[#allocation6 + $0x10] sm:$0xff]
    %v568 = vld [vmem:[#allocation6 + $0x18] sm:$0xff]
    %v569 = vld [vmem:[#allocation7] sm:$0x1]
    %v570 = vld [vmem:[%s7] sm:$0xff]
    %v571 = vld [vmem:[%s7 + $0x8] sm:$0xff]
    %v572 = vld [vmem:[%s7 + $0x10] sm:$0xff]
    %v573 = vld [vmem:[%s7 + $0x18] sm:$0xff]
    %v574 = vld [vmem:[%s7 + $0x20] sm:$0xff]
    %v575 = vld [vmem:[%s7 + $0x28] sm:$0xff]
    %v576 = vld [vmem:[%s7 + $0x30] sm:$0xff]
    %v577 = vld [vmem:[%s7 + $0x38] sm:$0xff]
    %v578 = vld [vmem:[#allocation9] sm:$0x1]
    %v580 = vperm.slane %v569, 0
    %v583 = vsel %vm168, %v563, 0
    %v586 = vsel %vm168, %v564, 0
    %588 = vmatpush.msra.mxu0 0.0
    %589 = vmatpush.msra.mxu0 0.0
    %590 = vmatpush.msra.mxu0 0.0
    %591 = vmatpush.msra.mxu0 0.0
    %592 = vmatpush.msra.mxu0 0.0
    %593 = vmatpush.msra.mxu0 0.0
    %594 = vmatpush.msra.mxu0 0.0
    %595 = vmatpush.msra.mxu0 0.0
    %596 = vmatpush.msra.mxu0 0.0
    %597 = vmatpush.msra.mxu0 0.0
    %598 = vmatpush.msra.mxu0 0.0
    %599 = vmatpush.msra.mxu0 0.0
    %600 = vmatpush.msra.mxu0 %v568
    %601 = vmatpush.msra.mxu0 %v567
    %602 = vmatpush.msra.mxu0 %v566
    %603 = vmatpush.msra.mxu0 %v565
    %604 = vmatmul.f32.gmra.mxu0 %v583
    %v605 = vpop.f32.mrf.mxu0
    %v606 = vadd.f32 %v580, %v605
    %607 = vmatmul.f32.gmra.mxu0 %v586
    %v608 = vpop.f32.mrf.mxu0
    %v609 = vadd.f32 %v580, %v608
    %610 = vdwg.mxu0
    %v611 = vmax.f32 %v606, 0.0
    %v612 = vmax.f32 %v609, 0.0
    %v614 = vperm.slane %v578, 0
    %vm616 = vcmask 523264
    %v618 = vsel %vm616, %v611, 0
    %v621 = vsel %vm616, %v612, 0
    %623 = vmatpush.msra.mxu0 0.0
    %624 = vmatpush.msra.mxu0 0.0
    %625 = vmatpush.msra.mxu0 0.0
    %626 = vmatpush.msra.mxu0 0.0
    %627 = vmatpush.msra.mxu0 0.0
    %628 = vmatpush.msra.mxu0 0.0
    %629 = vmatpush.msra.mxu0 0.0
    %630 = vmatpush.msra.mxu0 0.0
    %631 = vmatpush.msra.mxu0 %v577
    %632 = vmatpush.msra.mxu0 %v576
    %633 = vmatpush.msra.mxu0 %v575
    %634 = vmatpush.msra.mxu0 %v574
    %635 = vmatpush.msra.mxu0 %v573
    %636 = vmatpush.msra.mxu0 %v572
    %637 = vmatpush.msra.mxu0 %v571
    %638 = vmatpush.msra.mxu0 %v570
    %639 = vmatmul.f32.gmra.mxu0 %v618
    %v640 = vpop.f32.mrf.mxu0
    %v641 = vadd.f32 %v614, %v640
    %642 = vmatmul.f32.gmra.mxu0 %v621
    %v643 = vpop.f32.mrf.mxu0
    %v644 = vadd.f32 %v614, %v643
    %645 = vdwg.mxu0
    %v646 = vadd.f32 %v563, %v641
    %v647 = vadd.f32 %v564, %v644
    %s648 = scalar_lea.vmem [#allocation10], 2
    %v649 = vld [vmem:[%s648] sm:$0x1]
    %s650 = scalar_lea.vmem [#allocation12], 2
    %v651 = vld [vmem:[%s650] sm:$0x1]
    %v652 = vsel %vm168, %v646, 0.0
    %653 = vadd.xlane.f32.xlu0 %v652
    %v654 = vpop.xlane.xlu0 %653
    %v655 = vsel %vm168, %v647, 0.0
    %656 = vadd.xlane.f32.xlu0 %v655
    %v657 = vpop.xlane.xlu0 %656
    %v658 = vmul.f32 %v654, %v516
    %v659 = vmul.f32 %v657, %v516
    %v660 = vsub.f32 %v646, %v658
    %v661 = vsub.f32 %v647, %v659
    %v662 = vmul.f32 %v660, %v660
    %v663 = vmul.f32 %v661, %v661
    %v664 = vsel %vm168, %v662, 0.0
    %665 = vadd.xlane.f32.xlu0 %v664
    %v666 = vpop.xlane.xlu0 %665
    %v667 = vsel %vm168, %v663, 0.0
    %668 = vadd.xlane.f32.xlu0 %v667
    %v669 = vpop.xlane.xlu0 %668
    %v670 = vmul.f32 %v666, %v516
    %v671 = vmul.f32 %v669, %v516
    %v672 = vadd.f32 %v670, 1e-05
    %v673 = vadd.f32 %v671, 1e-05
    %v674 = vrsqrt.pop %v672
    %v675 = vmul.f32 %v674, %v672
    %v676 = vmul.f32 %v675, %v674
    %v677 = vmul.f32 0.5, %v676
    %v678 = vsub.f32 1.5, %v677
    %v679 = vmul.f32 %v674, %v678
    %vm680 = vweird.f32 %v672
    %vm681 = vweird.f32 %v674
    %vm682 = vmor %vm680, %vm681
    %v683 = vsel %vm682, %v674, %v679
    %v684 = vrsqrt.pop %v673
    %v685 = vmul.f32 %v684, %v673
    %v686 = vmul.f32 %v685, %v684
    %v687 = vmul.f32 0.5, %v686
    %v688 = vsub.f32 1.5, %v687
    %v689 = vmul.f32 %v684, %v688
    %vm690 = vweird.f32 %v673
    %vm691 = vweird.f32 %v684
    %vm692 = vmor %vm690, %vm691
    %v693 = vsel %vm692, %v684, %v689
    %v694 = vmul.f32 %v660, %v683
    %v695 = vmul.f32 %v661, %v693
    %v697 = vperm.slane %v649, 0
    %v699 = vmul.f32 %v694, %v697
    %v700 = vmul.f32 %v695, %v697
    %v702 = vperm.slane %v651, 0
    %v704 = vadd.f32 %v699, %v702
    %v705 = vadd.f32 %v700, %v702
    %s706 = scalar_lea.vmem %s1, 32
    %v707 = vld [vmem:[%s706] sm:$0xff]
    %v708 = vld [vmem:[%s706 + $0x8] sm:$0xff]
    %v709 = vld [vmem:[%s706 + $0x10] sm:$0xff]
    %v710 = vld [vmem:[%s706 + $0x18] sm:$0xff]
    %s711 = scalar_lea.vmem [#allocation2], 1
    %v712 = vld [vmem:[%s711] sm:$0x1]
    %s713 = scalar_lea.vmem %s3, 32
    %v714 = vld [vmem:[%s713] sm:$0xff]
    %v715 = vld [vmem:[%s713 + $0x8] sm:$0xff]
    %v716 = vld [vmem:[%s713 + $0x10] sm:$0xff]
    %v717 = vld [vmem:[%s713 + $0x18] sm:$0xff]
    %s718 = scalar_lea.vmem [#allocation4], 1
    %v719 = vld [vmem:[%s718] sm:$0x1]
    %v721 = vperm.slane %v712, 0
    %v724 = vsel %vm168, %v704, 0
    %v727 = vsel %vm168, %v705, 0
    %729 = vmatpush.msra.mxu0 0.0
    %730 = vmatpush.msra.mxu0 0.0
    %731 = vmatpush.msra.mxu0 0.0
    %732 = vmatpush.msra.mxu0 0.0
    %733 = vmatpush.msra.mxu0 0.0
    %734 = vmatpush.msra.mxu0 0.0
    %735 = vmatpush.msra.mxu0 0.0
    %736 = vmatpush.msra.mxu0 0.0
    %737 = vmatpush.msra.mxu0 0.0
    %738 = vmatpush.msra.mxu0 0.0
    %739 = vmatpush.msra.mxu0 0.0
    %740 = vmatpush.msra.mxu0 0.0
    %741 = vmatpush.msra.mxu0 %v710
    %742 = vmatpush.msra.mxu0 %v709
    %743 = vmatpush.msra.mxu0 %v708
    %744 = vmatpush.msra.mxu0 %v707
    %745 = vmatmul.f32.gmra.mxu0 %v724
    %v746 = vpop.f32.mrf.mxu0
    %v747 = vadd.f32 %v721, %v746
    %748 = vmatmul.f32.gmra.mxu0 %v727
    %v749 = vpop.f32.mrf.mxu0
    %v750 = vadd.f32 %v721, %v749
    %751 = vdwg.mxu0
    %753 = vrot.lane.b32.xlu0 %v747, 96
    %v754 = vpop.permute.xlu0 %753
    %v755 = vsel %vm201, %v747, 0
    %v757 = vsel %vm201, %v754, 0
    %759 = vmatpush.xpose.msra.mxu0 0.0
    %760 = vmatpush.xpose.msra.mxu0 0.0
    %761 = vmatpush.xpose.msra.mxu0 0.0
    %762 = vmatpush.xpose.msra.mxu0 0.0
    %763 = vmatpush.xpose.msra.mxu0 0.0
    %764 = vmatpush.xpose.msra.mxu0 0.0
    %765 = vmatpush.xpose.msra.mxu0 0.0
    %766 = vmatpush.xpose.msra.mxu0 0.0
    %767 = vmatpush.xpose.msra.mxu0 0.0
    %768 = vmatpush.xpose.msra.mxu0 0.0
    %769 = vmatpush.xpose.msra.mxu0 0.0
    %770 = vmatpush.xpose.msra.mxu0 0.0
    %771 = vmatpush.xpose.msra.mxu0 0.0
    %772 = vmatpush.xpose.msra.mxu0 0.0
    %773 = vmatpush.xpose.msra.mxu0 0.0
    %774 = vmatpush.xpose.msra.mxu0 %v757
    %775 = vmatmul.f32.gmra.mxu0 %v755
    %v776 = vpop.f32.mrf.mxu0
    %v777 = vadd.f32 0.0, %v776
    %778 = vdwg.mxu0
    %780 = vrot.lane.b32.xlu0 %v750, 96
    %v781 = vpop.permute.xlu0 %780
    %v782 = vsel %vm201, %v750, 0
    %v784 = vsel %vm201, %v781, 0
    %786 = vmatpush.xpose.msra.mxu0 0.0
    %787 = vmatpush.xpose.msra.mxu0 0.0
    %788 = vmatpush.xpose.msra.mxu0 0.0
    %789 = vmatpush.xpose.msra.mxu0 0.0
    %790 = vmatpush.xpose.msra.mxu0 0.0
    %791 = vmatpush.xpose.msra.mxu0 0.0
    %792 = vmatpush.xpose.msra.mxu0 0.0
    %793 = vmatpush.xpose.msra.mxu0 0.0
    %794 = vmatpush.xpose.msra.mxu0 0.0
    %795 = vmatpush.xpose.msra.mxu0 0.0
    %796 = vmatpush.xpose.msra.mxu0 0.0
    %797 = vmatpush.xpose.msra.mxu0 0.0
    %798 = vmatpush.xpose.msra.mxu0 0.0
    %799 = vmatpush.xpose.msra.mxu0 0.0
    %800 = vmatpush.xpose.msra.mxu0 0.0
    %801 = vmatpush.xpose.msra.mxu0 %v784
    %802 = vmatmul.f32.gmra.mxu0 %v782
    %v803 = vpop.f32.mrf.mxu0
    %v804 = vadd.f32 0.0, %v803
    %805 = vdwg.mxu0
    %v806 = vsel %vm253, %v777, -inf
    %807 = vmax.xlane.f32.xlu0 %v806
    %v808 = vpop.xlane.xlu0 %807
    %v809 = vsel %vm253, %v804, -inf
    %810 = vmax.xlane.f32.xlu0 %v809
    %v811 = vpop.xlane.xlu0 %810
    %v812 = vsub.f32 %v777, %v808
    %v813 = vsub.f32 %v804, %v811
    %v814 = vmul.f32 %v812, 1.442695
    %v815 = vpow.pop %v814
    %v816 = vmul.f32 %v813, 1.442695
    %v817 = vpow.pop %v816
    %v818 = vsel %vm253, %v815, 0.0
    %819 = vadd.xlane.f32.xlu0 %v818
    %v820 = vpop.xlane.xlu0 %819
    %v821 = vsel %vm253, %v817, 0.0
    %822 = vadd.xlane.f32.xlu0 %v821
    %v823 = vpop.xlane.xlu0 %822
    %v824 = vrcp.pop %v820
    %v825 = vrcp.pop %v823
    %v826 = vmul.f32 %v815, %v824
    %v827 = vmul.f32 %v817, %v825
    %828 = vrot.lane.b32.xlu0 %v747, 64
    %v829 = vpop.permute.xlu0 %828
    %v832 = vsel %vm253, %v826, 0
    %834 = vmatpush.msra.mxu0 0.0
    %835 = vmatpush.msra.mxu0 0.0
    %836 = vmatpush.msra.mxu0 0.0
    %837 = vmatpush.msra.mxu0 0.0
    %838 = vmatpush.msra.mxu0 0.0
    %839 = vmatpush.msra.mxu0 0.0
    %840 = vmatpush.msra.mxu0 0.0
    %841 = vmatpush.msra.mxu0 0.0
    %842 = vmatpush.msra.mxu0 0.0
    %843 = vmatpush.msra.mxu0 0.0
    %844 = vmatpush.msra.mxu0 0.0
    %845 = vmatpush.msra.mxu0 0.0
    %846 = vmatpush.msra.mxu0 0.0
    %847 = vmatpush.msra.mxu0 0.0
    %848 = vmatpush.msra.mxu0 0.0
    %849 = vmatpush.msra.mxu0 %v829
    %850 = vmatmul.f32.gmra.mxu0 %v832
    %v851 = vpop.f32.mrf.mxu0
    %v852 = vadd.f32 0.0, %v851
    %853 = vdwg.mxu0
    %854 = vrot.lane.b32.xlu0 %v750, 64
    %v855 = vpop.permute.xlu0 %854
    %v858 = vsel %vm253, %v827, 0
    %860 = vmatpush.msra.mxu0 0.0
    %861 = vmatpush.msra.mxu0 0.0
    %862 = vmatpush.msra.mxu0 0.0
    %863 = vmatpush.msra.mxu0 0.0
    %864 = vmatpush.msra.mxu0 0.0
    %865 = vmatpush.msra.mxu0 0.0
    %866 = vmatpush.msra.mxu0 0.0
    %867 = vmatpush.msra.mxu0 0.0
    %868 = vmatpush.msra.mxu0 0.0
    %869 = vmatpush.msra.mxu0 0.0
    %870 = vmatpush.msra.mxu0 0.0
    %871 = vmatpush.msra.mxu0 0.0
    %872 = vmatpush.msra.mxu0 0.0
    %873 = vmatpush.msra.mxu0 0.0
    %874 = vmatpush.msra.mxu0 0.0
    %875 = vmatpush.msra.mxu0 %v855
    %876 = vmatmul.f32.gmra.mxu0 %v858
    %v877 = vpop.f32.mrf.mxu0
    %v878 = vadd.f32 0.0, %v877
    %879 = vdwg.mxu0
    %880 = vrot.lane.b32.xlu0 %v747, 112
    %v881 = vpop.permute.xlu0 %880
    %882 = vrot.lane.b32.xlu0 %v747, 80
    %v883 = vpop.permute.xlu0 %882
    %v884 = vsel %vm201, %v881, 0
    %v886 = vsel %vm201, %v883, 0
    %888 = vmatpush.xpose.msra.mxu0 0.0
    %889 = vmatpush.xpose.msra.mxu0 0.0
    %890 = vmatpush.xpose.msra.mxu0 0.0
    %891 = vmatpush.xpose.msra.mxu0 0.0
    %892 = vmatpush.xpose.msra.mxu0 0.0
    %893 = vmatpush.xpose.msra.mxu0 0.0
    %894 = vmatpush.xpose.msra.mxu0 0.0
    %895 = vmatpush.xpose.msra.mxu0 0.0
    %896 = vmatpush.xpose.msra.mxu0 0.0
    %897 = vmatpush.xpose.msra.mxu0 0.0
    %898 = vmatpush.xpose.msra.mxu0 0.0
    %899 = vmatpush.xpose.msra.mxu0 0.0
    %900 = vmatpush.xpose.msra.mxu0 0.0
    %901 = vmatpush.xpose.msra.mxu0 0.0
    %902 = vmatpush.xpose.msra.mxu0 0.0
    %903 = vmatpush.xpose.msra.mxu0 %v886
    %904 = vmatmul.f32.gmra.mxu0 %v884
    %v905 = vpop.f32.mrf.mxu0
    %v906 = vadd.f32 0.0, %v905
    %907 = vdwg.mxu0
    %908 = vrot.lane.b32.xlu0 %v750, 112
    %v909 = vpop.permute.xlu0 %908
    %910 = vrot.lane.b32.xlu0 %v750, 80
    %v911 = vpop.permute.xlu0 %910
    %v912 = vsel %vm201, %v909, 0
    %v914 = vsel %vm201, %v911, 0
    %916 = vmatpush.xpose.msra.mxu0 0.0
    %917 = vmatpush.xpose.msra.mxu0 0.0
    %918 = vmatpush.xpose.msra.mxu0 0.0
    %919 = vmatpush.xpose.msra.mxu0 0.0
    %920 = vmatpush.xpose.msra.mxu0 0.0
    %921 = vmatpush.xpose.msra.mxu0 0.0
    %922 = vmatpush.xpose.msra.mxu0 0.0
    %923 = vmatpush.xpose.msra.mxu0 0.0
    %924 = vmatpush.xpose.msra.mxu0 0.0
    %925 = vmatpush.xpose.msra.mxu0 0.0
    %926 = vmatpush.xpose.msra.mxu0 0.0
    %927 = vmatpush.xpose.msra.mxu0 0.0
    %928 = vmatpush.xpose.msra.mxu0 0.0
    %929 = vmatpush.xpose.msra.mxu0 0.0
    %930 = vmatpush.xpose.msra.mxu0 0.0
    %931 = vmatpush.xpose.msra.mxu0 %v914
    %932 = vmatmul.f32.gmra.mxu0 %v912
    %v933 = vpop.f32.mrf.mxu0
    %v934 = vadd.f32 0.0, %v933
    %935 = vdwg.mxu0
    %v936 = vsel %vm253, %v906, -inf
    %937 = vmax.xlane.f32.xlu0 %v936
    %v938 = vpop.xlane.xlu0 %937
    %v939 = vsel %vm253, %v934, -inf
    %940 = vmax.xlane.f32.xlu0 %v939
    %v941 = vpop.xlane.xlu0 %940
    %v942 = vsub.f32 %v906, %v938
    %v943 = vsub.f32 %v934, %v941
    %v944 = vmul.f32 %v942, 1.442695
    %v945 = vpow.pop %v944
    %v946 = vmul.f32 %v943, 1.442695
    %v947 = vpow.pop %v946
    %v948 = vsel %vm253, %v945, 0.0
    %949 = vadd.xlane.f32.xlu0 %v948
    %v950 = vpop.xlane.xlu0 %949
    %v951 = vsel %vm253, %v947, 0.0
    %952 = vadd.xlane.f32.xlu0 %v951
    %v953 = vpop.xlane.xlu0 %952
    %v954 = vrcp.pop %v950
    %v955 = vrcp.pop %v953
    %v956 = vmul.f32 %v945, %v954
    %v957 = vmul.f32 %v947, %v955
    %958 = vrot.lane.b32.xlu0 %v747, 48
    %v959 = vpop.permute.xlu0 %958
    %v962 = vsel %vm253, %v956, 0
    %964 = vmatpush.msra.mxu0 0.0
    %965 = vmatpush.msra.mxu0 0.0
    %966 = vmatpush.msra.mxu0 0.0
    %967 = vmatpush.msra.mxu0 0.0
    %968 = vmatpush.msra.mxu0 0.0
    %969 = vmatpush.msra.mxu0 0.0
    %970 = vmatpush.msra.mxu0 0.0
    %971 = vmatpush.msra.mxu0 0.0
    %972 = vmatpush.msra.mxu0 0.0
    %973 = vmatpush.msra.mxu0 0.0
    %974 = vmatpush.msra.mxu0 0.0
    %975 = vmatpush.msra.mxu0 0.0
    %976 = vmatpush.msra.mxu0 0.0
    %977 = vmatpush.msra.mxu0 0.0
    %978 = vmatpush.msra.mxu0 0.0
    %979 = vmatpush.msra.mxu0 %v959
    %980 = vmatmul.f32.gmra.mxu0 %v962
    %v981 = vpop.f32.mrf.mxu0
    %v982 = vadd.f32 0.0, %v981
    %983 = vdwg.mxu0
    %984 = vrot.lane.b32.xlu0 %v750, 48
    %v985 = vpop.permute.xlu0 %984
    %v988 = vsel %vm253, %v957, 0
    %990 = vmatpush.msra.mxu0 0.0
    %991 = vmatpush.msra.mxu0 0.0
    %992 = vmatpush.msra.mxu0 0.0
    %993 = vmatpush.msra.mxu0 0.0
    %994 = vmatpush.msra.mxu0 0.0
    %995 = vmatpush.msra.mxu0 0.0
    %996 = vmatpush.msra.mxu0 0.0
    %997 = vmatpush.msra.mxu0 0.0
    %998 = vmatpush.msra.mxu0 0.0
    %999 = vmatpush.msra.mxu0 0.0
    %1000 = vmatpush.msra.mxu0 0.0
    %1001 = vmatpush.msra.mxu0 0.0
    %1002 = vmatpush.msra.mxu0 0.0
    %1003 = vmatpush.msra.mxu0 0.0
    %1004 = vmatpush.msra.mxu0 0.0
    %1005 = vmatpush.msra.mxu0 %v985
    %1006 = vmatmul.f32.gmra.mxu0 %v988
    %v1007 = vpop.f32.mrf.mxu0
    %v1008 = vadd.f32 0.0, %v1007
    %1009 = vdwg.mxu0
    %1012 = vrot.lane.b32.xlu0 %v982, 16
    %v1013 = vpop.permute.xlu0 %1012
    %1014 = vrot.lane.b32.xlu0 %v1008, 16
    %v1015 = vpop.permute.xlu0 %1014
    %v1018 = vsel %vm201, %v852, %v1013
    %v1019 = vsel %vm201, %v878, %v1015
    %v1021 = vperm.slane %v719, 0
    %v1024 = vsel %vm168, %v1018, 0
    %v1027 = vsel %vm168, %v1019, 0
    %1029 = vmatpush.msra.mxu0 0.0
    %1030 = vmatpush.msra.mxu0 0.0
    %1031 = vmatpush.msra.mxu0 0.0
    %1032 = vmatpush.msra.mxu0 0.0
    %1033 = vmatpush.msra.mxu0 0.0
    %1034 = vmatpush.msra.mxu0 0.0
    %1035 = vmatpush.msra.mxu0 0.0
    %1036 = vmatpush.msra.mxu0 0.0
    %1037 = vmatpush.msra.mxu0 0.0
    %1038 = vmatpush.msra.mxu0 0.0
    %1039 = vmatpush.msra.mxu0 0.0
    %1040 = vmatpush.msra.mxu0 0.0
    %1041 = vmatpush.msra.mxu0 %v717
    %1042 = vmatpush.msra.mxu0 %v716
    %1043 = vmatpush.msra.mxu0 %v715
    %1044 = vmatpush.msra.mxu0 %v714
    %1045 = vmatmul.f32.gmra.mxu0 %v1024
    %v1046 = vpop.f32.mrf.mxu0
    %v1047 = vadd.f32 %v1021, %v1046
    %1048 = vmatmul.f32.gmra.mxu0 %v1027
    %v1049 = vpop.f32.mrf.mxu0
    %v1050 = vadd.f32 %v1021, %v1049
    %1051 = vdwg.mxu0
    %v1052 = vadd.f32 %v704, %v1047
    %v1053 = vadd.f32 %v705, %v1050
    %s1054 = scalar_lea.vmem [#allocation10], 1
    %v1055 = vld [vmem:[%s1054] sm:$0x1]
    %s1056 = scalar_lea.vmem [#allocation12], 1
    %v1057 = vld [vmem:[%s1056] sm:$0x1]
    %v1058 = vsel %vm168, %v1052, 0.0
    %1059 = vadd.xlane.f32.xlu0 %v1058
    %v1060 = vpop.xlane.xlu0 %1059
    %v1061 = vsel %vm168, %v1053, 0.0
    %1062 = vadd.xlane.f32.xlu0 %v1061
    %v1063 = vpop.xlane.xlu0 %1062
    %v1064 = vmul.f32 %v1060, %v516
    %v1065 = vmul.f32 %v1063, %v516
    %v1066 = vsub.f32 %v1052, %v1064
    %v1067 = vsub.f32 %v1053, %v1065
    %v1068 = vmul.f32 %v1066, %v1066
    %v1069 = vmul.f32 %v1067, %v1067
    %v1070 = vsel %vm168, %v1068, 0.0
    %1071 = vadd.xlane.f32.xlu0 %v1070
    %v1072 = vpop.xlane.xlu0 %1071
    %v1073 = vsel %vm168, %v1069, 0.0
    %1074 = vadd.xlane.f32.xlu0 %v1073
    %v1075 = vpop.xlane.xlu0 %1074
    %v1076 = vmul.f32 %v1072, %v516
    %v1077 = vmul.f32 %v1075, %v516
    %v1078 = vadd.f32 %v1076, 1e-05
    %v1079 = vadd.f32 %v1077, 1e-05
    %v1080 = vrsqrt.pop %v1078
    %v1081 = vmul.f32 %v1080, %v1078
    %v1082 = vmul.f32 %v1081, %v1080
    %v1083 = vmul.f32 0.5, %v1082
    %v1084 = vsub.f32 1.5, %v1083
    %v1085 = vmul.f32 %v1080, %v1084
    %vm1086 = vweird.f32 %v1078
    %vm1087 = vweird.f32 %v1080
    %vm1088 = vmor %vm1086, %vm1087
    %v1089 = vsel %vm1088, %v1080, %v1085
    %v1090 = vrsqrt.pop %v1079
    %v1091 = vmul.f32 %v1090, %v1079
    %v1092 = vmul.f32 %v1091, %v1090
    %v1093 = vmul.f32 0.5, %v1092
    %v1094 = vsub.f32 1.5, %v1093
    %v1095 = vmul.f32 %v1090, %v1094
    %vm1096 = vweird.f32 %v1079
    %vm1097 = vweird.f32 %v1090
    %vm1098 = vmor %vm1096, %vm1097
    %v1099 = vsel %vm1098, %v1090, %v1095
    %v1100 = vmul.f32 %v1066, %v1089
    %v1101 = vmul.f32 %v1067, %v1099
    %v1103 = vperm.slane %v1055, 0
    %v1105 = vmul.f32 %v1100, %v1103
    %v1106 = vmul.f32 %v1101, %v1103
    %v1108 = vperm.slane %v1057, 0
    %v1110 = vadd.f32 %v1105, %v1108
    %v1111 = vadd.f32 %v1106, %v1108
    %s1112 = scalar_lea.vmem [#allocation6], 32
    %v1113 = vld [vmem:[%s1112] sm:$0xff]
    %v1114 = vld [vmem:[%s1112 + $0x8] sm:$0xff]
    %v1115 = vld [vmem:[%s1112 + $0x10] sm:$0xff]
    %v1116 = vld [vmem:[%s1112 + $0x18] sm:$0xff]
    %s1117 = scalar_lea.vmem [#allocation7], 1
    %v1118 = vld [vmem:[%s1117] sm:$0x1]
    %s1119 = scalar_lea.vmem %s7, 64
    %v1120 = vld [vmem:[%s1119] sm:$0xff]
    %v1121 = vld [vmem:[%s1119 + $0x8] sm:$0xff]
    %v1122 = vld [vmem:[%s1119 + $0x10] sm:$0xff]
    %v1123 = vld [vmem:[%s1119 + $0x18] sm:$0xff]
    %v1124 = vld [vmem:[%s1119 + $0x20] sm:$0xff]
    %v1125 = vld [vmem:[%s1119 + $0x28] sm:$0xff]
    %v1126 = vld [vmem:[%s1119 + $0x30] sm:$0xff]
    %v1127 = vld [vmem:[%s1119 + $0x38] sm:$0xff]
    %s1128 = scalar_lea.vmem [#allocation9], 1
    %v1129 = vld [vmem:[%s1128] sm:$0x1]
    %v1131 = vperm.slane %v1118, 0
    %v1134 = vsel %vm168, %v1110, 0
    %v1137 = vsel %vm168, %v1111, 0
    %1139 = vmatpush.msra.mxu0 0.0
    %1140 = vmatpush.msra.mxu0 0.0
    %1141 = vmatpush.msra.mxu0 0.0
    %1142 = vmatpush.msra.mxu0 0.0
    %1143 = vmatpush.msra.mxu0 0.0
    %1144 = vmatpush.msra.mxu0 0.0
    %1145 = vmatpush.msra.mxu0 0.0
    %1146 = vmatpush.msra.mxu0 0.0
    %1147 = vmatpush.msra.mxu0 0.0
    %1148 = vmatpush.msra.mxu0 0.0
    %1149 = vmatpush.msra.mxu0 0.0
    %1150 = vmatpush.msra.mxu0 0.0
    %1151 = vmatpush.msra.mxu0 %v1116
    %1152 = vmatpush.msra.mxu0 %v1115
    %1153 = vmatpush.msra.mxu0 %v1114
    %1154 = vmatpush.msra.mxu0 %v1113
    %1155 = vmatmul.f32.gmra.mxu0 %v1134
    %v1156 = vpop.f32.mrf.mxu0
    %v1157 = vadd.f32 %v1131, %v1156
    %1158 = vmatmul.f32.gmra.mxu0 %v1137
    %v1159 = vpop.f32.mrf.mxu0
    %v1160 = vadd.f32 %v1131, %v1159
    %1161 = vdwg.mxu0
    %v1162 = vmax.f32 %v1157, 0.0
    %v1163 = vmax.f32 %v1160, 0.0
    %v1165 = vperm.slane %v1129, 0
    %v1168 = vsel %vm616, %v1162, 0
    %v1171 = vsel %vm616, %v1163, 0
    %1173 = vmatpush.msra.mxu0 0.0
    %1174 = vmatpush.msra.mxu0 0.0
    %1175 = vmatpush.msra.mxu0 0.0
    %1176 = vmatpush.msra.mxu0 0.0
    %1177 = vmatpush.msra.mxu0 0.0
    %1178 = vmatpush.msra.mxu0 0.0
    %1179 = vmatpush.msra.mxu0 0.0
    %1180 = vmatpush.msra.mxu0 0.0
    %1181 = vmatpush.msra.mxu0 %v1127
    %1182 = vmatpush.msra.mxu0 %v1126
    %1183 = vmatpush.msra.mxu0 %v1125
    %1184 = vmatpush.msra.mxu0 %v1124
    %1185 = vmatpush.msra.mxu0 %v1123
    %1186 = vmatpush.msra.mxu0 %v1122
    %1187 = vmatpush.msra.mxu0 %v1121
    %1188 = vmatpush.msra.mxu0 %v1120
    %1189 = vmatmul.f32.gmra.mxu0 %v1168
    %v1190 = vpop.f32.mrf.mxu0
    %v1191 = vadd.f32 %v1165, %v1190
    %1192 = vmatmul.f32.gmra.mxu0 %v1171
    %v1193 = vpop.f32.mrf.mxu0
    %v1194 = vadd.f32 %v1165, %v1193
    %1195 = vdwg.mxu0
    %v1196 = vadd.f32 %v1110, %v1191
    %v1197 = vadd.f32 %v1111, %v1194
    %s1198 = scalar_lea.vmem [#allocation10], 3
    %v1199 = vld [vmem:[%s1198] sm:$0x1]
    %s1200 = scalar_lea.vmem [#allocation12], 3
    %v1201 = vld [vmem:[%s1200] sm:$0x1]
    %v1202 = vsel %vm168, %v1196, 0.0
    %1203 = vadd.xlane.f32.xlu0 %v1202
    %v1204 = vpop.xlane.xlu0 %1203
    %v1205 = vsel %vm168, %v1197, 0.0
    %1206 = vadd.xlane.f32.xlu0 %v1205
    %v1207 = vpop.xlane.xlu0 %1206
    %v1208 = vmul.f32 %v1204, %v516
    %v1209 = vmul.f32 %v1207, %v516
    %v1210 = vsub.f32 %v1196, %v1208
    %v1211 = vsub.f32 %v1197, %v1209
    %v1212 = vmul.f32 %v1210, %v1210
    %v1213 = vmul.f32 %v1211, %v1211
    %v1214 = vsel %vm168, %v1212, 0.0
    %1215 = vadd.xlane.f32.xlu0 %v1214
    %v1216 = vpop.xlane.xlu0 %1215
    %v1217 = vsel %vm168, %v1213, 0.0
    %1218 = vadd.xlane.f32.xlu0 %v1217
    %v1219 = vpop.xlane.xlu0 %1218
    %v1220 = vmul.f32 %v1216, %v516
    %v1221 = vmul.f32 %v1219, %v516
    %v1222 = vadd.f32 %v1220, 1e-05
    %v1223 = vadd.f32 %v1221, 1e-05
    %v1224 = vrsqrt.pop %v1222
    %v1225 = vmul.f32 %v1224, %v1222
    %v1226 = vmul.f32 %v1225, %v1224
    %v1227 = vmul.f32 0.5, %v1226
    %v1228 = vsub.f32 1.5, %v1227
    %v1229 = vmul.f32 %v1224, %v1228
    %vm1230 = vweird.f32 %v1222
    %vm1231 = vweird.f32 %v1224
    %vm1232 = vmor %vm1230, %vm1231
    %v1233 = vsel %vm1232, %v1224, %v1229
    %v1234 = vrsqrt.pop %v1223
    %v1235 = vmul.f32 %v1234, %v1223
    %v1236 = vmul.f32 %v1235, %v1234
    %v1237 = vmul.f32 0.5, %v1236
    %v1238 = vsub.f32 1.5, %v1237
    %v1239 = vmul.f32 %v1234, %v1238
    %vm1240 = vweird.f32 %v1223
    %vm1241 = vweird.f32 %v1234
    %vm1242 = vmor %vm1240, %vm1241
    %v1243 = vsel %vm1242, %v1234, %v1239
    %v1244 = vmul.f32 %v1210, %v1233
    %v1245 = vmul.f32 %v1211, %v1243
    %v1247 = vperm.slane %v1199, 0
    %v1249 = vmul.f32 %v1244, %v1247
    %v1250 = vmul.f32 %v1245, %v1247
    %v1252 = vperm.slane %v1201, 0
    %v1254 = vadd.f32 %v1249, %v1252
    %v1255 = vadd.f32 %v1250, %v1252
    %s1256 = scalar_lea.vmem [#allocation10], 10
    %v1257 = vld [vmem:[%s1256] sm:$0x1]
    %s1258 = scalar_lea.vmem [#allocation12], 10
    %v1259 = vld [vmem:[%s1258] sm:$0x1]
    %v1260 = vsel %vm168, %v1254, 0.0
    %1261 = vadd.xlane.f32.xlu0 %v1260
    %v1262 = vpop.xlane.xlu0 %1261
    %v1263 = vsel %vm168, %v1255, 0.0
    %1264 = vadd.xlane.f32.xlu0 %v1263
    %v1265 = vpop.xlane.xlu0 %1264
    %v1266 = vmul.f32 %v1262, %v516
    %v1267 = vmul.f32 %v1265, %v516
    %v1268 = vsub.f32 %v1254, %v1266
    %v1269 = vsub.f32 %v1255, %v1267
    %v1270 = vmul.f32 %v1268, %v1268
    %v1271 = vmul.f32 %v1269, %v1269
    %v1272 = vsel %vm168, %v1270, 0.0
    %1273 = vadd.xlane.f32.xlu0 %v1272
    %v1274 = vpop.xlane.xlu0 %1273
    %v1275 = vsel %vm168, %v1271, 0.0
    %1276 = vadd.xlane.f32.xlu0 %v1275
    %v1277 = vpop.xlane.xlu0 %1276
    %v1278 = vmul.f32 %v1274, %v516
    %v1279 = vmul.f32 %v1277, %v516
    %v1280 = vadd.f32 %v1278, 1e-05
    %v1281 = vadd.f32 %v1279, 1e-05
    %v1282 = vrsqrt.pop %v1280
    %v1283 = vmul.f32 %v1282, %v1280
    %v1284 = vmul.f32 %v1283, %v1282
    %v1285 = vmul.f32 0.5, %v1284
    %v1286 = vsub.f32 1.5, %v1285
    %v1287 = vmul.f32 %v1282, %v1286
    %vm1288 = vweird.f32 %v1280
    %vm1289 = vweird.f32 %v1282
    %vm1290 = vmor %vm1288, %vm1289
    %v1291 = vsel %vm1290, %v1282, %v1287
    %v1292 = vrsqrt.pop %v1281
    %v1293 = vmul.f32 %v1292, %v1281
    %v1294 = vmul.f32 %v1293, %v1292
    %v1295 = vmul.f32 0.5, %v1294
    %v1296 = vsub.f32 1.5, %v1295
    %v1297 = vmul.f32 %v1292, %v1296
    %vm1298 = vweird.f32 %v1281
    %vm1299 = vweird.f32 %v1292
    %vm1300 = vmor %vm1298, %vm1299
    %v1301 = vsel %vm1300, %v1292, %v1297
    %v1302 = vmul.f32 %v1268, %v1291
    %v1303 = vmul.f32 %v1269, %v1301
    %v1305 = vperm.slane %v1257, 0
    %v1307 = vmul.f32 %v1302, %v1305
    %v1308 = vmul.f32 %v1303, %v1305
    %v1310 = vperm.slane %v1259, 0
    %v1312 = vadd.f32 %v1307, %v1310
    %v1313 = vadd.f32 %v1308, %v1310
    %s1314 = scalar_lea.vmem %s1, 64
    %v1315 = vld [vmem:[%s1314] sm:$0xff]
    %v1316 = vld [vmem:[%s1314 + $0x8] sm:$0xff]
    %v1317 = vld [vmem:[%s1314 + $0x10] sm:$0xff]
    %v1318 = vld [vmem:[%s1314 + $0x18] sm:$0xff]
    %s1319 = scalar_lea.vmem [#allocation2], 2
    %v1320 = vld [vmem:[%s1319] sm:$0x1]
    %s1321 = scalar_lea.vmem %s3, 64
    %v1322 = vld [vmem:[%s1321] sm:$0xff]
    %v1323 = vld [vmem:[%s1321 + $0x8] sm:$0xff]
    %v1324 = vld [vmem:[%s1321 + $0x10] sm:$0xff]
    %v1325 = vld [vmem:[%s1321 + $0x18] sm:$0xff]
    %s1326 = scalar_lea.vmem [#allocation4], 2
    %v1327 = vld [vmem:[%s1326] sm:$0x1]
    %v1329 = vperm.slane %v1320, 0
    %1331 = vmatpush.msra.mxu0 0.0
    %1332 = vmatpush.msra.mxu0 0.0
    %1333 = vmatpush.msra.mxu0 0.0
    %1334 = vmatpush.msra.mxu0 0.0
    %1335 = vmatpush.msra.mxu0 0.0
    %1336 = vmatpush.msra.mxu0 0.0
    %1337 = vmatpush.msra.mxu0 0.0
    %1338 = vmatpush.msra.mxu0 0.0
    %1339 = vmatpush.msra.mxu0 0.0
    %1340 = vmatpush.msra.mxu0 0.0
    %1341 = vmatpush.msra.mxu0 0.0
    %1342 = vmatpush.msra.mxu0 0.0
    %1343 = vmatpush.msra.mxu0 %v1318
    %1344 = vmatpush.msra.mxu0 %v1317
    %1345 = vmatpush.msra.mxu0 %v1316
    %1346 = vmatpush.msra.mxu0 %v1315
    %1347 = vmatmul.f32.gmra.mxu0 %v170
    %v1348 = vpop.f32.mrf.mxu0
    %v1349 = vadd.f32 %v1329, %v1348
    %1350 = vmatmul.f32.gmra.mxu0 %v173
    %v1351 = vpop.f32.mrf.mxu0
    %v1352 = vadd.f32 %v1329, %v1351
    %1353 = vdwg.mxu0
    %1355 = vrot.lane.b32.xlu0 %v1349, 96
    %v1356 = vpop.permute.xlu0 %1355
    %v1357 = vsel %vm201, %v1349, 0
    %v1359 = vsel %vm201, %v1356, 0
    %1361 = vmatpush.xpose.msra.mxu0 0.0
    %1362 = vmatpush.xpose.msra.mxu0 0.0
    %1363 = vmatpush.xpose.msra.mxu0 0.0
    %1364 = vmatpush.xpose.msra.mxu0 0.0
    %1365 = vmatpush.xpose.msra.mxu0 0.0
    %1366 = vmatpush.xpose.msra.mxu0 0.0
    %1367 = vmatpush.xpose.msra.mxu0 0.0
    %1368 = vmatpush.xpose.msra.mxu0 0.0
    %1369 = vmatpush.xpose.msra.mxu0 0.0
    %1370 = vmatpush.xpose.msra.mxu0 0.0
    %1371 = vmatpush.xpose.msra.mxu0 0.0
    %1372 = vmatpush.xpose.msra.mxu0 0.0
    %1373 = vmatpush.xpose.msra.mxu0 0.0
    %1374 = vmatpush.xpose.msra.mxu0 0.0
    %1375 = vmatpush.xpose.msra.mxu0 0.0
    %1376 = vmatpush.xpose.msra.mxu0 %v1359
    %1377 = vmatmul.f32.gmra.mxu0 %v1357
    %v1378 = vpop.f32.mrf.mxu0
    %v1379 = vadd.f32 0.0, %v1378
    %1380 = vdwg.mxu0
    %1382 = vrot.lane.b32.xlu0 %v1352, 96
    %v1383 = vpop.permute.xlu0 %1382
    %v1384 = vsel %vm201, %v1352, 0
    %v1386 = vsel %vm201, %v1383, 0
    %1388 = vmatpush.xpose.msra.mxu0 0.0
    %1389 = vmatpush.xpose.msra.mxu0 0.0
    %1390 = vmatpush.xpose.msra.mxu0 0.0
    %1391 = vmatpush.xpose.msra.mxu0 0.0
    %1392 = vmatpush.xpose.msra.mxu0 0.0
    %1393 = vmatpush.xpose.msra.mxu0 0.0
    %1394 = vmatpush.xpose.msra.mxu0 0.0
    %1395 = vmatpush.xpose.msra.mxu0 0.0
    %1396 = vmatpush.xpose.msra.mxu0 0.0
    %1397 = vmatpush.xpose.msra.mxu0 0.0
    %1398 = vmatpush.xpose.msra.mxu0 0.0
    %1399 = vmatpush.xpose.msra.mxu0 0.0
    %1400 = vmatpush.xpose.msra.mxu0 0.0
    %1401 = vmatpush.xpose.msra.mxu0 0.0
    %1402 = vmatpush.xpose.msra.mxu0 0.0
    %1403 = vmatpush.xpose.msra.mxu0 %v1386
    %1404 = vmatmul.f32.gmra.mxu0 %v1384
    %v1405 = vpop.f32.mrf.mxu0
    %v1406 = vadd.f32 0.0, %v1405
    %1407 = vdwg.mxu0
    %v1408 = vsel %vm253, %v1379, -inf
    %1409 = vmax.xlane.f32.xlu0 %v1408
    %v1410 = vpop.xlane.xlu0 %1409
    %v1411 = vsel %vm253, %v1406, -inf
    %1412 = vmax.xlane.f32.xlu0 %v1411
    %v1413 = vpop.xlane.xlu0 %1412
    %v1414 = vsub.f32 %v1379, %v1410
    %v1415 = vsub.f32 %v1406, %v1413
    %v1416 = vmul.f32 %v1414, 1.442695
    %v1417 = vpow.pop %v1416
    %v1418 = vmul.f32 %v1415, 1.442695
    %v1419 = vpow.pop %v1418
    %v1420 = vsel %vm253, %v1417, 0.0
    %1421 = vadd.xlane.f32.xlu0 %v1420
    %v1422 = vpop.xlane.xlu0 %1421
    %v1423 = vsel %vm253, %v1419, 0.0
    %1424 = vadd.xlane.f32.xlu0 %v1423
    %v1425 = vpop.xlane.xlu0 %1424
    %v1426 = vrcp.pop %v1422
    %v1427 = vrcp.pop %v1425
    %v1428 = vmul.f32 %v1417, %v1426
    %v1429 = vmul.f32 %v1419, %v1427
    %1430 = vrot.lane.b32.xlu0 %v1349, 64
    %v1431 = vpop.permute.xlu0 %1430
    %v1434 = vsel %vm253, %v1428, 0
    %1436 = vmatpush.msra.mxu0 0.0
    %1437 = vmatpush.msra.mxu0 0.0
    %1438 = vmatpush.msra.mxu0 0.0
    %1439 = vmatpush.msra.mxu0 0.0
    %1440 = vmatpush.msra.mxu0 0.0
    %1441 = vmatpush.msra.mxu0 0.0
    %1442 = vmatpush.msra.mxu0 0.0
    %1443 = vmatpush.msra.mxu0 0.0
    %1444 = vmatpush.msra.mxu0 0.0
    %1445 = vmatpush.msra.mxu0 0.0
    %1446 = vmatpush.msra.mxu0 0.0
    %1447 = vmatpush.msra.mxu0 0.0
    %1448 = vmatpush.msra.mxu0 0.0
    %1449 = vmatpush.msra.mxu0 0.0
    %1450 = vmatpush.msra.mxu0 0.0
    %1451 = vmatpush.msra.mxu0 %v1431
    %1452 = vmatmul.f32.gmra.mxu0 %v1434
    %v1453 = vpop.f32.mrf.mxu0
    %v1454 = vadd.f32 0.0, %v1453
    %1455 = vdwg.mxu0
    %1456 = vrot.lane.b32.xlu0 %v1352, 64
    %v1457 = vpop.permute.xlu0 %1456
    %v1460 = vsel %vm253, %v1429, 0
    %1462 = vmatpush.msra.mxu0 0.0
    %1463 = vmatpush.msra.mxu0 0.0
    %1464 = vmatpush.msra.mxu0 0.0
    %1465 = vmatpush.msra.mxu0 0.0
    %1466 = vmatpush.msra.mxu0 0.0
    %1467 = vmatpush.msra.mxu0 0.0
    %1468 = vmatpush.msra.mxu0 0.0
    %1469 = vmatpush.msra.mxu0 0.0
    %1470 = vmatpush.msra.mxu0 0.0
    %1471 = vmatpush.msra.mxu0 0.0
    %1472 = vmatpush.msra.mxu0 0.0
    %1473 = vmatpush.msra.mxu0 0.0
    %1474 = vmatpush.msra.mxu0 0.0
    %1475 = vmatpush.msra.mxu0 0.0
    %1476 = vmatpush.msra.mxu0 0.0
    %1477 = vmatpush.msra.mxu0 %v1457
    %1478 = vmatmul.f32.gmra.mxu0 %v1460
    %v1479 = vpop.f32.mrf.mxu0
    %v1480 = vadd.f32 0.0, %v1479
    %1481 = vdwg.mxu0
    %1482 = vrot.lane.b32.xlu0 %v1349, 112
    %v1483 = vpop.permute.xlu0 %1482
    %1484 = vrot.lane.b32.xlu0 %v1349, 80
    %v1485 = vpop.permute.xlu0 %1484
    %v1486 = vsel %vm201, %v1483, 0
    %v1488 = vsel %vm201, %v1485, 0
    %1490 = vmatpush.xpose.msra.mxu0 0.0
    %1491 = vmatpush.xpose.msra.mxu0 0.0
    %1492 = vmatpush.xpose.msra.mxu0 0.0
    %1493 = vmatpush.xpose.msra.mxu0 0.0
    %1494 = vmatpush.xpose.msra.mxu0 0.0
    %1495 = vmatpush.xpose.msra.mxu0 0.0
    %1496 = vmatpush.xpose.msra.mxu0 0.0
    %1497 = vmatpush.xpose.msra.mxu0 0.0
    %1498 = vmatpush.xpose.msra.mxu0 0.0
    %1499 = vmatpush.xpose.msra.mxu0 0.0
    %1500 = vmatpush.xpose.msra.mxu0 0.0
    %1501 = vmatpush.xpose.msra.mxu0 0.0
    %1502 = vmatpush.xpose.msra.mxu0 0.0
    %1503 = vmatpush.xpose.msra.mxu0 0.0
    %1504 = vmatpush.xpose.msra.mxu0 0.0
    %1505 = vmatpush.xpose.msra.mxu0 %v1488
    %1506 = vmatmul.f32.gmra.mxu0 %v1486
    %v1507 = vpop.f32.mrf.mxu0
    %v1508 = vadd.f32 0.0, %v1507
    %1509 = vdwg.mxu0
    %1510 = vrot.lane.b32.xlu0 %v1352, 112
    %v1511 = vpop.permute.xlu0 %1510
    %1512 = vrot.lane.b32.xlu0 %v1352, 80
    %v1513 = vpop.permute.xlu0 %1512
    %v1514 = vsel %vm201, %v1511, 0
    %v1516 = vsel %vm201, %v1513, 0
    %1518 = vmatpush.xpose.msra.mxu0 0.0
    %1519 = vmatpush.xpose.msra.mxu0 0.0
    %1520 = vmatpush.xpose.msra.mxu0 0.0
    %1521 = vmatpush.xpose.msra.mxu0 0.0
    %1522 = vmatpush.xpose.msra.mxu0 0.0
    %1523 = vmatpush.xpose.msra.mxu0 0.0
    %1524 = vmatpush.xpose.msra.mxu0 0.0
    %1525 = vmatpush.xpose.msra.mxu0 0.0
    %1526 = vmatpush.xpose.msra.mxu0 0.0
    %1527 = vmatpush.xpose.msra.mxu0 0.0
    %1528 = vmatpush.xpose.msra.mxu0 0.0
    %1529 = vmatpush.xpose.msra.mxu0 0.0
    %1530 = vmatpush.xpose.msra.mxu0 0.0
    %1531 = vmatpush.xpose.msra.mxu0 0.0
    %1532 = vmatpush.xpose.msra.mxu0 0.0
    %1533 = vmatpush.xpose.msra.mxu0 %v1516
    %1534 = vmatmul.f32.gmra.mxu0 %v1514
    %v1535 = vpop.f32.mrf.mxu0
    %v1536 = vadd.f32 0.0, %v1535
    %1537 = vdwg.mxu0
    %v1538 = vsel %vm253, %v1508, -inf
    %1539 = vmax.xlane.f32.xlu0 %v1538
    %v1540 = vpop.xlane.xlu0 %1539
    %v1541 = vsel %vm253, %v1536, -inf
    %1542 = vmax.xlane.f32.xlu0 %v1541
    %v1543 = vpop.xlane.xlu0 %1542
    %v1544 = vsub.f32 %v1508, %v1540
    %v1545 = vsub.f32 %v1536, %v1543
    %v1546 = vmul.f32 %v1544, 1.442695
    %v1547 = vpow.pop %v1546
    %v1548 = vmul.f32 %v1545, 1.442695
    %v1549 = vpow.pop %v1548
    %v1550 = vsel %vm253, %v1547, 0.0
    %1551 = vadd.xlane.f32.xlu0 %v1550
    %v1552 = vpop.xlane.xlu0 %1551
    %v1553 = vsel %vm253, %v1549, 0.0
    %1554 = vadd.xlane.f32.xlu0 %v1553
    %v1555 = vpop.xlane.xlu0 %1554
    %v1556 = vrcp.pop %v1552
    %v1557 = vrcp.pop %v1555
    %v1558 = vmul.f32 %v1547, %v1556
    %v1559 = vmul.f32 %v1549, %v1557
    %1560 = vrot.lane.b32.xlu0 %v1349, 48
    %v1561 = vpop.permute.xlu0 %1560
    %v1564 = vsel %vm253, %v1558, 0
    %1566 = vmatpush.msra.mxu0 0.0
    %1567 = vmatpush.msra.mxu0 0.0
    %1568 = vmatpush.msra.mxu0 0.0
    %1569 = vmatpush.msra.mxu0 0.0
    %1570 = vmatpush.msra.mxu0 0.0
    %1571 = vmatpush.msra.mxu0 0.0
    %1572 = vmatpush.msra.mxu0 0.0
    %1573 = vmatpush.msra.mxu0 0.0
    %1574 = vmatpush.msra.mxu0 0.0
    %1575 = vmatpush.msra.mxu0 0.0
    %1576 = vmatpush.msra.mxu0 0.0
    %1577 = vmatpush.msra.mxu0 0.0
    %1578 = vmatpush.msra.mxu0 0.0
    %1579 = vmatpush.msra.mxu0 0.0
    %1580 = vmatpush.msra.mxu0 0.0
    %1581 = vmatpush.msra.mxu0 %v1561
    %1582 = vmatmul.f32.gmra.mxu0 %v1564
    %v1583 = vpop.f32.mrf.mxu0
    %v1584 = vadd.f32 0.0, %v1583
    %1585 = vdwg.mxu0
    %1586 = vrot.lane.b32.xlu0 %v1352, 48
    %v1587 = vpop.permute.xlu0 %1586
    %v1590 = vsel %vm253, %v1559, 0
    %1592 = vmatpush.msra.mxu0 0.0
    %1593 = vmatpush.msra.mxu0 0.0
    %1594 = vmatpush.msra.mxu0 0.0
    %1595 = vmatpush.msra.mxu0 0.0
    %1596 = vmatpush.msra.mxu0 0.0
    %1597 = vmatpush.msra.mxu0 0.0
    %1598 = vmatpush.msra.mxu0 0.0
    %1599 = vmatpush.msra.mxu0 0.0
    %1600 = vmatpush.msra.mxu0 0.0
    %1601 = vmatpush.msra.mxu0 0.0
    %1602 = vmatpush.msra.mxu0 0.0
    %1603 = vmatpush.msra.mxu0 0.0
    %1604 = vmatpush.msra.mxu0 0.0
    %1605 = vmatpush.msra.mxu0 0.0
    %1606 = vmatpush.msra.mxu0 0.0
    %1607 = vmatpush.msra.mxu0 %v1587
    %1608 = vmatmul.f32.gmra.mxu0 %v1590
    %v1609 = vpop.f32.mrf.mxu0
    %v1610 = vadd.f32 0.0, %v1609
    %1611 = vdwg.mxu0
    %1614 = vrot.lane.b32.xlu0 %v1584, 16
    %v1615 = vpop.permute.xlu0 %1614
    %1616 = vrot.lane.b32.xlu0 %v1610, 16
    %v1617 = vpop.permute.xlu0 %1616
    %v1620 = vsel %vm201, %v1454, %v1615
    %v1621 = vsel %vm201, %v1480, %v1617
    %v1623 = vperm.slane %v1327, 0
    %v1626 = vsel %vm168, %v1620, 0
    %v1629 = vsel %vm168, %v1621, 0
    %1631 = vmatpush.msra.mxu0 0.0
    %1632 = vmatpush.msra.mxu0 0.0
    %1633 = vmatpush.msra.mxu0 0.0
    %1634 = vmatpush.msra.mxu0 0.0
    %1635 = vmatpush.msra.mxu0 0.0
    %1636 = vmatpush.msra.mxu0 0.0
    %1637 = vmatpush.msra.mxu0 0.0
    %1638 = vmatpush.msra.mxu0 0.0
    %1639 = vmatpush.msra.mxu0 0.0
    %1640 = vmatpush.msra.mxu0 0.0
    %1641 = vmatpush.msra.mxu0 0.0
    %1642 = vmatpush.msra.mxu0 0.0
    %1643 = vmatpush.msra.mxu0 %v1325
    %1644 = vmatpush.msra.mxu0 %v1324
    %1645 = vmatpush.msra.mxu0 %v1323
    %1646 = vmatpush.msra.mxu0 %v1322
    %1647 = vmatmul.f32.gmra.mxu0 %v1626
    %v1648 = vpop.f32.mrf.mxu0
    %v1649 = vadd.f32 %v1623, %v1648
    %1650 = vmatmul.f32.gmra.mxu0 %v1629
    %v1651 = vpop.f32.mrf.mxu0
    %v1652 = vadd.f32 %v1623, %v1651
    %1653 = vdwg.mxu0
    %v1654 = vadd.f32 %v153, %v1649
    %v1655 = vadd.f32 %v154, %v1652
    %s1656 = scalar_lea.vmem [#allocation10], 4
    %v1657 = vld [vmem:[%s1656] sm:$0x1]
    %s1658 = scalar_lea.vmem [#allocation12], 4
    %v1659 = vld [vmem:[%s1658] sm:$0x1]
    %v1660 = vsel %vm168, %v1654, 0.0
    %1661 = vadd.xlane.f32.xlu0 %v1660
    %v1662 = vpop.xlane.xlu0 %1661
    %v1663 = vsel %vm168, %v1655, 0.0
    %1664 = vadd.xlane.f32.xlu0 %v1663
    %v1665 = vpop.xlane.xlu0 %1664
    %v1666 = vmul.f32 %v1662, %v516
    %v1667 = vmul.f32 %v1665, %v516
    %v1668 = vsub.f32 %v1654, %v1666
    %v1669 = vsub.f32 %v1655, %v1667
    %v1670 = vmul.f32 %v1668, %v1668
    %v1671 = vmul.f32 %v1669, %v1669
    %v1672 = vsel %vm168, %v1670, 0.0
    %1673 = vadd.xlane.f32.xlu0 %v1672
    %v1674 = vpop.xlane.xlu0 %1673
    %v1675 = vsel %vm168, %v1671, 0.0
    %1676 = vadd.xlane.f32.xlu0 %v1675
    %v1677 = vpop.xlane.xlu0 %1676
    %v1678 = vmul.f32 %v1674, %v516
    %v1679 = vmul.f32 %v1677, %v516
    %v1680 = vadd.f32 %v1678, 1e-05
    %v1681 = vadd.f32 %v1679, 1e-05
    %v1682 = vrsqrt.pop %v1680
    %v1683 = vmul.f32 %v1682, %v1680
    %v1684 = vmul.f32 %v1683, %v1682
    %v1685 = vmul.f32 0.5, %v1684
    %v1686 = vsub.f32 1.5, %v1685
    %v1687 = vmul.f32 %v1682, %v1686
    %vm1688 = vweird.f32 %v1680
    %vm1689 = vweird.f32 %v1682
    %vm1690 = vmor %vm1688, %vm1689
    %v1691 = vsel %vm1690, %v1682, %v1687
    %v1692 = vrsqrt.pop %v1681
    %v1693 = vmul.f32 %v1692, %v1681
    %v1694 = vmul.f32 %v1693, %v1692
    %v1695 = vmul.f32 0.5, %v1694
    %v1696 = vsub.f32 1.5, %v1695
    %v1697 = vmul.f32 %v1692, %v1696
    %vm1698 = vweird.f32 %v1681
    %vm1699 = vweird.f32 %v1692
    %vm1700 = vmor %vm1698, %vm1699
    %v1701 = vsel %vm1700, %v1692, %v1697
    %v1702 = vmul.f32 %v1668, %v1691
    %v1703 = vmul.f32 %v1669, %v1701
    %v1705 = vperm.slane %v1657, 0
    %v1707 = vmul.f32 %v1702, %v1705
    %v1708 = vmul.f32 %v1703, %v1705
    %v1710 = vperm.slane %v1659, 0
    %v1712 = vadd.f32 %v1707, %v1710
    %v1713 = vadd.f32 %v1708, %v1710
    %s1714 = scalar_lea.vmem %s1, 128
    %v1715 = vld [vmem:[%s1714] sm:$0xff]
    %v1716 = vld [vmem:[%s1714 + $0x8] sm:$0xff]
    %v1717 = vld [vmem:[%s1714 + $0x10] sm:$0xff]
    %v1718 = vld [vmem:[%s1714 + $0x18] sm:$0xff]
    %s1719 = scalar_lea.vmem [#allocation2], 4
    %v1720 = vld [vmem:[%s1719] sm:$0x1]
    %s1721 = scalar_lea.vmem %s3, 128
    %v1722 = vld [vmem:[%s1721] sm:$0xff]
    %v1723 = vld [vmem:[%s1721 + $0x8] sm:$0xff]
    %v1724 = vld [vmem:[%s1721 + $0x10] sm:$0xff]
    %v1725 = vld [vmem:[%s1721 + $0x18] sm:$0xff]
    %s1726 = scalar_lea.vmem [#allocation4], 4
    %v1727 = vld [vmem:[%s1726] sm:$0x1]
    %v1729 = vperm.slane %v1720, 0
    %v1732 = vsel %vm168, %v1712, 0
    %v1735 = vsel %vm168, %v1713, 0
    %1737 = vmatpush.msra.mxu0 0.0
    %1738 = vmatpush.msra.mxu0 0.0
    %1739 = vmatpush.msra.mxu0 0.0
    %1740 = vmatpush.msra.mxu0 0.0
    %1741 = vmatpush.msra.mxu0 0.0
    %1742 = vmatpush.msra.mxu0 0.0
    %1743 = vmatpush.msra.mxu0 0.0
    %1744 = vmatpush.msra.mxu0 0.0
    %1745 = vmatpush.msra.mxu0 0.0
    %1746 = vmatpush.msra.mxu0 0.0
    %1747 = vmatpush.msra.mxu0 0.0
    %1748 = vmatpush.msra.mxu0 0.0
    %1749 = vmatpush.msra.mxu0 %v1718
    %1750 = vmatpush.msra.mxu0 %v1717
    %1751 = vmatpush.msra.mxu0 %v1716
    %1752 = vmatpush.msra.mxu0 %v1715
    %1753 = vmatmul.f32.gmra.mxu0 %v1732
    %v1754 = vpop.f32.mrf.mxu0
    %v1755 = vadd.f32 %v1729, %v1754
    %1756 = vmatmul.f32.gmra.mxu0 %v1735
    %v1757 = vpop.f32.mrf.mxu0
    %v1758 = vadd.f32 %v1729, %v1757
    %1759 = vdwg.mxu0
    %1764 = vrot.lane.b32.xlu0 %v1715, 96
    %v1765 = vpop.permute.xlu0 %1764
    %1766 = vrot.lane.b32.xlu0 %v1716, 96
    %v1767 = vpop.permute.xlu0 %1766
    %1768 = vrot.lane.b32.xlu0 %v1717, 96
    %v1769 = vpop.permute.xlu0 %1768
    %1770 = vrot.lane.b32.xlu0 %v1718, 96
    %v1771 = vpop.permute.xlu0 %1770
    %1776 = vrot.lane.b32.xlu0 %v1729, 96
    %v1777 = vpop.permute.xlu0 %1776
    %v1780 = vsel %vm168, %v1312, 0
    %v1783 = vsel %vm168, %v1313, 0
    %1785 = vmatpush.msra.mxu0 0.0
    %1786 = vmatpush.msra.mxu0 0.0
    %1787 = vmatpush.msra.mxu0 0.0
    %1788 = vmatpush.msra.mxu0 0.0
    %1789 = vmatpush.msra.mxu0 0.0
    %1790 = vmatpush.msra.mxu0 0.0
    %1791 = vmatpush.msra.mxu0 0.0
    %1792 = vmatpush.msra.mxu0 0.0
    %1793 = vmatpush.msra.mxu0 0.0
    %1794 = vmatpush.msra.mxu0 0.0
    %1795 = vmatpush.msra.mxu0 0.0
    %1796 = vmatpush.msra.mxu0 0.0
    %1797 = vmatpush.msra.mxu0 %v1771
    %1798 = vmatpush.msra.mxu0 %v1769
    %1799 = vmatpush.msra.mxu0 %v1767
    %1800 = vmatpush.msra.mxu0 %v1765
    %1801 = vmatmul.f32.gmra.mxu0 %v1780
    %v1802 = vpop.f32.mrf.mxu0
    %v1803 = vadd.f32 %v1777, %v1802
    %1804 = vmatmul.f32.gmra.mxu0 %v1783
    %v1805 = vpop.f32.mrf.mxu0
    %v1806 = vadd.f32 %v1777, %v1805
    %1807 = vdwg.mxu0
    %v1809 = vsel %vm201, %v1755, 0
    %v1812 = vsel %vm201, %v1803, 0
    %1814 = vmatpush.xpose.msra.mxu0 0.0
    %1815 = vmatpush.xpose.msra.mxu0 0.0
    %1816 = vmatpush.xpose.msra.mxu0 0.0
    %1817 = vmatpush.xpose.msra.mxu0 0.0
    %1818 = vmatpush.xpose.msra.mxu0 0.0
    %1819 = vmatpush.xpose.msra.mxu0 0.0
    %1820 = vmatpush.xpose.msra.mxu0 0.0
    %1821 = vmatpush.xpose.msra.mxu0 0.0
    %1822 = vmatpush.xpose.msra.mxu0 0.0
    %1823 = vmatpush.xpose.msra.mxu0 0.0
    %1824 = vmatpush.xpose.msra.mxu0 0.0
    %1825 = vmatpush.xpose.msra.mxu0 0.0
    %1826 = vmatpush.xpose.msra.mxu0 0.0
    %1827 = vmatpush.xpose.msra.mxu0 0.0
    %1828 = vmatpush.xpose.msra.mxu0 0.0
    %1829 = vmatpush.xpose.msra.mxu0 %v1812
    %1830 = vmatmul.f32.gmra.mxu0 %v1809
    %v1831 = vpop.f32.mrf.mxu0
    %v1832 = vadd.f32 0.0, %v1831
    %1833 = vdwg.mxu0
    %v1835 = vsel %vm201, %v1758, 0
    %v1838 = vsel %vm201, %v1806, 0
    %1840 = vmatpush.xpose.msra.mxu0 0.0
    %1841 = vmatpush.xpose.msra.mxu0 0.0
    %1842 = vmatpush.xpose.msra.mxu0 0.0
    %1843 = vmatpush.xpose.msra.mxu0 0.0
    %1844 = vmatpush.xpose.msra.mxu0 0.0
    %1845 = vmatpush.xpose.msra.mxu0 0.0
    %1846 = vmatpush.xpose.msra.mxu0 0.0
    %1847 = vmatpush.xpose.msra.mxu0 0.0
    %1848 = vmatpush.xpose.msra.mxu0 0.0
    %1849 = vmatpush.xpose.msra.mxu0 0.0
    %1850 = vmatpush.xpose.msra.mxu0 0.0
    %1851 = vmatpush.xpose.msra.mxu0 0.0
    %1852 = vmatpush.xpose.msra.mxu0 0.0
    %1853 = vmatpush.xpose.msra.mxu0 0.0
    %1854 = vmatpush.xpose.msra.mxu0 0.0
    %1855 = vmatpush.xpose.msra.mxu0 %v1838
    %1856 = vmatmul.f32.gmra.mxu0 %v1835
    %v1857 = vpop.f32.mrf.mxu0
    %v1858 = vadd.f32 0.0, %v1857
    %1859 = vdwg.mxu0
    %v1860 = vsel %vm253, %v1832, -inf
    %1861 = vmax.xlane.f32.xlu0 %v1860
    %v1862 = vpop.xlane.xlu0 %1861
    %v1863 = vsel %vm253, %v1858, -inf
    %1864 = vmax.xlane.f32.xlu0 %v1863
    %v1865 = vpop.xlane.xlu0 %1864
    %v1866 = vsub.f32 %v1832, %v1862
    %v1867 = vsub.f32 %v1858, %v1865
    %v1868 = vmul.f32 %v1866, 1.442695
    %v1869 = vpow.pop %v1868
    %v1870 = vmul.f32 %v1867, 1.442695
    %v1871 = vpow.pop %v1870
    %v1872 = vsel %vm253, %v1869, 0.0
    %1873 = vadd.xlane.f32.xlu0 %v1872
    %v1874 = vpop.xlane.xlu0 %1873
    %v1875 = vsel %vm253, %v1871, 0.0
    %1876 = vadd.xlane.f32.xlu0 %v1875
    %v1877 = vpop.xlane.xlu0 %1876
    %v1878 = vrcp.pop %v1874
    %v1879 = vrcp.pop %v1877
    %v1880 = vmul.f32 %v1869, %v1878
    %v1881 = vmul.f32 %v1871, %v1879
    %1882 = vrot.lane.b32.xlu0 %v1803, 96
    %v1883 = vpop.permute.xlu0 %1882
    %v1886 = vsel %vm253, %v1880, 0
    %1888 = vmatpush.msra.mxu0 0.0
    %1889 = vmatpush.msra.mxu0 0.0
    %1890 = vmatpush.msra.mxu0 0.0
    %1891 = vmatpush.msra.mxu0 0.0
    %1892 = vmatpush.msra.mxu0 0.0
    %1893 = vmatpush.msra.mxu0 0.0
    %1894 = vmatpush.msra.mxu0 0.0
    %1895 = vmatpush.msra.mxu0 0.0
    %1896 = vmatpush.msra.mxu0 0.0
    %1897 = vmatpush.msra.mxu0 0.0
    %1898 = vmatpush.msra.mxu0 0.0
    %1899 = vmatpush.msra.mxu0 0.0
    %1900 = vmatpush.msra.mxu0 0.0
    %1901 = vmatpush.msra.mxu0 0.0
    %1902 = vmatpush.msra.mxu0 0.0
    %1903 = vmatpush.msra.mxu0 %v1883
    %1904 = vmatmul.f32.gmra.mxu0 %v1886
    %v1905 = vpop.f32.mrf.mxu0
    %v1906 = vadd.f32 0.0, %v1905
    %1907 = vdwg.mxu0
    %1908 = vrot.lane.b32.xlu0 %v1806, 96
    %v1909 = vpop.permute.xlu0 %1908
    %v1912 = vsel %vm253, %v1881, 0
    %1914 = vmatpush.msra.mxu0 0.0
    %1915 = vmatpush.msra.mxu0 0.0
    %1916 = vmatpush.msra.mxu0 0.0
    %1917 = vmatpush.msra.mxu0 0.0
    %1918 = vmatpush.msra.mxu0 0.0
    %1919 = vmatpush.msra.mxu0 0.0
    %1920 = vmatpush.msra.mxu0 0.0
    %1921 = vmatpush.msra.mxu0 0.0
    %1922 = vmatpush.msra.mxu0 0.0
    %1923 = vmatpush.msra.mxu0 0.0
    %1924 = vmatpush.msra.mxu0 0.0
    %1925 = vmatpush.msra.mxu0 0.0
    %1926 = vmatpush.msra.mxu0 0.0
    %1927 = vmatpush.msra.mxu0 0.0
    %1928 = vmatpush.msra.mxu0 0.0
    %1929 = vmatpush.msra.mxu0 %v1909
    %1930 = vmatmul.f32.gmra.mxu0 %v1912
    %v1931 = vpop.f32.mrf.mxu0
    %v1932 = vadd.f32 0.0, %v1931
    %1933 = vdwg.mxu0
    %1934 = vrot.lane.b32.xlu0 %v1755, 112
    %v1935 = vpop.permute.xlu0 %1934
    %1936 = vrot.lane.b32.xlu0 %v1803, 112
    %v1937 = vpop.permute.xlu0 %1936
    %v1938 = vsel %vm201, %v1935, 0
    %v1940 = vsel %vm201, %v1937, 0
    %1942 = vmatpush.xpose.msra.mxu0 0.0
    %1943 = vmatpush.xpose.msra.mxu0 0.0
    %1944 = vmatpush.xpose.msra.mxu0 0.0
    %1945 = vmatpush.xpose.msra.mxu0 0.0
    %1946 = vmatpush.xpose.msra.mxu0 0.0
    %1947 = vmatpush.xpose.msra.mxu0 0.0
    %1948 = vmatpush.xpose.msra.mxu0 0.0
    %1949 = vmatpush.xpose.msra.mxu0 0.0
    %1950 = vmatpush.xpose.msra.mxu0 0.0
    %1951 = vmatpush.xpose.msra.mxu0 0.0
    %1952 = vmatpush.xpose.msra.mxu0 0.0
    %1953 = vmatpush.xpose.msra.mxu0 0.0
    %1954 = vmatpush.xpose.msra.mxu0 0.0
    %1955 = vmatpush.xpose.msra.mxu0 0.0
    %1956 = vmatpush.xpose.msra.mxu0 0.0
    %1957 = vmatpush.xpose.msra.mxu0 %v1940
    %1958 = vmatmul.f32.gmra.mxu0 %v1938
    %v1959 = vpop.f32.mrf.mxu0
    %v1960 = vadd.f32 0.0, %v1959
    %1961 = vdwg.mxu0
    %1962 = vrot.lane.b32.xlu0 %v1758, 112
    %v1963 = vpop.permute.xlu0 %1962
    %1964 = vrot.lane.b32.xlu0 %v1806, 112
    %v1965 = vpop.permute.xlu0 %1964
    %v1966 = vsel %vm201, %v1963, 0
    %v1968 = vsel %vm201, %v1965, 0
    %1970 = vmatpush.xpose.msra.mxu0 0.0
    %1971 = vmatpush.xpose.msra.mxu0 0.0
    %1972 = vmatpush.xpose.msra.mxu0 0.0
    %1973 = vmatpush.xpose.msra.mxu0 0.0
    %1974 = vmatpush.xpose.msra.mxu0 0.0
    %1975 = vmatpush.xpose.msra.mxu0 0.0
    %1976 = vmatpush.xpose.msra.mxu0 0.0
    %1977 = vmatpush.xpose.msra.mxu0 0.0
    %1978 = vmatpush.xpose.msra.mxu0 0.0
    %1979 = vmatpush.xpose.msra.mxu0 0.0
    %1980 = vmatpush.xpose.msra.mxu0 0.0
    %1981 = vmatpush.xpose.msra.mxu0 0.0
    %1982 = vmatpush.xpose.msra.mxu0 0.0
    %1983 = vmatpush.xpose.msra.mxu0 0.0
    %1984 = vmatpush.xpose.msra.mxu0 0.0
    %1985 = vmatpush.xpose.msra.mxu0 %v1968
    %1986 = vmatmul.f32.gmra.mxu0 %v1966
    %v1987 = vpop.f32.mrf.mxu0
    %v1988 = vadd.f32 0.0, %v1987
    %1989 = vdwg.mxu0
    %v1990 = vsel %vm253, %v1960, -inf
    %1991 = vmax.xlane.f32.xlu0 %v1990
    %v1992 = vpop.xlane.xlu0 %1991
    %v1993 = vsel %vm253, %v1988, -inf
    %1994 = vmax.xlane.f32.xlu0 %v1993
    %v1995 = vpop.xlane.xlu0 %1994
    %v1996 = vsub.f32 %v1960, %v1992
    %v1997 = vsub.f32 %v1988, %v1995
    %v1998 = vmul.f32 %v1996, 1.442695
    %v1999 = vpow.pop %v1998
    %v2000 = vmul.f32 %v1997, 1.442695
    %v2001 = vpow.pop %v2000
    %v2002 = vsel %vm253, %v1999, 0.0
    %2003 = vadd.xlane.f32.xlu0 %v2002
    %v2004 = vpop.xlane.xlu0 %2003
    %v2005 = vsel %vm253, %v2001, 0.0
    %2006 = vadd.xlane.f32.xlu0 %v2005
    %v2007 = vpop.xlane.xlu0 %2006
    %v2008 = vrcp.pop %v2004
    %v2009 = vrcp.pop %v2007
    %v2010 = vmul.f32 %v1999, %v2008
    %v2011 = vmul.f32 %v2001, %v2009
    %2012 = vrot.lane.b32.xlu0 %v1803, 80
    %v2013 = vpop.permute.xlu0 %2012
    %v2016 = vsel %vm253, %v2010, 0
    %2018 = vmatpush.msra.mxu0 0.0
    %2019 = vmatpush.msra.mxu0 0.0
    %2020 = vmatpush.msra.mxu0 0.0
    %2021 = vmatpush.msra.mxu0 0.0
    %2022 = vmatpush.msra.mxu0 0.0
    %2023 = vmatpush.msra.mxu0 0.0
    %2024 = vmatpush.msra.mxu0 0.0
    %2025 = vmatpush.msra.mxu0 0.0
    %2026 = vmatpush.msra.mxu0 0.0
    %2027 = vmatpush.msra.mxu0 0.0
    %2028 = vmatpush.msra.mxu0 0.0
    %2029 = vmatpush.msra.mxu0 0.0
    %2030 = vmatpush.msra.mxu0 0.0
    %2031 = vmatpush.msra.mxu0 0.0
    %2032 = vmatpush.msra.mxu0 0.0
    %2033 = vmatpush.msra.mxu0 %v2013
    %2034 = vmatmul.f32.gmra.mxu0 %v2016
    %v2035 = vpop.f32.mrf.mxu0
    %v2036 = vadd.f32 0.0, %v2035
    %2037 = vdwg.mxu0
    %2038 = vrot.lane.b32.xlu0 %v1806, 80
    %v2039 = vpop.permute.xlu0 %2038
    %v2042 = vsel %vm253, %v2011, 0
    %2044 = vmatpush.msra.mxu0 0.0
    %2045 = vmatpush.msra.mxu0 0.0
    %2046 = vmatpush.msra.mxu0 0.0
    %2047 = vmatpush.msra.mxu0 0.0
    %2048 = vmatpush.msra.mxu0 0.0
    %2049 = vmatpush.msra.mxu0 0.0
    %2050 = vmatpush.msra.mxu0 0.0
    %2051 = vmatpush.msra.mxu0 0.0
    %2052 = vmatpush.msra.mxu0 0.0
    %2053 = vmatpush.msra.mxu0 0.0
    %2054 = vmatpush.msra.mxu0 0.0
    %2055 = vmatpush.msra.mxu0 0.0
    %2056 = vmatpush.msra.mxu0 0.0
    %2057 = vmatpush.msra.mxu0 0.0
    %2058 = vmatpush.msra.mxu0 0.0
    %2059 = vmatpush.msra.mxu0 %v2039
    %2060 = vmatmul.f32.gmra.mxu0 %v2042
    %v2061 = vpop.f32.mrf.mxu0
    %v2062 = vadd.f32 0.0, %v2061
    %2063 = vdwg.mxu0
    %2066 = vrot.lane.b32.xlu0 %v2036, 16
    %v2067 = vpop.permute.xlu0 %2066
    %2068 = vrot.lane.b32.xlu0 %v2062, 16
    %v2069 = vpop.permute.xlu0 %2068
    %v2072 = vsel %vm201, %v1906, %v2067
    %v2073 = vsel %vm201, %v1932, %v2069
    %v2075 = vperm.slane %v1727, 0
    %v2078 = vsel %vm168, %v2072, 0
    %v2081 = vsel %vm168, %v2073, 0
    %2083 = vmatpush.msra.mxu0 0.0
    %2084 = vmatpush.msra.mxu0 0.0
    %2085 = vmatpush.msra.mxu0 0.0
    %2086 = vmatpush.msra.mxu0 0.0
    %2087 = vmatpush.msra.mxu0 0.0
    %2088 = vmatpush.msra.mxu0 0.0
    %2089 = vmatpush.msra.mxu0 0.0
    %2090 = vmatpush.msra.mxu0 0.0
    %2091 = vmatpush.msra.mxu0 0.0
    %2092 = vmatpush.msra.mxu0 0.0
    %2093 = vmatpush.msra.mxu0 0.0
    %2094 = vmatpush.msra.mxu0 0.0
    %2095 = vmatpush.msra.mxu0 %v1725
    %2096 = vmatpush.msra.mxu0 %v1724
    %2097 = vmatpush.msra.mxu0 %v1723
    %2098 = vmatpush.msra.mxu0 %v1722
    %2099 = vmatmul.f32.gmra.mxu0 %v2078
    %v2100 = vpop.f32.mrf.mxu0
    %v2101 = vadd.f32 %v2075, %v2100
    %2102 = vmatmul.f32.gmra.mxu0 %v2081
    %v2103 = vpop.f32.mrf.mxu0
    %v2104 = vadd.f32 %v2075, %v2103
    %2105 = vdwg.mxu0
    %v2106 = vadd.f32 %v1712, %v2101
    %v2107 = vadd.f32 %v1713, %v2104
    %s2108 = scalar_lea.vmem [#allocation10], 6
    %v2109 = vld [vmem:[%s2108] sm:$0x1]
    %s2110 = scalar_lea.vmem [#allocation12], 6
    %v2111 = vld [vmem:[%s2110] sm:$0x1]
    %v2112 = vsel %vm168, %v2106, 0.0
    %2113 = vadd.xlane.f32.xlu0 %v2112
    %v2114 = vpop.xlane.xlu0 %2113
    %v2115 = vsel %vm168, %v2107, 0.0
    %2116 = vadd.xlane.f32.xlu0 %v2115
    %v2117 = vpop.xlane.xlu0 %2116
    %v2118 = vmul.f32 %v2114, %v516
    %v2119 = vmul.f32 %v2117, %v516
    %v2120 = vsub.f32 %v2106, %v2118
    %v2121 = vsub.f32 %v2107, %v2119
    %v2122 = vmul.f32 %v2120, %v2120
    %v2123 = vmul.f32 %v2121, %v2121
    %v2124 = vsel %vm168, %v2122, 0.0
    %2125 = vadd.xlane.f32.xlu0 %v2124
    %v2126 = vpop.xlane.xlu0 %2125
    %v2127 = vsel %vm168, %v2123, 0.0
    %2128 = vadd.xlane.f32.xlu0 %v2127
    %v2129 = vpop.xlane.xlu0 %2128
    %v2130 = vmul.f32 %v2126, %v516
    %v2131 = vmul.f32 %v2129, %v516
    %v2132 = vadd.f32 %v2130, 1e-05
    %v2133 = vadd.f32 %v2131, 1e-05
    %v2134 = vrsqrt.pop %v2132
    %v2135 = vmul.f32 %v2134, %v2132
    %v2136 = vmul.f32 %v2135, %v2134
    %v2137 = vmul.f32 0.5, %v2136
    %v2138 = vsub.f32 1.5, %v2137
    %v2139 = vmul.f32 %v2134, %v2138
    %vm2140 = vweird.f32 %v2132
    %vm2141 = vweird.f32 %v2134
    %vm2142 = vmor %vm2140, %vm2141
    %v2143 = vsel %vm2142, %v2134, %v2139
    %v2144 = vrsqrt.pop %v2133
    %v2145 = vmul.f32 %v2144, %v2133
    %v2146 = vmul.f32 %v2145, %v2144
    %v2147 = vmul.f32 0.5, %v2146
    %v2148 = vsub.f32 1.5, %v2147
    %v2149 = vmul.f32 %v2144, %v2148
    %vm2150 = vweird.f32 %v2133
    %vm2151 = vweird.f32 %v2144
    %vm2152 = vmor %vm2150, %vm2151
    %v2153 = vsel %vm2152, %v2144, %v2149
    %v2154 = vmul.f32 %v2120, %v2143
    %v2155 = vmul.f32 %v2121, %v2153
    %v2157 = vperm.slane %v2109, 0
    %v2159 = vmul.f32 %v2154, %v2157
    %v2160 = vmul.f32 %v2155, %v2157
    %v2162 = vperm.slane %v2111, 0
    %v2164 = vadd.f32 %v2159, %v2162
    %v2165 = vadd.f32 %v2160, %v2162
    %s2166 = scalar_lea.vmem [#allocation6], 64
    %v2167 = vld [vmem:[%s2166] sm:$0xff]
    %v2168 = vld [vmem:[%s2166 + $0x8] sm:$0xff]
    %v2169 = vld [vmem:[%s2166 + $0x10] sm:$0xff]
    %v2170 = vld [vmem:[%s2166 + $0x18] sm:$0xff]
    %s2171 = scalar_lea.vmem [#allocation7], 2
    %v2172 = vld [vmem:[%s2171] sm:$0x1]
    %s2173 = scalar_lea.vmem %s7, 128
    %v2174 = vld [vmem:[%s2173] sm:$0xff]
    %v2175 = vld [vmem:[%s2173 + $0x8] sm:$0xff]
    %v2176 = vld [vmem:[%s2173 + $0x10] sm:$0xff]
    %v2177 = vld [vmem:[%s2173 + $0x18] sm:$0xff]
    %v2178 = vld [vmem:[%s2173 + $0x20] sm:$0xff]
    %v2179 = vld [vmem:[%s2173 + $0x28] sm:$0xff]
    %v2180 = vld [vmem:[%s2173 + $0x30] sm:$0xff]
    %v2181 = vld [vmem:[%s2173 + $0x38] sm:$0xff]
    %s2182 = scalar_lea.vmem [#allocation9], 2
    %v2183 = vld [vmem:[%s2182] sm:$0x1]
    %v2185 = vperm.slane %v2172, 0
    %v2188 = vsel %vm168, %v2164, 0
    %v2191 = vsel %vm168, %v2165, 0
    %2193 = vmatpush.msra.mxu0 0.0
    %2194 = vmatpush.msra.mxu0 0.0
    %2195 = vmatpush.msra.mxu0 0.0
    %2196 = vmatpush.msra.mxu0 0.0
    %2197 = vmatpush.msra.mxu0 0.0
    %2198 = vmatpush.msra.mxu0 0.0
    %2199 = vmatpush.msra.mxu0 0.0
    %2200 = vmatpush.msra.mxu0 0.0
    %2201 = vmatpush.msra.mxu0 0.0
    %2202 = vmatpush.msra.mxu0 0.0
    %2203 = vmatpush.msra.mxu0 0.0
    %2204 = vmatpush.msra.mxu0 0.0
    %2205 = vmatpush.msra.mxu0 %v2170
    %2206 = vmatpush.msra.mxu0 %v2169
    %2207 = vmatpush.msra.mxu0 %v2168
    %2208 = vmatpush.msra.mxu0 %v2167
    %2209 = vmatmul.f32.gmra.mxu0 %v2188
    %v2210 = vpop.f32.mrf.mxu0
    %v2211 = vadd.f32 %v2185, %v2210
    %2212 = vmatmul.f32.gmra.mxu0 %v2191
    %v2213 = vpop.f32.mrf.mxu0
    %v2214 = vadd.f32 %v2185, %v2213
    %2215 = vdwg.mxu0
    %v2216 = vmax.f32 %v2211, 0.0
    %v2217 = vmax.f32 %v2214, 0.0
    %v2219 = vperm.slane %v2183, 0
    %v2222 = vsel %vm616, %v2216, 0
    %v2225 = vsel %vm616, %v2217, 0
    %2227 = vmatpush.msra.mxu0 0.0
    %2228 = vmatpush.msra.mxu0 0.0
    %2229 = vmatpush.msra.mxu0 0.0
    %2230 = vmatpush.msra.mxu0 0.0
    %2231 = vmatpush.msra.mxu0 0.0
    %2232 = vmatpush.msra.mxu0 0.0
    %2233 = vmatpush.msra.mxu0 0.0
    %2234 = vmatpush.msra.mxu0 0.0
    %2235 = vmatpush.msra.mxu0 %v2181
    %2236 = vmatpush.msra.mxu0 %v2180
    %2237 = vmatpush.msra.mxu0 %v2179
    %2238 = vmatpush.msra.mxu0 %v2178
    %2239 = vmatpush.msra.mxu0 %v2177
    %2240 = vmatpush.msra.mxu0 %v2176
    %2241 = vmatpush.msra.mxu0 %v2175
    %2242 = vmatpush.msra.mxu0 %v2174
    %2243 = vmatmul.f32.gmra.mxu0 %v2222
    %v2244 = vpop.f32.mrf.mxu0
    %v2245 = vadd.f32 %v2219, %v2244
    %2246 = vmatmul.f32.gmra.mxu0 %v2225
    %v2247 = vpop.f32.mrf.mxu0
    %v2248 = vadd.f32 %v2219, %v2247
    %2249 = vdwg.mxu0
    %v2250 = vadd.f32 %v2164, %v2245
    %v2251 = vadd.f32 %v2165, %v2248
    %s2252 = scalar_lea.vmem [#allocation10], 8
    %v2253 = vld [vmem:[%s2252] sm:$0x1]
    %s2254 = scalar_lea.vmem [#allocation12], 8
    %v2255 = vld [vmem:[%s2254] sm:$0x1]
    %v2256 = vsel %vm168, %v2250, 0.0
    %2257 = vadd.xlane.f32.xlu0 %v2256
    %v2258 = vpop.xlane.xlu0 %2257
    %v2259 = vsel %vm168, %v2251, 0.0
    %2260 = vadd.xlane.f32.xlu0 %v2259
    %v2261 = vpop.xlane.xlu0 %2260
    %v2262 = vmul.f32 %v2258, %v516
    %v2263 = vmul.f32 %v2261, %v516
    %v2264 = vsub.f32 %v2250, %v2262
    %v2265 = vsub.f32 %v2251, %v2263
    %v2266 = vmul.f32 %v2264, %v2264
    %v2267 = vmul.f32 %v2265, %v2265
    %v2268 = vsel %vm168, %v2266, 0.0
    %2269 = vadd.xlane.f32.xlu0 %v2268
    %v2270 = vpop.xlane.xlu0 %2269
    %v2271 = vsel %vm168, %v2267, 0.0
    %2272 = vadd.xlane.f32.xlu0 %v2271
    %v2273 = vpop.xlane.xlu0 %2272
    %v2274 = vmul.f32 %v2270, %v516
    %v2275 = vmul.f32 %v2273, %v516
    %v2276 = vadd.f32 %v2274, 1e-05
    %v2277 = vadd.f32 %v2275, 1e-05
    %v2278 = vrsqrt.pop %v2276
    %v2279 = vmul.f32 %v2278, %v2276
    %v2280 = vmul.f32 %v2279, %v2278
    %v2281 = vmul.f32 0.5, %v2280
    %v2282 = vsub.f32 1.5, %v2281
    %v2283 = vmul.f32 %v2278, %v2282
    %vm2284 = vweird.f32 %v2276
    %vm2285 = vweird.f32 %v2278
    %vm2286 = vmor %vm2284, %vm2285
    %v2287 = vsel %vm2286, %v2278, %v2283
    %v2288 = vrsqrt.pop %v2277
    %v2289 = vmul.f32 %v2288, %v2277
    %v2290 = vmul.f32 %v2289, %v2288
    %v2291 = vmul.f32 0.5, %v2290
    %v2292 = vsub.f32 1.5, %v2291
    %v2293 = vmul.f32 %v2288, %v2292
    %vm2294 = vweird.f32 %v2277
    %vm2295 = vweird.f32 %v2288
    %vm2296 = vmor %vm2294, %vm2295
    %v2297 = vsel %vm2296, %v2288, %v2293
    %v2298 = vmul.f32 %v2264, %v2287
    %v2299 = vmul.f32 %v2265, %v2297
    %v2301 = vperm.slane %v2253, 0
    %v2303 = vmul.f32 %v2298, %v2301
    %v2304 = vmul.f32 %v2299, %v2301
    %v2306 = vperm.slane %v2255, 0
    %v2308 = vadd.f32 %v2303, %v2306
    %v2309 = vadd.f32 %v2304, %v2306
    %s2310 = scalar_lea.vmem %s1, 96
    %v2311 = vld [vmem:[%s2310] sm:$0xff]
    %v2312 = vld [vmem:[%s2310 + $0x8] sm:$0xff]
    %v2313 = vld [vmem:[%s2310 + $0x10] sm:$0xff]
    %v2314 = vld [vmem:[%s2310 + $0x18] sm:$0xff]
    %s2315 = scalar_lea.vmem [#allocation2], 3
    %v2316 = vld [vmem:[%s2315] sm:$0x1]
    %s2317 = scalar_lea.vmem %s3, 96
    %v2318 = vld [vmem:[%s2317] sm:$0xff]
    %v2319 = vld [vmem:[%s2317 + $0x8] sm:$0xff]
    %v2320 = vld [vmem:[%s2317 + $0x10] sm:$0xff]
    %v2321 = vld [vmem:[%s2317 + $0x18] sm:$0xff]
    %s2322 = scalar_lea.vmem [#allocation4], 3
    %v2323 = vld [vmem:[%s2322] sm:$0x1]
    %v2325 = vperm.slane %v2316, 0
    %v2328 = vsel %vm168, %v2308, 0
    %v2331 = vsel %vm168, %v2309, 0
    %2333 = vmatpush.msra.mxu0 0.0
    %2334 = vmatpush.msra.mxu0 0.0
    %2335 = vmatpush.msra.mxu0 0.0
    %2336 = vmatpush.msra.mxu0 0.0
    %2337 = vmatpush.msra.mxu0 0.0
    %2338 = vmatpush.msra.mxu0 0.0
    %2339 = vmatpush.msra.mxu0 0.0
    %2340 = vmatpush.msra.mxu0 0.0
    %2341 = vmatpush.msra.mxu0 0.0
    %2342 = vmatpush.msra.mxu0 0.0
    %2343 = vmatpush.msra.mxu0 0.0
    %2344 = vmatpush.msra.mxu0 0.0
    %2345 = vmatpush.msra.mxu0 %v2314
    %2346 = vmatpush.msra.mxu0 %v2313
    %2347 = vmatpush.msra.mxu0 %v2312
    %2348 = vmatpush.msra.mxu0 %v2311
    %2349 = vmatmul.f32.gmra.mxu0 %v2328
    %v2350 = vpop.f32.mrf.mxu0
    %v2351 = vadd.f32 %v2325, %v2350
    %2352 = vmatmul.f32.gmra.mxu0 %v2331
    %v2353 = vpop.f32.mrf.mxu0
    %v2354 = vadd.f32 %v2325, %v2353
    %2355 = vdwg.mxu0
    %2357 = vrot.lane.b32.xlu0 %v2351, 96
    %v2358 = vpop.permute.xlu0 %2357
    %v2359 = vsel %vm201, %v2351, 0
    %v2361 = vsel %vm201, %v2358, 0
    %2363 = vmatpush.xpose.msra.mxu0 0.0
    %2364 = vmatpush.xpose.msra.mxu0 0.0
    %2365 = vmatpush.xpose.msra.mxu0 0.0
    %2366 = vmatpush.xpose.msra.mxu0 0.0
    %2367 = vmatpush.xpose.msra.mxu0 0.0
    %2368 = vmatpush.xpose.msra.mxu0 0.0
    %2369 = vmatpush.xpose.msra.mxu0 0.0
    %2370 = vmatpush.xpose.msra.mxu0 0.0
    %2371 = vmatpush.xpose.msra.mxu0 0.0
    %2372 = vmatpush.xpose.msra.mxu0 0.0
    %2373 = vmatpush.xpose.msra.mxu0 0.0
    %2374 = vmatpush.xpose.msra.mxu0 0.0
    %2375 = vmatpush.xpose.msra.mxu0 0.0
    %2376 = vmatpush.xpose.msra.mxu0 0.0
    %2377 = vmatpush.xpose.msra.mxu0 0.0
    %2378 = vmatpush.xpose.msra.mxu0 %v2361
    %2379 = vmatmul.f32.gmra.mxu0 %v2359
    %v2380 = vpop.f32.mrf.mxu0
    %v2381 = vadd.f32 0.0, %v2380
    %2382 = vdwg.mxu0
    %2384 = vrot.lane.b32.xlu0 %v2354, 96
    %v2385 = vpop.permute.xlu0 %2384
    %v2386 = vsel %vm201, %v2354, 0
    %v2388 = vsel %vm201, %v2385, 0
    %2390 = vmatpush.xpose.msra.mxu0 0.0
    %2391 = vmatpush.xpose.msra.mxu0 0.0
    %2392 = vmatpush.xpose.msra.mxu0 0.0
    %2393 = vmatpush.xpose.msra.mxu0 0.0
    %2394 = vmatpush.xpose.msra.mxu0 0.0
    %2395 = vmatpush.xpose.msra.mxu0 0.0
    %2396 = vmatpush.xpose.msra.mxu0 0.0
    %2397 = vmatpush.xpose.msra.mxu0 0.0
    %2398 = vmatpush.xpose.msra.mxu0 0.0
    %2399 = vmatpush.xpose.msra.mxu0 0.0
    %2400 = vmatpush.xpose.msra.mxu0 0.0
    %2401 = vmatpush.xpose.msra.mxu0 0.0
    %2402 = vmatpush.xpose.msra.mxu0 0.0
    %2403 = vmatpush.xpose.msra.mxu0 0.0
    %2404 = vmatpush.xpose.msra.mxu0 0.0
    %2405 = vmatpush.xpose.msra.mxu0 %v2388
    %2406 = vmatmul.f32.gmra.mxu0 %v2386
    %v2407 = vpop.f32.mrf.mxu0
    %v2408 = vadd.f32 0.0, %v2407
    %2409 = vdwg.mxu0
    %v2410 = vsel %vm253, %v2381, -inf
    %2411 = vmax.xlane.f32.xlu0 %v2410
    %v2412 = vpop.xlane.xlu0 %2411
    %v2413 = vsel %vm253, %v2408, -inf
    %2414 = vmax.xlane.f32.xlu0 %v2413
    %v2415 = vpop.xlane.xlu0 %2414
    %v2416 = vsub.f32 %v2381, %v2412
    %v2417 = vsub.f32 %v2408, %v2415
    %v2418 = vmul.f32 %v2416, 1.442695
    %v2419 = vpow.pop %v2418
    %v2420 = vmul.f32 %v2417, 1.442695
    %v2421 = vpow.pop %v2420
    %v2422 = vsel %vm253, %v2419, 0.0
    %2423 = vadd.xlane.f32.xlu0 %v2422
    %v2424 = vpop.xlane.xlu0 %2423
    %v2425 = vsel %vm253, %v2421, 0.0
    %2426 = vadd.xlane.f32.xlu0 %v2425
    %v2427 = vpop.xlane.xlu0 %2426
    %v2428 = vrcp.pop %v2424
    %v2429 = vrcp.pop %v2427
    %v2430 = vmul.f32 %v2419, %v2428
    %v2431 = vmul.f32 %v2421, %v2429
    %2432 = vrot.lane.b32.xlu0 %v2351, 64
    %v2433 = vpop.permute.xlu0 %2432
    %v2436 = vsel %vm253, %v2430, 0
    %2438 = vmatpush.msra.mxu0 0.0
    %2439 = vmatpush.msra.mxu0 0.0
    %2440 = vmatpush.msra.mxu0 0.0
    %2441 = vmatpush.msra.mxu0 0.0
    %2442 = vmatpush.msra.mxu0 0.0
    %2443 = vmatpush.msra.mxu0 0.0
    %2444 = vmatpush.msra.mxu0 0.0
    %2445 = vmatpush.msra.mxu0 0.0
    %2446 = vmatpush.msra.mxu0 0.0
    %2447 = vmatpush.msra.mxu0 0.0
    %2448 = vmatpush.msra.mxu0 0.0
    %2449 = vmatpush.msra.mxu0 0.0
    %2450 = vmatpush.msra.mxu0 0.0
    %2451 = vmatpush.msra.mxu0 0.0
    %2452 = vmatpush.msra.mxu0 0.0
    %2453 = vmatpush.msra.mxu0 %v2433
    %2454 = vmatmul.f32.gmra.mxu0 %v2436
    %v2455 = vpop.f32.mrf.mxu0
    %v2456 = vadd.f32 0.0, %v2455
    %2457 = vdwg.mxu0
    %2458 = vrot.lane.b32.xlu0 %v2354, 64
    %v2459 = vpop.permute.xlu0 %2458
    %v2462 = vsel %vm253, %v2431, 0
    %2464 = vmatpush.msra.mxu0 0.0
    %2465 = vmatpush.msra.mxu0 0.0
    %2466 = vmatpush.msra.mxu0 0.0
    %2467 = vmatpush.msra.mxu0 0.0
    %2468 = vmatpush.msra.mxu0 0.0
    %2469 = vmatpush.msra.mxu0 0.0
    %2470 = vmatpush.msra.mxu0 0.0
    %2471 = vmatpush.msra.mxu0 0.0
    %2472 = vmatpush.msra.mxu0 0.0
    %2473 = vmatpush.msra.mxu0 0.0
    %2474 = vmatpush.msra.mxu0 0.0
    %2475 = vmatpush.msra.mxu0 0.0
    %2476 = vmatpush.msra.mxu0 0.0
    %2477 = vmatpush.msra.mxu0 0.0
    %2478 = vmatpush.msra.mxu0 0.0
    %2479 = vmatpush.msra.mxu0 %v2459
    %2480 = vmatmul.f32.gmra.mxu0 %v2462
    %v2481 = vpop.f32.mrf.mxu0
    %v2482 = vadd.f32 0.0, %v2481
    %2483 = vdwg.mxu0
    %2484 = vrot.lane.b32.xlu0 %v2351, 112
    %v2485 = vpop.permute.xlu0 %2484
    %2486 = vrot.lane.b32.xlu0 %v2351, 80
    %v2487 = vpop.permute.xlu0 %2486
    %v2488 = vsel %vm201, %v2485, 0
    %v2490 = vsel %vm201, %v2487, 0
    %2492 = vmatpush.xpose.msra.mxu0 0.0
    %2493 = vmatpush.xpose.msra.mxu0 0.0
    %2494 = vmatpush.xpose.msra.mxu0 0.0
    %2495 = vmatpush.xpose.msra.mxu0 0.0
    %2496 = vmatpush.xpose.msra.mxu0 0.0
    %2497 = vmatpush.xpose.msra.mxu0 0.0
    %2498 = vmatpush.xpose.msra.mxu0 0.0
    %2499 = vmatpush.xpose.msra.mxu0 0.0
    %2500 = vmatpush.xpose.msra.mxu0 0.0
    %2501 = vmatpush.xpose.msra.mxu0 0.0
    %2502 = vmatpush.xpose.msra.mxu0 0.0
    %2503 = vmatpush.xpose.msra.mxu0 0.0
    %2504 = vmatpush.xpose.msra.mxu0 0.0
    %2505 = vmatpush.xpose.msra.mxu0 0.0
    %2506 = vmatpush.xpose.msra.mxu0 0.0
    %2507 = vmatpush.xpose.msra.mxu0 %v2490
    %2508 = vmatmul.f32.gmra.mxu0 %v2488
    %v2509 = vpop.f32.mrf.mxu0
    %v2510 = vadd.f32 0.0, %v2509
    %2511 = vdwg.mxu0
    %2512 = vrot.lane.b32.xlu0 %v2354, 112
    %v2513 = vpop.permute.xlu0 %2512
    %2514 = vrot.lane.b32.xlu0 %v2354, 80
    %v2515 = vpop.permute.xlu0 %2514
    %v2516 = vsel %vm201, %v2513, 0
    %v2518 = vsel %vm201, %v2515, 0
    %2520 = vmatpush.xpose.msra.mxu0 0.0
    %2521 = vmatpush.xpose.msra.mxu0 0.0
    %2522 = vmatpush.xpose.msra.mxu0 0.0
    %2523 = vmatpush.xpose.msra.mxu0 0.0
    %2524 = vmatpush.xpose.msra.mxu0 0.0
    %2525 = vmatpush.xpose.msra.mxu0 0.0
    %2526 = vmatpush.xpose.msra.mxu0 0.0
    %2527 = vmatpush.xpose.msra.mxu0 0.0
    %2528 = vmatpush.xpose.msra.mxu0 0.0
    %2529 = vmatpush.xpose.msra.mxu0 0.0
    %2530 = vmatpush.xpose.msra.mxu0 0.0
    %2531 = vmatpush.xpose.msra.mxu0 0.0
    %2532 = vmatpush.xpose.msra.mxu0 0.0
    %2533 = vmatpush.xpose.msra.mxu0 0.0
    %2534 = vmatpush.xpose.msra.mxu0 0.0
    %2535 = vmatpush.xpose.msra.mxu0 %v2518
    %2536 = vmatmul.f32.gmra.mxu0 %v2516
    %v2537 = vpop.f32.mrf.mxu0
    %v2538 = vadd.f32 0.0, %v2537
    %2539 = vdwg.mxu0
    %v2540 = vsel %vm253, %v2510, -inf
    %2541 = vmax.xlane.f32.xlu0 %v2540
    %v2542 = vpop.xlane.xlu0 %2541
    %v2543 = vsel %vm253, %v2538, -inf
    %2544 = vmax.xlane.f32.xlu0 %v2543
    %v2545 = vpop.xlane.xlu0 %2544
    %v2546 = vsub.f32 %v2510, %v2542
    %v2547 = vsub.f32 %v2538, %v2545
    %v2548 = vmul.f32 %v2546, 1.442695
    %v2549 = vpow.pop %v2548
    %v2550 = vmul.f32 %v2547, 1.442695
    %v2551 = vpow.pop %v2550
    %v2552 = vsel %vm253, %v2549, 0.0
    %2553 = vadd.xlane.f32.xlu0 %v2552
    %v2554 = vpop.xlane.xlu0 %2553
    %v2555 = vsel %vm253, %v2551, 0.0
    %2556 = vadd.xlane.f32.xlu0 %v2555
    %v2557 = vpop.xlane.xlu0 %2556
    %v2558 = vrcp.pop %v2554
    %v2559 = vrcp.pop %v2557
    %v2560 = vmul.f32 %v2549, %v2558
    %v2561 = vmul.f32 %v2551, %v2559
    %2562 = vrot.lane.b32.xlu0 %v2351, 48
    %v2563 = vpop.permute.xlu0 %2562
    %v2566 = vsel %vm253, %v2560, 0
    %2568 = vmatpush.msra.mxu0 0.0
    %2569 = vmatpush.msra.mxu0 0.0
    %2570 = vmatpush.msra.mxu0 0.0
    %2571 = vmatpush.msra.mxu0 0.0
    %2572 = vmatpush.msra.mxu0 0.0
    %2573 = vmatpush.msra.mxu0 0.0
    %2574 = vmatpush.msra.mxu0 0.0
    %2575 = vmatpush.msra.mxu0 0.0
    %2576 = vmatpush.msra.mxu0 0.0
    %2577 = vmatpush.msra.mxu0 0.0
    %2578 = vmatpush.msra.mxu0 0.0
    %2579 = vmatpush.msra.mxu0 0.0
    %2580 = vmatpush.msra.mxu0 0.0
    %2581 = vmatpush.msra.mxu0 0.0
    %2582 = vmatpush.msra.mxu0 0.0
    %2583 = vmatpush.msra.mxu0 %v2563
    %2584 = vmatmul.f32.gmra.mxu0 %v2566
    %v2585 = vpop.f32.mrf.mxu0
    %v2586 = vadd.f32 0.0, %v2585
    %2587 = vdwg.mxu0
    %2588 = vrot.lane.b32.xlu0 %v2354, 48
    %v2589 = vpop.permute.xlu0 %2588
    %v2592 = vsel %vm253, %v2561, 0
    %2594 = vmatpush.msra.mxu0 0.0
    %2595 = vmatpush.msra.mxu0 0.0
    %2596 = vmatpush.msra.mxu0 0.0
    %2597 = vmatpush.msra.mxu0 0.0
    %2598 = vmatpush.msra.mxu0 0.0
    %2599 = vmatpush.msra.mxu0 0.0
    %2600 = vmatpush.msra.mxu0 0.0
    %2601 = vmatpush.msra.mxu0 0.0
    %2602 = vmatpush.msra.mxu0 0.0
    %2603 = vmatpush.msra.mxu0 0.0
    %2604 = vmatpush.msra.mxu0 0.0
    %2605 = vmatpush.msra.mxu0 0.0
    %2606 = vmatpush.msra.mxu0 0.0
    %2607 = vmatpush.msra.mxu0 0.0
    %2608 = vmatpush.msra.mxu0 0.0
    %2609 = vmatpush.msra.mxu0 %v2589
    %2610 = vmatmul.f32.gmra.mxu0 %v2592
    %v2611 = vpop.f32.mrf.mxu0
    %v2612 = vadd.f32 0.0, %v2611
    %2613 = vdwg.mxu0
    %2616 = vrot.lane.b32.xlu0 %v2586, 16
    %v2617 = vpop.permute.xlu0 %2616
    %2618 = vrot.lane.b32.xlu0 %v2612, 16
    %v2619 = vpop.permute.xlu0 %2618
    %v2622 = vsel %vm201, %v2456, %v2617
    %v2623 = vsel %vm201, %v2482, %v2619
    %v2625 = vperm.slane %v2323, 0
    %v2628 = vsel %vm168, %v2622, 0
    %v2631 = vsel %vm168, %v2623, 0
    %2633 = vmatpush.msra.mxu0 0.0
    %2634 = vmatpush.msra.mxu0 0.0
    %2635 = vmatpush.msra.mxu0 0.0
    %2636 = vmatpush.msra.mxu0 0.0
    %2637 = vmatpush.msra.mxu0 0.0
    %2638 = vmatpush.msra.mxu0 0.0
    %2639 = vmatpush.msra.mxu0 0.0
    %2640 = vmatpush.msra.mxu0 0.0
    %2641 = vmatpush.msra.mxu0 0.0
    %2642 = vmatpush.msra.mxu0 0.0
    %2643 = vmatpush.msra.mxu0 0.0
    %2644 = vmatpush.msra.mxu0 0.0
    %2645 = vmatpush.msra.mxu0 %v2321
    %2646 = vmatpush.msra.mxu0 %v2320
    %2647 = vmatpush.msra.mxu0 %v2319
    %2648 = vmatpush.msra.mxu0 %v2318
    %2649 = vmatmul.f32.gmra.mxu0 %v2628
    %v2650 = vpop.f32.mrf.mxu0
    %v2651 = vadd.f32 %v2625, %v2650
    %2652 = vmatmul.f32.gmra.mxu0 %v2631
    %v2653 = vpop.f32.mrf.mxu0
    %v2654 = vadd.f32 %v2625, %v2653
    %2655 = vdwg.mxu0
    %v2656 = vadd.f32 %v2308, %v2651
    %v2657 = vadd.f32 %v2309, %v2654
    %s2658 = scalar_lea.vmem [#allocation10], 5
    %v2659 = vld [vmem:[%s2658] sm:$0x1]
    %s2660 = scalar_lea.vmem [#allocation12], 5
    %v2661 = vld [vmem:[%s2660] sm:$0x1]
    %v2662 = vsel %vm168, %v2656, 0.0
    %2663 = vadd.xlane.f32.xlu0 %v2662
    %v2664 = vpop.xlane.xlu0 %2663
    %v2665 = vsel %vm168, %v2657, 0.0
    %2666 = vadd.xlane.f32.xlu0 %v2665
    %v2667 = vpop.xlane.xlu0 %2666
    %v2668 = vmul.f32 %v2664, %v516
    %v2669 = vmul.f32 %v2667, %v516
    %v2670 = vsub.f32 %v2656, %v2668
    %v2671 = vsub.f32 %v2657, %v2669
    %v2672 = vmul.f32 %v2670, %v2670
    %v2673 = vmul.f32 %v2671, %v2671
    %v2674 = vsel %vm168, %v2672, 0.0
    %2675 = vadd.xlane.f32.xlu0 %v2674
    %v2676 = vpop.xlane.xlu0 %2675
    %v2677 = vsel %vm168, %v2673, 0.0
    %2678 = vadd.xlane.f32.xlu0 %v2677
    %v2679 = vpop.xlane.xlu0 %2678
    %v2680 = vmul.f32 %v2676, %v516
    %v2681 = vmul.f32 %v2679, %v516
    %v2682 = vadd.f32 %v2680, 1e-05
    %v2683 = vadd.f32 %v2681, 1e-05
    %v2684 = vrsqrt.pop %v2682
    %v2685 = vmul.f32 %v2684, %v2682
    %v2686 = vmul.f32 %v2685, %v2684
    %v2687 = vmul.f32 0.5, %v2686
    %v2688 = vsub.f32 1.5, %v2687
    %v2689 = vmul.f32 %v2684, %v2688
    %vm2690 = vweird.f32 %v2682
    %vm2691 = vweird.f32 %v2684
    %vm2692 = vmor %vm2690, %vm2691
    %v2693 = vsel %vm2692, %v2684, %v2689
    %v2694 = vrsqrt.pop %v2683
    %v2695 = vmul.f32 %v2694, %v2683
    %v2696 = vmul.f32 %v2695, %v2694
    %v2697 = vmul.f32 0.5, %v2696
    %v2698 = vsub.f32 1.5, %v2697
    %v2699 = vmul.f32 %v2694, %v2698
    %vm2700 = vweird.f32 %v2683
    %vm2701 = vweird.f32 %v2694
    %vm2702 = vmor %vm2700, %vm2701
    %v2703 = vsel %vm2702, %v2694, %v2699
    %v2704 = vmul.f32 %v2670, %v2693
    %v2705 = vmul.f32 %v2671, %v2703
    %v2707 = vperm.slane %v2659, 0
    %v2709 = vmul.f32 %v2704, %v2707
    %v2710 = vmul.f32 %v2705, %v2707
    %v2712 = vperm.slane %v2661, 0
    %v2714 = vadd.f32 %v2709, %v2712
    %v2715 = vadd.f32 %v2710, %v2712
    %s2716 = scalar_lea.vmem %s1, 160
    %v2717 = vld [vmem:[%s2716] sm:$0xff]
    %v2718 = vld [vmem:[%s2716 + $0x8] sm:$0xff]
    %v2719 = vld [vmem:[%s2716 + $0x10] sm:$0xff]
    %v2720 = vld [vmem:[%s2716 + $0x18] sm:$0xff]
    %s2721 = scalar_lea.vmem [#allocation2], 5
    %v2722 = vld [vmem:[%s2721] sm:$0x1]
    %s2723 = scalar_lea.vmem %s3, 160
    %v2724 = vld [vmem:[%s2723] sm:$0xff]
    %v2725 = vld [vmem:[%s2723 + $0x8] sm:$0xff]
    %v2726 = vld [vmem:[%s2723 + $0x10] sm:$0xff]
    %v2727 = vld [vmem:[%s2723 + $0x18] sm:$0xff]
    %s2728 = scalar_lea.vmem [#allocation4], 5
    %v2729 = vld [vmem:[%s2728] sm:$0x1]
    %v2731 = vperm.slane %v2722, 0
    %v2734 = vsel %vm168, %v2714, 0
    %v2737 = vsel %vm168, %v2715, 0
    %2739 = vmatpush.msra.mxu0 0.0
    %2740 = vmatpush.msra.mxu0 0.0
    %2741 = vmatpush.msra.mxu0 0.0
    %2742 = vmatpush.msra.mxu0 0.0
    %2743 = vmatpush.msra.mxu0 0.0
    %2744 = vmatpush.msra.mxu0 0.0
    %2745 = vmatpush.msra.mxu0 0.0
    %2746 = vmatpush.msra.mxu0 0.0
    %2747 = vmatpush.msra.mxu0 0.0
    %2748 = vmatpush.msra.mxu0 0.0
    %2749 = vmatpush.msra.mxu0 0.0
    %2750 = vmatpush.msra.mxu0 0.0
    %2751 = vmatpush.msra.mxu0 %v2720
    %2752 = vmatpush.msra.mxu0 %v2719
    %2753 = vmatpush.msra.mxu0 %v2718
    %2754 = vmatpush.msra.mxu0 %v2717
    %2755 = vmatmul.f32.gmra.mxu0 %v2734
    %v2756 = vpop.f32.mrf.mxu0
    %v2757 = vadd.f32 %v2731, %v2756
    %2758 = vmatmul.f32.gmra.mxu0 %v2737
    %v2759 = vpop.f32.mrf.mxu0
    %v2760 = vadd.f32 %v2731, %v2759
    %2761 = vdwg.mxu0
    %2766 = vrot.lane.b32.xlu0 %v2717, 96
    %v2767 = vpop.permute.xlu0 %2766
    %2768 = vrot.lane.b32.xlu0 %v2718, 96
    %v2769 = vpop.permute.xlu0 %2768
    %2770 = vrot.lane.b32.xlu0 %v2719, 96
    %v2771 = vpop.permute.xlu0 %2770
    %2772 = vrot.lane.b32.xlu0 %v2720, 96
    %v2773 = vpop.permute.xlu0 %2772
    %2778 = vrot.lane.b32.xlu0 %v2731, 96
    %v2779 = vpop.permute.xlu0 %2778
    %2781 = vmatpush.msra.mxu0 0.0
    %2782 = vmatpush.msra.mxu0 0.0
    %2783 = vmatpush.msra.mxu0 0.0
    %2784 = vmatpush.msra.mxu0 0.0
    %2785 = vmatpush.msra.mxu0 0.0
    %2786 = vmatpush.msra.mxu0 0.0
    %2787 = vmatpush.msra.mxu0 0.0
    %2788 = vmatpush.msra.mxu0 0.0
    %2789 = vmatpush.msra.mxu0 0.0
    %2790 = vmatpush.msra.mxu0 0.0
    %2791 = vmatpush.msra.mxu0 0.0
    %2792 = vmatpush.msra.mxu0 0.0
    %2793 = vmatpush.msra.mxu0 %v2773
    %2794 = vmatpush.msra.mxu0 %v2771
    %2795 = vmatpush.msra.mxu0 %v2769
    %2796 = vmatpush.msra.mxu0 %v2767
    %2797 = vmatmul.f32.gmra.mxu0 %v1780
    %v2798 = vpop.f32.mrf.mxu0
    %v2799 = vadd.f32 %v2779, %v2798
    %2800 = vmatmul.f32.gmra.mxu0 %v1783
    %v2801 = vpop.f32.mrf.mxu0
    %v2802 = vadd.f32 %v2779, %v2801
    %2803 = vdwg.mxu0
    %v2805 = vsel %vm201, %v2757, 0
    %v2808 = vsel %vm201, %v2799, 0
    %2810 = vmatpush.xpose.msra.mxu0 0.0
    %2811 = vmatpush.xpose.msra.mxu0 0.0
    %2812 = vmatpush.xpose.msra.mxu0 0.0
    %2813 = vmatpush.xpose.msra.mxu0 0.0
    %2814 = vmatpush.xpose.msra.mxu0 0.0
    %2815 = vmatpush.xpose.msra.mxu0 0.0
    %2816 = vmatpush.xpose.msra.mxu0 0.0
    %2817 = vmatpush.xpose.msra.mxu0 0.0
    %2818 = vmatpush.xpose.msra.mxu0 0.0
    %2819 = vmatpush.xpose.msra.mxu0 0.0
    %2820 = vmatpush.xpose.msra.mxu0 0.0
    %2821 = vmatpush.xpose.msra.mxu0 0.0
    %2822 = vmatpush.xpose.msra.mxu0 0.0
    %2823 = vmatpush.xpose.msra.mxu0 0.0
    %2824 = vmatpush.xpose.msra.mxu0 0.0
    %2825 = vmatpush.xpose.msra.mxu0 %v2808
    %2826 = vmatmul.f32.gmra.mxu0 %v2805
    %v2827 = vpop.f32.mrf.mxu0
    %v2828 = vadd.f32 0.0, %v2827
    %2829 = vdwg.mxu0
    %v2831 = vsel %vm201, %v2760, 0
    %v2834 = vsel %vm201, %v2802, 0
    %2836 = vmatpush.xpose.msra.mxu0 0.0
    %2837 = vmatpush.xpose.msra.mxu0 0.0
    %2838 = vmatpush.xpose.msra.mxu0 0.0
    %2839 = vmatpush.xpose.msra.mxu0 0.0
    %2840 = vmatpush.xpose.msra.mxu0 0.0
    %2841 = vmatpush.xpose.msra.mxu0 0.0
    %2842 = vmatpush.xpose.msra.mxu0 0.0
    %2843 = vmatpush.xpose.msra.mxu0 0.0
    %2844 = vmatpush.xpose.msra.mxu0 0.0
    %2845 = vmatpush.xpose.msra.mxu0 0.0
    %2846 = vmatpush.xpose.msra.mxu0 0.0
    %2847 = vmatpush.xpose.msra.mxu0 0.0
    %2848 = vmatpush.xpose.msra.mxu0 0.0
    %2849 = vmatpush.xpose.msra.mxu0 0.0
    %2850 = vmatpush.xpose.msra.mxu0 0.0
    %2851 = vmatpush.xpose.msra.mxu0 %v2834
    %2852 = vmatmul.f32.gmra.mxu0 %v2831
    %v2853 = vpop.f32.mrf.mxu0
    %v2854 = vadd.f32 0.0, %v2853
    %2855 = vdwg.mxu0
    %v2856 = vsel %vm253, %v2828, -inf
    %2857 = vmax.xlane.f32.xlu0 %v2856
    %v2858 = vpop.xlane.xlu0 %2857
    %v2859 = vsel %vm253, %v2854, -inf
    %2860 = vmax.xlane.f32.xlu0 %v2859
    %v2861 = vpop.xlane.xlu0 %2860
    %v2862 = vsub.f32 %v2828, %v2858
    %v2863 = vsub.f32 %v2854, %v2861
    %v2864 = vmul.f32 %v2862, 1.442695
    %v2865 = vpow.pop %v2864
    %v2866 = vmul.f32 %v2863, 1.442695
    %v2867 = vpow.pop %v2866
    %v2868 = vsel %vm253, %v2865, 0.0
    %2869 = vadd.xlane.f32.xlu0 %v2868
    %v2870 = vpop.xlane.xlu0 %2869
    %v2871 = vsel %vm253, %v2867, 0.0
    %2872 = vadd.xlane.f32.xlu0 %v2871
    %v2873 = vpop.xlane.xlu0 %2872
    %v2874 = vrcp.pop %v2870
    %v2875 = vrcp.pop %v2873
    %v2876 = vmul.f32 %v2865, %v2874
    %v2877 = vmul.f32 %v2867, %v2875
    %2878 = vrot.lane.b32.xlu0 %v2799, 96
    %v2879 = vpop.permute.xlu0 %2878
    %v2882 = vsel %vm253, %v2876, 0
    %2884 = vmatpush.msra.mxu0 0.0
    %2885 = vmatpush.msra.mxu0 0.0
    %2886 = vmatpush.msra.mxu0 0.0
    %2887 = vmatpush.msra.mxu0 0.0
    %2888 = vmatpush.msra.mxu0 0.0
    %2889 = vmatpush.msra.mxu0 0.0
    %2890 = vmatpush.msra.mxu0 0.0
    %2891 = vmatpush.msra.mxu0 0.0
    %2892 = vmatpush.msra.mxu0 0.0
    %2893 = vmatpush.msra.mxu0 0.0
    %2894 = vmatpush.msra.mxu0 0.0
    %2895 = vmatpush.msra.mxu0 0.0
    %2896 = vmatpush.msra.mxu0 0.0
    %2897 = vmatpush.msra.mxu0 0.0
    %2898 = vmatpush.msra.mxu0 0.0
    %2899 = vmatpush.msra.mxu0 %v2879
    %2900 = vmatmul.f32.gmra.mxu0 %v2882
    %v2901 = vpop.f32.mrf.mxu0
    %v2902 = vadd.f32 0.0, %v2901
    %2903 = vdwg.mxu0
    %2904 = vrot.lane.b32.xlu0 %v2802, 96
    %v2905 = vpop.permute.xlu0 %2904
    %v2908 = vsel %vm253, %v2877, 0
    %2910 = vmatpush.msra.mxu0 0.0
    %2911 = vmatpush.msra.mxu0 0.0
    %2912 = vmatpush.msra.mxu0 0.0
    %2913 = vmatpush.msra.mxu0 0.0
    %2914 = vmatpush.msra.mxu0 0.0
    %2915 = vmatpush.msra.mxu0 0.0
    %2916 = vmatpush.msra.mxu0 0.0
    %2917 = vmatpush.msra.mxu0 0.0
    %2918 = vmatpush.msra.mxu0 0.0
    %2919 = vmatpush.msra.mxu0 0.0
    %2920 = vmatpush.msra.mxu0 0.0
    %2921 = vmatpush.msra.mxu0 0.0
    %2922 = vmatpush.msra.mxu0 0.0
    %2923 = vmatpush.msra.mxu0 0.0
    %2924 = vmatpush.msra.mxu0 0.0
    %2925 = vmatpush.msra.mxu0 %v2905
    %2926 = vmatmul.f32.gmra.mxu0 %v2908
    %v2927 = vpop.f32.mrf.mxu0
    %v2928 = vadd.f32 0.0, %v2927
    %2929 = vdwg.mxu0
    %2930 = vrot.lane.b32.xlu0 %v2757, 112
    %v2931 = vpop.permute.xlu0 %2930
    %2932 = vrot.lane.b32.xlu0 %v2799, 112
    %v2933 = vpop.permute.xlu0 %2932
    %v2934 = vsel %vm201, %v2931, 0
    %v2936 = vsel %vm201, %v2933, 0
    %2938 = vmatpush.xpose.msra.mxu0 0.0
    %2939 = vmatpush.xpose.msra.mxu0 0.0
    %2940 = vmatpush.xpose.msra.mxu0 0.0
    %2941 = vmatpush.xpose.msra.mxu0 0.0
    %2942 = vmatpush.xpose.msra.mxu0 0.0
    %2943 = vmatpush.xpose.msra.mxu0 0.0
    %2944 = vmatpush.xpose.msra.mxu0 0.0
    %2945 = vmatpush.xpose.msra.mxu0 0.0
    %2946 = vmatpush.xpose.msra.mxu0 0.0
    %2947 = vmatpush.xpose.msra.mxu0 0.0
    %2948 = vmatpush.xpose.msra.mxu0 0.0
    %2949 = vmatpush.xpose.msra.mxu0 0.0
    %2950 = vmatpush.xpose.msra.mxu0 0.0
    %2951 = vmatpush.xpose.msra.mxu0 0.0
    %2952 = vmatpush.xpose.msra.mxu0 0.0
    %2953 = vmatpush.xpose.msra.mxu0 %v2936
    %2954 = vmatmul.f32.gmra.mxu0 %v2934
    %v2955 = vpop.f32.mrf.mxu0
    %v2956 = vadd.f32 0.0, %v2955
    %2957 = vdwg.mxu0
    %2958 = vrot.lane.b32.xlu0 %v2760, 112
    %v2959 = vpop.permute.xlu0 %2958
    %2960 = vrot.lane.b32.xlu0 %v2802, 112
    %v2961 = vpop.permute.xlu0 %2960
    %v2962 = vsel %vm201, %v2959, 0
    %v2964 = vsel %vm201, %v2961, 0
    %2966 = vmatpush.xpose.msra.mxu0 0.0
    %2967 = vmatpush.xpose.msra.mxu0 0.0
    %2968 = vmatpush.xpose.msra.mxu0 0.0
    %2969 = vmatpush.xpose.msra.mxu0 0.0
    %2970 = vmatpush.xpose.msra.mxu0 0.0
    %2971 = vmatpush.xpose.msra.mxu0 0.0
    %2972 = vmatpush.xpose.msra.mxu0 0.0
    %2973 = vmatpush.xpose.msra.mxu0 0.0
    %2974 = vmatpush.xpose.msra.mxu0 0.0
    %2975 = vmatpush.xpose.msra.mxu0 0.0
    %2976 = vmatpush.xpose.msra.mxu0 0.0
    %2977 = vmatpush.xpose.msra.mxu0 0.0
    %2978 = vmatpush.xpose.msra.mxu0 0.0
    %2979 = vmatpush.xpose.msra.mxu0 0.0
    %2980 = vmatpush.xpose.msra.mxu0 0.0
    %2981 = vmatpush.xpose.msra.mxu0 %v2964
    %2982 = vmatmul.f32.gmra.mxu0 %v2962
    %v2983 = vpop.f32.mrf.mxu0
    %v2984 = vadd.f32 0.0, %v2983
    %2985 = vdwg.mxu0
    %v2986 = vsel %vm253, %v2956, -inf
    %2987 = vmax.xlane.f32.xlu0 %v2986
    %v2988 = vpop.xlane.xlu0 %2987
    %v2989 = vsel %vm253, %v2984, -inf
    %2990 = vmax.xlane.f32.xlu0 %v2989
    %v2991 = vpop.xlane.xlu0 %2990
    %v2992 = vsub.f32 %v2956, %v2988
    %v2993 = vsub.f32 %v2984, %v2991
    %v2994 = vmul.f32 %v2992, 1.442695
    %v2995 = vpow.pop %v2994
    %v2996 = vmul.f32 %v2993, 1.442695
    %v2997 = vpow.pop %v2996
    %v2998 = vsel %vm253, %v2995, 0.0
    %2999 = vadd.xlane.f32.xlu0 %v2998
    %v3000 = vpop.xlane.xlu0 %2999
    %v3001 = vsel %vm253, %v2997, 0.0
    %3002 = vadd.xlane.f32.xlu0 %v3001
    %v3003 = vpop.xlane.xlu0 %3002
    %v3004 = vrcp.pop %v3000
    %v3005 = vrcp.pop %v3003
    %v3006 = vmul.f32 %v2995, %v3004
    %v3007 = vmul.f32 %v2997, %v3005
    %3008 = vrot.lane.b32.xlu0 %v2799, 80
    %v3009 = vpop.permute.xlu0 %3008
    %v3012 = vsel %vm253, %v3006, 0
    %3014 = vmatpush.msra.mxu0 0.0
    %3015 = vmatpush.msra.mxu0 0.0
    %3016 = vmatpush.msra.mxu0 0.0
    %3017 = vmatpush.msra.mxu0 0.0
    %3018 = vmatpush.msra.mxu0 0.0
    %3019 = vmatpush.msra.mxu0 0.0
    %3020 = vmatpush.msra.mxu0 0.0
    %3021 = vmatpush.msra.mxu0 0.0
    %3022 = vmatpush.msra.mxu0 0.0
    %3023 = vmatpush.msra.mxu0 0.0
    %3024 = vmatpush.msra.mxu0 0.0
    %3025 = vmatpush.msra.mxu0 0.0
    %3026 = vmatpush.msra.mxu0 0.0
    %3027 = vmatpush.msra.mxu0 0.0
    %3028 = vmatpush.msra.mxu0 0.0
    %3029 = vmatpush.msra.mxu0 %v3009
    %3030 = vmatmul.f32.gmra.mxu0 %v3012
    %v3031 = vpop.f32.mrf.mxu0
    %v3032 = vadd.f32 0.0, %v3031
    %3033 = vdwg.mxu0
    %3034 = vrot.lane.b32.xlu0 %v2802, 80
    %v3035 = vpop.permute.xlu0 %3034
    %v3038 = vsel %vm253, %v3007, 0
    %3040 = vmatpush.msra.mxu0 0.0
    %3041 = vmatpush.msra.mxu0 0.0
    %3042 = vmatpush.msra.mxu0 0.0
    %3043 = vmatpush.msra.mxu0 0.0
    %3044 = vmatpush.msra.mxu0 0.0
    %3045 = vmatpush.msra.mxu0 0.0
    %3046 = vmatpush.msra.mxu0 0.0
    %3047 = vmatpush.msra.mxu0 0.0
    %3048 = vmatpush.msra.mxu0 0.0
    %3049 = vmatpush.msra.mxu0 0.0
    %3050 = vmatpush.msra.mxu0 0.0
    %3051 = vmatpush.msra.mxu0 0.0
    %3052 = vmatpush.msra.mxu0 0.0
    %3053 = vmatpush.msra.mxu0 0.0
    %3054 = vmatpush.msra.mxu0 0.0
    %3055 = vmatpush.msra.mxu0 %v3035
    %3056 = vmatmul.f32.gmra.mxu0 %v3038
    %v3057 = vpop.f32.mrf.mxu0
    %v3058 = vadd.f32 0.0, %v3057
    %3059 = vdwg.mxu0
    %3062 = vrot.lane.b32.xlu0 %v3032, 16
    %v3063 = vpop.permute.xlu0 %3062
    %3064 = vrot.lane.b32.xlu0 %v3058, 16
    %v3065 = vpop.permute.xlu0 %3064
    %v3068 = vsel %vm201, %v2902, %v3063
    %v3069 = vsel %vm201, %v2928, %v3065
    %v3071 = vperm.slane %v2729, 0
    %v3074 = vsel %vm168, %v3068, 0
    %v3077 = vsel %vm168, %v3069, 0
    %3079 = vmatpush.msra.mxu0 0.0
    %3080 = vmatpush.msra.mxu0 0.0
    %3081 = vmatpush.msra.mxu0 0.0
    %3082 = vmatpush.msra.mxu0 0.0
    %3083 = vmatpush.msra.mxu0 0.0
    %3084 = vmatpush.msra.mxu0 0.0
    %3085 = vmatpush.msra.mxu0 0.0
    %3086 = vmatpush.msra.mxu0 0.0
    %3087 = vmatpush.msra.mxu0 0.0
    %3088 = vmatpush.msra.mxu0 0.0
    %3089 = vmatpush.msra.mxu0 0.0
    %3090 = vmatpush.msra.mxu0 0.0
    %3091 = vmatpush.msra.mxu0 %v2727
    %3092 = vmatpush.msra.mxu0 %v2726
    %3093 = vmatpush.msra.mxu0 %v2725
    %3094 = vmatpush.msra.mxu0 %v2724
    %3095 = vmatmul.f32.gmra.mxu0 %v3074
    %v3096 = vpop.f32.mrf.mxu0
    %v3097 = vadd.f32 %v3071, %v3096
    %3098 = vmatmul.f32.gmra.mxu0 %v3077
    %v3099 = vpop.f32.mrf.mxu0
    %v3100 = vadd.f32 %v3071, %v3099
    %3101 = vdwg.mxu0
    %v3102 = vadd.f32 %v2714, %v3097
    %v3103 = vadd.f32 %v2715, %v3100
    %s3104 = scalar_lea.vmem [#allocation10], 7
    %v3105 = vld [vmem:[%s3104] sm:$0x1]
    %s3106 = scalar_lea.vmem [#allocation12], 7
    %v3107 = vld [vmem:[%s3106] sm:$0x1]
    %v3108 = vsel %vm168, %v3102, 0.0
    %3109 = vadd.xlane.f32.xlu0 %v3108
    %v3110 = vpop.xlane.xlu0 %3109
    %v3111 = vsel %vm168, %v3103, 0.0
    %3112 = vadd.xlane.f32.xlu0 %v3111
    %v3113 = vpop.xlane.xlu0 %3112
    %v3114 = vmul.f32 %v3110, %v516
    %v3115 = vmul.f32 %v3113, %v516
    %v3116 = vsub.f32 %v3102, %v3114
    %v3117 = vsub.f32 %v3103, %v3115
    %v3118 = vmul.f32 %v3116, %v3116
    %v3119 = vmul.f32 %v3117, %v3117
    %v3120 = vsel %vm168, %v3118, 0.0
    %3121 = vadd.xlane.f32.xlu0 %v3120
    %v3122 = vpop.xlane.xlu0 %3121
    %v3123 = vsel %vm168, %v3119, 0.0
    %3124 = vadd.xlane.f32.xlu0 %v3123
    %v3125 = vpop.xlane.xlu0 %3124
    %v3126 = vmul.f32 %v3122, %v516
    %v3127 = vmul.f32 %v3125, %v516
    %v3128 = vadd.f32 %v3126, 1e-05
    %v3129 = vadd.f32 %v3127, 1e-05
    %v3130 = vrsqrt.pop %v3128
    %v3131 = vmul.f32 %v3130, %v3128
    %v3132 = vmul.f32 %v3131, %v3130
    %v3133 = vmul.f32 0.5, %v3132
    %v3134 = vsub.f32 1.5, %v3133
    %v3135 = vmul.f32 %v3130, %v3134
    %vm3136 = vweird.f32 %v3128
    %vm3137 = vweird.f32 %v3130
    %vm3138 = vmor %vm3136, %vm3137
    %v3139 = vsel %vm3138, %v3130, %v3135
    %v3140 = vrsqrt.pop %v3129
    %v3141 = vmul.f32 %v3140, %v3129
    %v3142 = vmul.f32 %v3141, %v3140
    %v3143 = vmul.f32 0.5, %v3142
    %v3144 = vsub.f32 1.5, %v3143
    %v3145 = vmul.f32 %v3140, %v3144
    %vm3146 = vweird.f32 %v3129
    %vm3147 = vweird.f32 %v3140
    %vm3148 = vmor %vm3146, %vm3147
    %v3149 = vsel %vm3148, %v3140, %v3145
    %v3150 = vmul.f32 %v3116, %v3139
    %v3151 = vmul.f32 %v3117, %v3149
    %v3153 = vperm.slane %v3105, 0
    %v3155 = vmul.f32 %v3150, %v3153
    %v3156 = vmul.f32 %v3151, %v3153
    %v3158 = vperm.slane %v3107, 0
    %v3160 = vadd.f32 %v3155, %v3158
    %v3161 = vadd.f32 %v3156, %v3158
    %s3162 = scalar_lea.vmem [#allocation6], 96
    %v3163 = vld [vmem:[%s3162] sm:$0xff]
    %v3164 = vld [vmem:[%s3162 + $0x8] sm:$0xff]
    %v3165 = vld [vmem:[%s3162 + $0x10] sm:$0xff]
    %v3166 = vld [vmem:[%s3162 + $0x18] sm:$0xff]
    %s3167 = scalar_lea.vmem [#allocation7], 3
    %v3168 = vld [vmem:[%s3167] sm:$0x1]
    %s3169 = scalar_lea.vmem %s7, 192
    %v3170 = vld [vmem:[%s3169] sm:$0xff]
    %v3171 = vld [vmem:[%s3169 + $0x8] sm:$0xff]
    %v3172 = vld [vmem:[%s3169 + $0x10] sm:$0xff]
    %v3173 = vld [vmem:[%s3169 + $0x18] sm:$0xff]
    %v3174 = vld [vmem:[%s3169 + $0x20] sm:$0xff]
    %v3175 = vld [vmem:[%s3169 + $0x28] sm:$0xff]
    %v3176 = vld [vmem:[%s3169 + $0x30] sm:$0xff]
    %v3177 = vld [vmem:[%s3169 + $0x38] sm:$0xff]
    %s3178 = scalar_lea.vmem [#allocation9], 3
    %v3179 = vld [vmem:[%s3178] sm:$0x1]
    %v3181 = vperm.slane %v3168, 0
    %v3184 = vsel %vm168, %v3160, 0
    %v3187 = vsel %vm168, %v3161, 0
    %3189 = vmatpush.msra.mxu0 0.0
    %3190 = vmatpush.msra.mxu0 0.0
    %3191 = vmatpush.msra.mxu0 0.0
    %3192 = vmatpush.msra.mxu0 0.0
    %3193 = vmatpush.msra.mxu0 0.0
    %3194 = vmatpush.msra.mxu0 0.0
    %3195 = vmatpush.msra.mxu0 0.0
    %3196 = vmatpush.msra.mxu0 0.0
    %3197 = vmatpush.msra.mxu0 0.0
    %3198 = vmatpush.msra.mxu0 0.0
    %3199 = vmatpush.msra.mxu0 0.0
    %3200 = vmatpush.msra.mxu0 0.0
    %3201 = vmatpush.msra.mxu0 %v3166
    %3202 = vmatpush.msra.mxu0 %v3165
    %3203 = vmatpush.msra.mxu0 %v3164
    %3204 = vmatpush.msra.mxu0 %v3163
    %3205 = vmatmul.f32.gmra.mxu0 %v3184
    %v3206 = vpop.f32.mrf.mxu0
    %v3207 = vadd.f32 %v3181, %v3206
    %3208 = vmatmul.f32.gmra.mxu0 %v3187
    %v3209 = vpop.f32.mrf.mxu0
    %v3210 = vadd.f32 %v3181, %v3209
    %3211 = vdwg.mxu0
    %v3212 = vmax.f32 %v3207, 0.0
    %v3213 = vmax.f32 %v3210, 0.0
    %v3215 = vperm.slane %v3179, 0
    %v3218 = vsel %vm616, %v3212, 0
    %v3221 = vsel %vm616, %v3213, 0
    %3223 = vmatpush.msra.mxu0 0.0
    %3224 = vmatpush.msra.mxu0 0.0
    %3225 = vmatpush.msra.mxu0 0.0
    %3226 = vmatpush.msra.mxu0 0.0
    %3227 = vmatpush.msra.mxu0 0.0
    %3228 = vmatpush.msra.mxu0 0.0
    %3229 = vmatpush.msra.mxu0 0.0
    %3230 = vmatpush.msra.mxu0 0.0
    %3231 = vmatpush.msra.mxu0 %v3177
    %3232 = vmatpush.msra.mxu0 %v3176
    %3233 = vmatpush.msra.mxu0 %v3175
    %3234 = vmatpush.msra.mxu0 %v3174
    %3235 = vmatpush.msra.mxu0 %v3173
    %3236 = vmatpush.msra.mxu0 %v3172
    %3237 = vmatpush.msra.mxu0 %v3171
    %3238 = vmatpush.msra.mxu0 %v3170
    %3239 = vmatmul.f32.gmra.mxu0 %v3218
    %v3240 = vpop.f32.mrf.mxu0
    %v3241 = vadd.f32 %v3215, %v3240
    %3242 = vmatmul.f32.gmra.mxu0 %v3221
    %v3243 = vpop.f32.mrf.mxu0
    %v3244 = vadd.f32 %v3215, %v3243
    %3245 = vdwg.mxu0
    %v3246 = vadd.f32 %v3160, %v3241
    %v3247 = vadd.f32 %v3161, %v3244
    %s3248 = scalar_lea.vmem [#allocation10], 9
    %v3249 = vld [vmem:[%s3248] sm:$0x1]
    %s3250 = scalar_lea.vmem [#allocation12], 9
    %v3251 = vld [vmem:[%s3250] sm:$0x1]
    %v3252 = vsel %vm168, %v3246, 0.0
    %3253 = vadd.xlane.f32.xlu0 %v3252
    %v3254 = vpop.xlane.xlu0 %3253
    %v3255 = vsel %vm168, %v3247, 0.0
    %3256 = vadd.xlane.f32.xlu0 %v3255
    %v3257 = vpop.xlane.xlu0 %3256
    %v3258 = vmul.f32 %v3254, %v516
    %v3259 = vmul.f32 %v3257, %v516
    %v3260 = vsub.f32 %v3246, %v3258
    %v3261 = vsub.f32 %v3247, %v3259
    %v3262 = vmul.f32 %v3260, %v3260
    %v3263 = vmul.f32 %v3261, %v3261
    %v3264 = vsel %vm168, %v3262, 0.0
    %3265 = vadd.xlane.f32.xlu0 %v3264
    %v3266 = vpop.xlane.xlu0 %3265
    %v3267 = vsel %vm168, %v3263, 0.0
    %3268 = vadd.xlane.f32.xlu0 %v3267
    %v3269 = vpop.xlane.xlu0 %3268
    %v3270 = vmul.f32 %v3266, %v516
    %v3271 = vmul.f32 %v3269, %v516
    %v3272 = vadd.f32 %v3270, 1e-05
    %v3273 = vadd.f32 %v3271, 1e-05
    %v3274 = vrsqrt.pop %v3272
    %v3275 = vmul.f32 %v3274, %v3272
    %v3276 = vmul.f32 %v3275, %v3274
    %v3277 = vmul.f32 0.5, %v3276
    %v3278 = vsub.f32 1.5, %v3277
    %v3279 = vmul.f32 %v3274, %v3278
    %vm3280 = vweird.f32 %v3272
    %vm3281 = vweird.f32 %v3274
    %vm3282 = vmor %vm3280, %vm3281
    %v3283 = vsel %vm3282, %v3274, %v3279
    %v3284 = vrsqrt.pop %v3273
    %v3285 = vmul.f32 %v3284, %v3273
    %v3286 = vmul.f32 %v3285, %v3284
    %v3287 = vmul.f32 0.5, %v3286
    %v3288 = vsub.f32 1.5, %v3287
    %v3289 = vmul.f32 %v3284, %v3288
    %vm3290 = vweird.f32 %v3273
    %vm3291 = vweird.f32 %v3284
    %vm3292 = vmor %vm3290, %vm3291
    %v3293 = vsel %vm3292, %v3284, %v3289
    %v3294 = vmul.f32 %v3260, %v3283
    %v3295 = vmul.f32 %v3261, %v3293
    %v3297 = vperm.slane %v3249, 0
    %v3299 = vmul.f32 %v3294, %v3297
    %v3300 = vmul.f32 %v3295, %v3297
    %v3302 = vperm.slane %v3251, 0
    %v3304 = vadd.f32 %v3299, %v3302
    %v3305 = vadd.f32 %v3300, %v3302
    %s3306 = scalar_lea.vmem [#allocation10], 11
    %v3307 = vld [vmem:[%s3306] sm:$0x1]
    %s3308 = scalar_lea.vmem [#allocation12], 11
    %v3309 = vld [vmem:[%s3308] sm:$0x1]
    %v3310 = vsel %vm168, %v3304, 0.0
    %3311 = vadd.xlane.f32.xlu0 %v3310
    %v3312 = vpop.xlane.xlu0 %3311
    %v3313 = vsel %vm168, %v3305, 0.0
    %3314 = vadd.xlane.f32.xlu0 %v3313
    %v3315 = vpop.xlane.xlu0 %3314
    %v3316 = vmul.f32 %v3312, %v516
    %v3317 = vmul.f32 %v3315, %v516
    %v3318 = vsub.f32 %v3304, %v3316
    %v3319 = vsub.f32 %v3305, %v3317
    %v3320 = vmul.f32 %v3318, %v3318
    %v3321 = vmul.f32 %v3319, %v3319
    %v3322 = vsel %vm168, %v3320, 0.0
    %3323 = vadd.xlane.f32.xlu0 %v3322
    %v3324 = vpop.xlane.xlu0 %3323
    %v3325 = vsel %vm168, %v3321, 0.0
    %3326 = vadd.xlane.f32.xlu0 %v3325
    %v3327 = vpop.xlane.xlu0 %3326
    %v3328 = vmul.f32 %v3324, %v516
    %v3329 = vmul.f32 %v3327, %v516
    %v3330 = vadd.f32 %v3328, 1e-05
    %v3331 = vadd.f32 %v3329, 1e-05
    %v3332 = vrsqrt.pop %v3330
    %v3333 = vmul.f32 %v3332, %v3330
    %v3334 = vmul.f32 %v3333, %v3332
    %v3335 = vmul.f32 0.5, %v3334
    %v3336 = vsub.f32 1.5, %v3335
    %v3337 = vmul.f32 %v3332, %v3336
    %vm3338 = vweird.f32 %v3330
    %vm3339 = vweird.f32 %v3332
    %vm3340 = vmor %vm3338, %vm3339
    %v3341 = vsel %vm3340, %v3332, %v3337
    %v3342 = vrsqrt.pop %v3331
    %v3343 = vmul.f32 %v3342, %v3331
    %v3344 = vmul.f32 %v3343, %v3342
    %v3345 = vmul.f32 0.5, %v3344
    %v3346 = vsub.f32 1.5, %v3345
    %v3347 = vmul.f32 %v3342, %v3346
    %vm3348 = vweird.f32 %v3331
    %vm3349 = vweird.f32 %v3342
    %vm3350 = vmor %vm3348, %vm3349
    %v3351 = vsel %vm3350, %v3342, %v3347
    %v3352 = vmul.f32 %v3318, %v3341
    %v3353 = vmul.f32 %v3319, %v3351
    %v3355 = vperm.slane %v3307, 0
    %v3357 = vmul.f32 %v3352, %v3355
    %v3358 = vmul.f32 %v3353, %v3355
    %v3360 = vperm.slane %v3309, 0
    %v3362 = vadd.f32 %v3357, %v3360
    %v3363 = vadd.f32 %v3358, %v3360
    %v3364 = vld [vmem:[%s11] sm:$0xff]
    %v3365 = vld [vmem:[%s11 + $0x8] sm:$0xff]
    %v3366 = vld [vmem:[%s11 + $0x10] sm:$0xff]
    %v3367 = vld [vmem:[%s11 + $0x18] sm:$0xff]
    %v3368 = vld [vmem:[%s12] sm:$0x1]
    %v3370 = vperm.slane %v3368, 0
    %v3373 = vsel %vm168, %v3362, 0
    %v3376 = vsel %vm168, %v3363, 0
    %3378 = vmatpush.msra.mxu0 0.0
    %3379 = vmatpush.msra.mxu0 0.0
    %3380 = vmatpush.msra.mxu0 0.0
    %3381 = vmatpush.msra.mxu0 0.0
    %3382 = vmatpush.msra.mxu0 0.0
    %3383 = vmatpush.msra.mxu0 0.0
    %3384 = vmatpush.msra.mxu0 0.0
    %3385 = vmatpush.msra.mxu0 0.0
    %3386 = vmatpush.msra.mxu0 0.0
    %3387 = vmatpush.msra.mxu0 0.0
    %3388 = vmatpush.msra.mxu0 0.0
    %3389 = vmatpush.msra.mxu0 0.0
    %3390 = vmatpush.msra.mxu0 %v3367
    %3391 = vmatpush.msra.mxu0 %v3366
    %3392 = vmatpush.msra.mxu0 %v3365
    %3393 = vmatpush.msra.mxu0 %v3364
    %3394 = vmatmul.f32.gmra.mxu0 %v3373
    %v3395 = vpop.f32.mrf.mxu0
    %v3396 = vadd.f32 %v3370, %v3395
    %3397 = vmatmul.f32.gmra.mxu0 %v3376
    %v3398 = vpop.f32.mrf.mxu0
    %v3399 = vadd.f32 %v3370, %v3398
    %3400 = vdwg.mxu0
    %3401 = vst [vmem:[%s13] sm:$0xff] %v3396
    %3402 = vst [vmem:[%s13 + $0x8] sm:$0xff] %v3399
    // Predicated region
    $region82: #{transformer_forward.1} parent=1 // pred_check
      _
    $region83: #{transformer_forward.1} parent=1 // pred_check_branch
      %3404 = sbr.rel (0) target = $region85
    $region84: #{transformer_forward.1} parent=1 // pred_region
      _
    $region85: #{transformer_forward.1} parent=1 // pred_fallthru
      _
    // Predicated region
    $region86: #{transformer_forward.1} parent=1 // pred_check
      _
    $region87: #{transformer_forward.1} parent=1 // pred_check_branch
      %3406 = sbr.rel (0) target = $region89
    $region88: #{transformer_forward.1} parent=1 // pred_region
      _
    $region89: #{transformer_forward.1} parent=1 // pred_fallthru
      _
    %3407 = vsyncpa [#allocation3], 1
    %3408 = vsyncpa [#allocation5], 1
    %3409 = vsyncpa [#allocation8], 1
    %3410 = vsyncpa [#allocation11], 1

</llo_original>
